<compile_context>
chip_gen: v6e
topology: v6e:2x2x1
jax: 0.10.0
libtpu: 0.0.40
codegen_flags: <defaults>
</compile_context>

<pallas_src>
import jax
import jax.numpy as jnp
from jax.experimental import pallas as pl
from jax.experimental.pallas import tpu as pltpu

# --- small synthetic config (stands in for DistilBERT's 768/12/12/3072) ---
B = 2        # batch
S = 8        # sequence length
D = 32       # hidden size
H = 4        # attention heads
HD = D // H  # head dim
FFN = 64     # feed-forward hidden size
L = 2        # number of transformer layers
V = 100      # vocab size
MAXPOS = 16  # max position embeddings
EPS = 1e-12  # DistilBERT LayerNorm eps
NEG_INF = -1e9


def _layer_norm(x, gamma, beta):
    mean = jnp.mean(x, axis=-1, keepdims=True)
    var = jnp.mean((x - mean) ** 2, axis=-1, keepdims=True)
    return (x - mean) * jax.lax.rsqrt(var + EPS) * gamma + beta


def _gelu(x):
    # TODO(synk): DistilBERT uses exact erf-based GELU; tanh approximation used
    # here so the op lowers cleanly on the TPU EUP.
    return jax.nn.gelu(x, approximate=True)


# ----------------------------- Pallas kernel ------------------------------

def encoder_kernel(x_ref, mask_ref, embg_ref, embb_ref,
                   wqkv_ref, bqkv_ref, wo_ref, bo_ref,
                   ln1g_ref, ln1b_ref, w1_ref, b1_ref, w2_ref, b2_ref,
                   ln2g_ref, ln2b_ref, o_ref):
    # Embedding LayerNorm over the full (B*S, D) activation slab.
    x = _layer_norm(x_ref[...].astype(jnp.float32), embg_ref[...], embb_ref[...])

    # Additive key-padding bias, replicated per head: (B*H, 1, S).
    mask = mask_ref[...]                                   # (B, S), 1=keep 0=pad
    neg = (1.0 - mask) * NEG_INF                           # (B, S)
    neg_bias = jnp.stack(
        [neg[b:b + 1, :] for b in range(B) for _ in range(H)], axis=0)

    scale = 1.0 / jnp.sqrt(jnp.float32(HD))

    def split_heads(t):
        # (B*S, D) -> (B*H, S, HD) via static row/lane slices + leading-dim
        # stack (avoids lane-dim-splitting reshapes that need a relayout).
        parts = [t[b * S:(b + 1) * S, h * HD:(h + 1) * HD]
                 for b in range(B) for h in range(H)]
        return jnp.stack(parts, axis=0)

    for li in range(L):                                    # static: fully unrolled
        # --- fused QKV projection: one (B*S, D) @ (D, 3D) MXU matmul ---
        qkv = (jnp.dot(x, wqkv_ref[li], preferred_element_type=jnp.float32)
               + bqkv_ref[li])
        q = split_heads(qkv[:, 0 * D:1 * D])
        k = split_heads(qkv[:, 1 * D:2 * D])
        v = split_heads(qkv[:, 2 * D:3 * D])

        # --- batched multi-head scaled dot-product attention ---
        scores = jnp.einsum('gqd,gkd->gqk', q, k,
                            preferred_element_type=jnp.float32) * scale
        scores = scores + neg_bias
        scores = scores - jnp.max(scores, axis=-1, keepdims=True)
        p = jnp.exp(scores)
        p = p * pl.reciprocal(jnp.sum(p, axis=-1, keepdims=True), approx=True)
        ctx_h = jnp.einsum('gqk,gkd->gqd', p, v,
                           preferred_element_type=jnp.float32)   # (B*H, S, HD)

        # Merge heads back into a (B*S, D) slab.
        ctx = jnp.concatenate(
            [jnp.concatenate([ctx_h[b * H + h] for h in range(H)], axis=-1)
             for b in range(B)], axis=0)

        attn = (jnp.dot(ctx, wo_ref[li], preferred_element_type=jnp.float32)
                + bo_ref[li])
        x1 = _layer_norm(attn + x, ln1g_ref[li], ln1b_ref[li])       # sa_layer_norm

        # --- GELU feed-forward ---
        h1 = (jnp.dot(x1, w1_ref[li], preferred_element_type=jnp.float32)
              + b1_ref[li])
        h1 = _gelu(h1)
        h2 = (jnp.dot(h1, w2_ref[li], preferred_element_type=jnp.float32)
              + b2_ref[li])
        x = _layer_norm(h2 + x1, ln2g_ref[li], ln2b_ref[li])         # output_layer_norm

    o_ref[...] = x


# ------------------------------ JAX wrappers ------------------------------

def _stack(layers, name):
    return jnp.stack([lp[name] for lp in layers], axis=0)


def init_params(key):
    def nrm(k, shape, scale=0.02):
        return (scale * jax.random.normal(k, shape)).astype(jnp.float32)

    keys = jax.random.split(key, 3 + L)
    params = {
        "word_emb": nrm(keys[0], (V, D)),
        "pos_emb": nrm(keys[1], (MAXPOS, D)),
        "emb_ln_g": jnp.ones((1, D), jnp.float32),
        "emb_ln_b": jnp.zeros((1, D), jnp.float32),
        "layers": [],
    }
    for li in range(L):
        lk = jax.random.split(keys[3 + li], 6)
        params["layers"].append({
            "wq": nrm(lk[0], (D, D)),   "bq": jnp.zeros((1, D), jnp.float32),
            "wk": nrm(lk[1], (D, D)),   "bk": jnp.zeros((1, D), jnp.float32),
            "wv": nrm(lk[2], (D, D)),   "bv": jnp.zeros((1, D), jnp.float32),
            "wo": nrm(lk[3], (D, D)),   "bo": jnp.zeros((1, D), jnp.float32),
            "ln1g": jnp.ones((1, D), jnp.float32),
            "ln1b": jnp.zeros((1, D), jnp.float32),
            "w1": nrm(lk[4], (D, FFN)), "b1": jnp.zeros((1, FFN), jnp.float32),
            "w2": nrm(lk[5], (FFN, D)), "b2": jnp.zeros((1, D), jnp.float32),
            "ln2g": jnp.ones((1, D), jnp.float32),
            "ln2b": jnp.zeros((1, D), jnp.float32),
        })
    return params


def text_encoder_forward(params, input_ids, attention_mask):
    """Mirrors TextEncoder.forward: DistilBERT encoder, then hidden[:, 0, :]."""
    # Embedding lookup (gather) -- plain-JAX glue.
    positions = jnp.arange(S, dtype=jnp.int32)
    x = params["word_emb"][input_ids] + params["pos_emb"][positions][None, :, :]
    x2d = x.astype(jnp.float32).reshape(B * S, D)          # lane/sublane-dense slab
    mask_f = attention_mask.astype(jnp.float32)            # (B, S)

    layers = params["layers"]
    # Fused QKV weights (D, 3D) and biases (1, 3D), stacked over layers.
    wqkv = jnp.stack([jnp.concatenate([lp["wq"], lp["wk"], lp["wv"]], axis=1)
                      for lp in layers], axis=0)            # (L, D, 3D)
    bqkv = jnp.stack([jnp.concatenate([lp["bq"], lp["bk"], lp["bv"]], axis=1)
                      for lp in layers], axis=0)            # (L, 1, 3D)

    operands = (x2d, mask_f, params["emb_ln_g"], params["emb_ln_b"],
                wqkv, bqkv, _stack(layers, "wo"), _stack(layers, "bo"),
                _stack(layers, "ln1g"), _stack(layers, "ln1b"),
                _stack(layers, "w1"), _stack(layers, "b1"),
                _stack(layers, "w2"), _stack(layers, "b2"),
                _stack(layers, "ln2g"), _stack(layers, "ln2b"))

    hidden = pl.pallas_call(
        encoder_kernel,
        out_shape=jax.ShapeDtypeStruct((B * S, D), jnp.float32),
        in_specs=[pl.BlockSpec(memory_space=pltpu.MemorySpace.VMEM)
                  for _ in operands],
        out_specs=pl.BlockSpec(memory_space=pltpu.MemorySpace.VMEM),
    )(*operands)

    # target_token_idx = 0  ->  CLS-style pooling of the last hidden state.
    return hidden.reshape(B, S, D)[:, 0, :]


if __name__ == "__main__":
    key = jax.random.PRNGKey(0)
    pkey, idkey = jax.random.split(key)
    params = init_params(pkey)

    input_ids = jax.random.randint(idkey, (B, S), 0, V, dtype=jnp.int32)
    attention_mask = jnp.array(
        [[1, 1, 1, 1, 1, 1, 1, 1],
         [1, 1, 1, 1, 1, 0, 0, 0]], dtype=jnp.int32)

    out = text_encoder_forward(params, input_ids, attention_mask)
    out = jax.block_until_ready(out)
    assert out.shape == (B, D) and out.dtype == jnp.float32
    print("KERNEL_OK")
</pallas_src>

<mosaic_0001>
module attributes {stable_mosaic.version = 11 : i64} {
  func.func @encoder_kernel(%arg0: memref<16x32xf32, #tpu.memory_space<vmem>>, %arg1: memref<2x8xf32, #tpu.memory_space<vmem>>, %arg2: memref<1x32xf32, #tpu.memory_space<vmem>>, %arg3: memref<1x32xf32, #tpu.memory_space<vmem>>, %arg4: memref<2x32x96xf32, #tpu.memory_space<vmem>>, %arg5: memref<2x1x96xf32, #tpu.memory_space<vmem>>, %arg6: memref<2x32x32xf32, #tpu.memory_space<vmem>>, %arg7: memref<2x1x32xf32, #tpu.memory_space<vmem>>, %arg8: memref<2x1x32xf32, #tpu.memory_space<vmem>>, %arg9: memref<2x1x32xf32, #tpu.memory_space<vmem>>, %arg10: memref<2x32x64xf32, #tpu.memory_space<vmem>>, %arg11: memref<2x1x64xf32, #tpu.memory_space<vmem>>, %arg12: memref<2x64x32xf32, #tpu.memory_space<vmem>>, %arg13: memref<2x1x32xf32, #tpu.memory_space<vmem>>, %arg14: memref<2x1x32xf32, #tpu.memory_space<vmem>>, %arg15: memref<2x1x32xf32, #tpu.memory_space<vmem>>, %arg16: memref<16x32xf32, #tpu.memory_space<vmem>>) attributes {dimension_semantics = [], scalar_prefetch = 0 : i64, scratch_operands = 0 : i64, tpu.core_type = #tpu.core_type<tc>} {
    %c0 = arith.constant 0 : index
    %c0_0 = arith.constant 0 : index
    %0 = vector.load %arg0[%c0, %c0_0] : memref<16x32xf32, #tpu.memory_space<vmem>>, vector<16x32xf32>
    %c0_1 = arith.constant 0 : index
    %c0_2 = arith.constant 0 : index
    %1 = vector.load %arg2[%c0_1, %c0_2] : memref<1x32xf32, #tpu.memory_space<vmem>>, vector<1x32xf32>
    %c0_3 = arith.constant 0 : index
    %c0_4 = arith.constant 0 : index
    %2 = vector.load %arg3[%c0_3, %c0_4] : memref<1x32xf32, #tpu.memory_space<vmem>>, vector<1x32xf32>
    %cst = arith.constant dense<0.000000e+00> : vector<16xf32>
    %3 = vector.multi_reduction <add>, %0, %cst [1] : vector<16x32xf32> to vector<16xf32>
    %4 = vector.shape_cast %3 : vector<16xf32> to vector<16x1xf32>
    %cst_5 = arith.constant 3.200000e+01 : f32
    %5 = vector.broadcast %cst_5 : f32 to vector<16x1xf32>
    %6 = arith.divf %4, %5 : vector<16x1xf32>
    %7 = vector.broadcast %6 : vector<16x1xf32> to vector<16x32xf32>
    %8 = arith.subf %0, %7 : vector<16x32xf32>
    %9 = arith.mulf %8, %8 : vector<16x32xf32>
    %cst_6 = arith.constant dense<0.000000e+00> : vector<16xf32>
    %10 = vector.multi_reduction <add>, %9, %cst_6 [1] : vector<16x32xf32> to vector<16xf32>
    %11 = vector.shape_cast %10 : vector<16xf32> to vector<16x1xf32>
    %cst_7 = arith.constant 3.200000e+01 : f32
    %12 = vector.broadcast %cst_7 : f32 to vector<16x1xf32>
    %13 = arith.divf %11, %12 : vector<16x1xf32>
    %14 = vector.broadcast %6 : vector<16x1xf32> to vector<16x32xf32>
    %15 = arith.subf %0, %14 : vector<16x32xf32>
    %cst_8 = arith.constant 9.99999996E-13 : f32
    %16 = vector.broadcast %cst_8 : f32 to vector<16x1xf32>
    %17 = arith.addf %13, %16 : vector<16x1xf32>
    %18 = math.rsqrt %17 : vector<16x1xf32>
    %19 = vector.broadcast %18 : vector<16x1xf32> to vector<16x32xf32>
    %20 = arith.mulf %15, %19 : vector<16x32xf32>
    %21 = vector.broadcast %1 : vector<1x32xf32> to vector<16x32xf32>
    %22 = arith.mulf %20, %21 : vector<16x32xf32>
    %23 = vector.broadcast %2 : vector<1x32xf32> to vector<16x32xf32>
    %24 = arith.addf %22, %23 : vector<16x32xf32>
    %c0_9 = arith.constant 0 : index
    %c0_10 = arith.constant 0 : index
    %25 = vector.load %arg1[%c0_9, %c0_10] : memref<2x8xf32, #tpu.memory_space<vmem>>, vector<2x8xf32>
    %cst_11 = arith.constant 1.000000e+00 : f32
    %26 = vector.broadcast %cst_11 : f32 to vector<2x8xf32>
    %27 = arith.subf %26, %25 : vector<2x8xf32>
    %cst_12 = arith.constant -1.000000e+09 : f32
    %28 = vector.broadcast %cst_12 : f32 to vector<2x8xf32>
    %29 = arith.mulf %27, %28 : vector<2x8xf32>
    %30 = vector.extract_strided_slice %29 {offsets = [0, 0], sizes = [1, 8], strides = [1, 1]} : vector<2x8xf32> to vector<1x8xf32>
    %31 = vector.extract_strided_slice %29 {offsets = [0, 0], sizes = [1, 8], strides = [1, 1]} : vector<2x8xf32> to vector<1x8xf32>
    %32 = vector.extract_strided_slice %29 {offsets = [0, 0], sizes = [1, 8], strides = [1, 1]} : vector<2x8xf32> to vector<1x8xf32>
    %33 = vector.extract_strided_slice %29 {offsets = [0, 0], sizes = [1, 8], strides = [1, 1]} : vector<2x8xf32> to vector<1x8xf32>
    %34 = vector.extract_strided_slice %29 {offsets = [1, 0], sizes = [1, 8], strides = [1, 1]} : vector<2x8xf32> to vector<1x8xf32>
    %35 = vector.extract_strided_slice %29 {offsets = [1, 0], sizes = [1, 8], strides = [1, 1]} : vector<2x8xf32> to vector<1x8xf32>
    %36 = vector.extract_strided_slice %29 {offsets = [1, 0], sizes = [1, 8], strides = [1, 1]} : vector<2x8xf32> to vector<1x8xf32>
    %37 = vector.extract_strided_slice %29 {offsets = [1, 0], sizes = [1, 8], strides = [1, 1]} : vector<2x8xf32> to vector<1x8xf32>
    %38 = vector.shape_cast %30 : vector<1x8xf32> to vector<1x1x8xf32>
    %39 = vector.shape_cast %31 : vector<1x8xf32> to vector<1x1x8xf32>
    %40 = vector.shape_cast %32 : vector<1x8xf32> to vector<1x1x8xf32>
    %41 = vector.shape_cast %33 : vector<1x8xf32> to vector<1x1x8xf32>
    %42 = vector.shape_cast %34 : vector<1x8xf32> to vector<1x1x8xf32>
    %43 = vector.shape_cast %35 : vector<1x8xf32> to vector<1x1x8xf32>
    %44 = vector.shape_cast %36 : vector<1x8xf32> to vector<1x1x8xf32>
    %45 = vector.shape_cast %37 : vector<1x8xf32> to vector<1x1x8xf32>
    %46 = tpu.concatenate %38, %39, %40, %41, %42, %43, %44, %45 in 0 : vector<1x1x8xf32>, vector<1x1x8xf32>, vector<1x1x8xf32>, vector<1x1x8xf32>, vector<1x1x8xf32>, vector<1x1x8xf32>, vector<1x1x8xf32>, vector<1x1x8xf32> -> vector<8x1x8xf32>
    %cst_13 = arith.constant 8.000000e+00 : f32
    %47 = math.sqrt %cst_13 : f32
    %cst_14 = arith.constant 1.000000e+00 : f32
    %48 = arith.divf %cst_14, %47 : f32
    %c0_15 = arith.constant 0 : index
    %c0_16 = arith.constant 0 : index
    %c0_17 = arith.constant 0 : index
    %49 = vector.load %arg4[%c0_15, %c0_16, %c0_17] : memref<2x32x96xf32, #tpu.memory_space<vmem>>, vector<1x32x96xf32>
    %50 = vector.shape_cast %49 : vector<1x32x96xf32> to vector<32x96xf32>
    %cst_18 = arith.constant dense<0.000000e+00> : vector<16x96xf32>
    %51 = tpu.matmul %24, %50, %cst_18 {dimension_numbers = #tpu.dot_dimension_numbers<[1], [0], [0], [1], [0, 0, 1, 1], [], []>} : vector<16x32xf32>, vector<32x96xf32>, vector<16x96xf32> -> vector<16x96xf32>
    %c0_19 = arith.constant 0 : index
    %c0_20 = arith.constant 0 : index
    %c0_21 = arith.constant 0 : index
    %52 = vector.load %arg5[%c0_19, %c0_20, %c0_21] : memref<2x1x96xf32, #tpu.memory_space<vmem>>, vector<1x1x96xf32>
    %53 = vector.shape_cast %52 : vector<1x1x96xf32> to vector<1x96xf32>
    %54 = vector.broadcast %53 : vector<1x96xf32> to vector<16x96xf32>
    %55 = arith.addf %51, %54 : vector<16x96xf32>
    %56 = vector.extract_strided_slice %55 {offsets = [0, 0], sizes = [16, 32], strides = [1, 1]} : vector<16x96xf32> to vector<16x32xf32>
    %57 = vector.extract_strided_slice %56 {offsets = [0, 0], sizes = [8, 8], strides = [1, 1]} : vector<16x32xf32> to vector<8x8xf32>
    %58 = vector.extract_strided_slice %56 {offsets = [0, 8], sizes = [8, 8], strides = [1, 1]} : vector<16x32xf32> to vector<8x8xf32>
    %59 = vector.extract_strided_slice %56 {offsets = [0, 16], sizes = [8, 8], strides = [1, 1]} : vector<16x32xf32> to vector<8x8xf32>
    %60 = vector.extract_strided_slice %56 {offsets = [0, 24], sizes = [8, 8], strides = [1, 1]} : vector<16x32xf32> to vector<8x8xf32>
    %61 = vector.extract_strided_slice %56 {offsets = [8, 0], sizes = [8, 8], strides = [1, 1]} : vector<16x32xf32> to vector<8x8xf32>
    %62 = vector.extract_strided_slice %56 {offsets = [8, 8], sizes = [8, 8], strides = [1, 1]} : vector<16x32xf32> to vector<8x8xf32>
    %63 = vector.extract_strided_slice %56 {offsets = [8, 16], sizes = [8, 8], strides = [1, 1]} : vector<16x32xf32> to vector<8x8xf32>
    %64 = vector.extract_strided_slice %56 {offsets = [8, 24], sizes = [8, 8], strides = [1, 1]} : vector<16x32xf32> to vector<8x8xf32>
    %65 = vector.shape_cast %57 : vector<8x8xf32> to vector<1x8x8xf32>
    %66 = vector.shape_cast %58 : vector<8x8xf32> to vector<1x8x8xf32>
    %67 = vector.shape_cast %59 : vector<8x8xf32> to vector<1x8x8xf32>
    %68 = vector.shape_cast %60 : vector<8x8xf32> to vector<1x8x8xf32>
    %69 = vector.shape_cast %61 : vector<8x8xf32> to vector<1x8x8xf32>
    %70 = vector.shape_cast %62 : vector<8x8xf32> to vector<1x8x8xf32>
    %71 = vector.shape_cast %63 : vector<8x8xf32> to vector<1x8x8xf32>
    %72 = vector.shape_cast %64 : vector<8x8xf32> to vector<1x8x8xf32>
    %73 = tpu.concatenate %65, %66, %67, %68, %69, %70, %71, %72 in 0 : vector<1x8x8xf32>, vector<1x8x8xf32>, vector<1x8x8xf32>, vector<1x8x8xf32>, vector<1x8x8xf32>, vector<1x8x8xf32>, vector<1x8x8xf32>, vector<1x8x8xf32> -> vector<8x8x8xf32>
    %74 = vector.extract_strided_slice %55 {offsets = [0, 32], sizes = [16, 32], strides = [1, 1]} : vector<16x96xf32> to vector<16x32xf32>
    %75 = vector.extract_strided_slice %74 {offsets = [0, 0], sizes = [8, 8], strides = [1, 1]} : vector<16x32xf32> to vector<8x8xf32>
    %76 = vector.extract_strided_slice %74 {offsets = [0, 8], sizes = [8, 8], strides = [1, 1]} : vector<16x32xf32> to vector<8x8xf32>
    %77 = vector.extract_strided_slice %74 {offsets = [0, 16], sizes = [8, 8], strides = [1, 1]} : vector<16x32xf32> to vector<8x8xf32>
    %78 = vector.extract_strided_slice %74 {offsets = [0, 24], sizes = [8, 8], strides = [1, 1]} : vector<16x32xf32> to vector<8x8xf32>
    %79 = vector.extract_strided_slice %74 {offsets = [8, 0], sizes = [8, 8], strides = [1, 1]} : vector<16x32xf32> to vector<8x8xf32>
    %80 = vector.extract_strided_slice %74 {offsets = [8, 8], sizes = [8, 8], strides = [1, 1]} : vector<16x32xf32> to vector<8x8xf32>
    %81 = vector.extract_strided_slice %74 {offsets = [8, 16], sizes = [8, 8], strides = [1, 1]} : vector<16x32xf32> to vector<8x8xf32>
    %82 = vector.extract_strided_slice %74 {offsets = [8, 24], sizes = [8, 8], strides = [1, 1]} : vector<16x32xf32> to vector<8x8xf32>
    %83 = vector.shape_cast %75 : vector<8x8xf32> to vector<1x8x8xf32>
    %84 = vector.shape_cast %76 : vector<8x8xf32> to vector<1x8x8xf32>
    %85 = vector.shape_cast %77 : vector<8x8xf32> to vector<1x8x8xf32>
    %86 = vector.shape_cast %78 : vector<8x8xf32> to vector<1x8x8xf32>
    %87 = vector.shape_cast %79 : vector<8x8xf32> to vector<1x8x8xf32>
    %88 = vector.shape_cast %80 : vector<8x8xf32> to vector<1x8x8xf32>
    %89 = vector.shape_cast %81 : vector<8x8xf32> to vector<1x8x8xf32>
    %90 = vector.shape_cast %82 : vector<8x8xf32> to vector<1x8x8xf32>
    %91 = tpu.concatenate %83, %84, %85, %86, %87, %88, %89, %90 in 0 : vector<1x8x8xf32>, vector<1x8x8xf32>, vector<1x8x8xf32>, vector<1x8x8xf32>, vector<1x8x8xf32>, vector<1x8x8xf32>, vector<1x8x8xf32>, vector<1x8x8xf32> -> vector<8x8x8xf32>
    %92 = vector.extract_strided_slice %55 {offsets = [0, 64], sizes = [16, 32], strides = [1, 1]} : vector<16x96xf32> to vector<16x32xf32>
    %93 = vector.extract_strided_slice %92 {offsets = [0, 0], sizes = [8, 8], strides = [1, 1]} : vector<16x32xf32> to vector<8x8xf32>
    %94 = vector.extract_strided_slice %92 {offsets = [0, 8], sizes = [8, 8], strides = [1, 1]} : vector<16x32xf32> to vector<8x8xf32>
    %95 = vector.extract_strided_slice %92 {offsets = [0, 16], sizes = [8, 8], strides = [1, 1]} : vector<16x32xf32> to vector<8x8xf32>
    %96 = vector.extract_strided_slice %92 {offsets = [0, 24], sizes = [8, 8], strides = [1, 1]} : vector<16x32xf32> to vector<8x8xf32>
    %97 = vector.extract_strided_slice %92 {offsets = [8, 0], sizes = [8, 8], strides = [1, 1]} : vector<16x32xf32> to vector<8x8xf32>
    %98 = vector.extract_strided_slice %92 {offsets = [8, 8], sizes = [8, 8], strides = [1, 1]} : vector<16x32xf32> to vector<8x8xf32>
    %99 = vector.extract_strided_slice %92 {offsets = [8, 16], sizes = [8, 8], strides = [1, 1]} : vector<16x32xf32> to vector<8x8xf32>
    %100 = vector.extract_strided_slice %92 {offsets = [8, 24], sizes = [8, 8], strides = [1, 1]} : vector<16x32xf32> to vector<8x8xf32>
    %101 = vector.shape_cast %93 : vector<8x8xf32> to vector<1x8x8xf32>
    %102 = vector.shape_cast %94 : vector<8x8xf32> to vector<1x8x8xf32>
    %103 = vector.shape_cast %95 : vector<8x8xf32> to vector<1x8x8xf32>
    %104 = vector.shape_cast %96 : vector<8x8xf32> to vector<1x8x8xf32>
    %105 = vector.shape_cast %97 : vector<8x8xf32> to vector<1x8x8xf32>
    %106 = vector.shape_cast %98 : vector<8x8xf32> to vector<1x8x8xf32>
    %107 = vector.shape_cast %99 : vector<8x8xf32> to vector<1x8x8xf32>
    %108 = vector.shape_cast %100 : vector<8x8xf32> to vector<1x8x8xf32>
    %109 = tpu.concatenate %101, %102, %103, %104, %105, %106, %107, %108 in 0 : vector<1x8x8xf32>, vector<1x8x8xf32>, vector<1x8x8xf32>, vector<1x8x8xf32>, vector<1x8x8xf32>, vector<1x8x8xf32>, vector<1x8x8xf32>, vector<1x8x8xf32> -> vector<8x8x8xf32>
    "tpu.trace_start"() <{level = 10 : i32, message = "gqd,gkd->gqk"}> : () -> ()
    %cst_22 = arith.constant dense<0.000000e+00> : vector<8x8x8xf32>
    %110 = tpu.matmul %73, %91, %cst_22 {dimension_numbers = #tpu.dot_dimension_numbers<[2], [2], [1], [1], [0, 0, 0, 1, 1, 1], [0], [0]>} : vector<8x8x8xf32>, vector<8x8x8xf32>, vector<8x8x8xf32> -> vector<8x8x8xf32>
    "tpu.trace_stop"() : () -> ()
    %111 = vector.broadcast %48 : f32 to vector<8x8x8xf32>
    %112 = arith.mulf %110, %111 : vector<8x8x8xf32>
    %113 = vector.broadcast %46 : vector<8x1x8xf32> to vector<8x8x8xf32>
    %114 = arith.addf %112, %113 : vector<8x8x8xf32>
    %cst_23 = arith.constant dense<0xFF800000> : vector<8x8xf32>
    %115 = vector.multi_reduction <maximumf>, %114, %cst_23 [2] : vector<8x8x8xf32> to vector<8x8xf32>
    %116 = vector.shape_cast %115 : vector<8x8xf32> to vector<8x8x1xf32>
    %117 = vector.broadcast %116 : vector<8x8x1xf32> to vector<8x8x8xf32>
    %118 = arith.subf %114, %117 : vector<8x8x8xf32>
    %119 = math.exp %118 : vector<8x8x8xf32>
    %cst_24 = arith.constant dense<0.000000e+00> : vector<8x8xf32>
    %120 = vector.multi_reduction <add>, %119, %cst_24 [2] : vector<8x8x8xf32> to vector<8x8xf32>
    %121 = vector.shape_cast %120 : vector<8x8xf32> to vector<8x8x1xf32>
    %122 = tpu.reciprocal %121 {approx = true} : vector<8x8x1xf32> -> vector<8x8x1xf32>
    %123 = vector.broadcast %122 : vector<8x8x1xf32> to vector<8x8x8xf32>
    %124 = arith.mulf %119, %123 : vector<8x8x8xf32>
    "tpu.trace_start"() <{level = 10 : i32, message = "gqk,gkd->gqd"}> : () -> ()
    %cst_25 = arith.constant dense<0.000000e+00> : vector<8x8x8xf32>
    %125 = tpu.matmul %124, %109, %cst_25 {dimension_numbers = #tpu.dot_dimension_numbers<[2], [1], [1], [2], [0, 0, 0, 1, 1, 2], [0], [0]>} : vector<8x8x8xf32>, vector<8x8x8xf32>, vector<8x8x8xf32> -> vector<8x8x8xf32>
    "tpu.trace_stop"() : () -> ()
    %126 = vector.extract_strided_slice %125 {offsets = [0, 0, 0], sizes = [1, 8, 8], strides = [1, 1, 1]} : vector<8x8x8xf32> to vector<1x8x8xf32>
    %127 = vector.shape_cast %126 : vector<1x8x8xf32> to vector<8x8xf32>
    %128 = vector.extract_strided_slice %125 {offsets = [1, 0, 0], sizes = [1, 8, 8], strides = [1, 1, 1]} : vector<8x8x8xf32> to vector<1x8x8xf32>
    %129 = vector.shape_cast %128 : vector<1x8x8xf32> to vector<8x8xf32>
    %130 = vector.extract_strided_slice %125 {offsets = [2, 0, 0], sizes = [1, 8, 8], strides = [1, 1, 1]} : vector<8x8x8xf32> to vector<1x8x8xf32>
    %131 = vector.shape_cast %130 : vector<1x8x8xf32> to vector<8x8xf32>
    %132 = vector.extract_strided_slice %125 {offsets = [3, 0, 0], sizes = [1, 8, 8], strides = [1, 1, 1]} : vector<8x8x8xf32> to vector<1x8x8xf32>
    %133 = vector.shape_cast %132 : vector<1x8x8xf32> to vector<8x8xf32>
    %134 = tpu.concatenate %127, %129, %131, %133 in 1 : vector<8x8xf32>, vector<8x8xf32>, vector<8x8xf32>, vector<8x8xf32> -> vector<8x32xf32>
    %135 = vector.extract_strided_slice %125 {offsets = [4, 0, 0], sizes = [1, 8, 8], strides = [1, 1, 1]} : vector<8x8x8xf32> to vector<1x8x8xf32>
    %136 = vector.shape_cast %135 : vector<1x8x8xf32> to vector<8x8xf32>
    %137 = vector.extract_strided_slice %125 {offsets = [5, 0, 0], sizes = [1, 8, 8], strides = [1, 1, 1]} : vector<8x8x8xf32> to vector<1x8x8xf32>
    %138 = vector.shape_cast %137 : vector<1x8x8xf32> to vector<8x8xf32>
    %139 = vector.extract_strided_slice %125 {offsets = [6, 0, 0], sizes = [1, 8, 8], strides = [1, 1, 1]} : vector<8x8x8xf32> to vector<1x8x8xf32>
    %140 = vector.shape_cast %139 : vector<1x8x8xf32> to vector<8x8xf32>
    %141 = vector.extract_strided_slice %125 {offsets = [7, 0, 0], sizes = [1, 8, 8], strides = [1, 1, 1]} : vector<8x8x8xf32> to vector<1x8x8xf32>
    %142 = vector.shape_cast %141 : vector<1x8x8xf32> to vector<8x8xf32>
    %143 = tpu.concatenate %136, %138, %140, %142 in 1 : vector<8x8xf32>, vector<8x8xf32>, vector<8x8xf32>, vector<8x8xf32> -> vector<8x32xf32>
    %144 = tpu.concatenate %134, %143 in 0 : vector<8x32xf32>, vector<8x32xf32> -> vector<16x32xf32>
    %c0_26 = arith.constant 0 : index
    %c0_27 = arith.constant 0 : index
    %c0_28 = arith.constant 0 : index
    %145 = vector.load %arg6[%c0_26, %c0_27, %c0_28] : memref<2x32x32xf32, #tpu.memory_space<vmem>>, vector<1x32x32xf32>
    %146 = vector.shape_cast %145 : vector<1x32x32xf32> to vector<32x32xf32>
    %cst_29 = arith.constant dense<0.000000e+00> : vector<16x32xf32>
    %147 = tpu.matmul %144, %146, %cst_29 {dimension_numbers = #tpu.dot_dimension_numbers<[1], [0], [0], [1], [0, 0, 1, 1], [], []>} : vector<16x32xf32>, vector<32x32xf32>, vector<16x32xf32> -> vector<16x32xf32>
    %c0_30 = arith.constant 0 : index
    %c0_31 = arith.constant 0 : index
    %c0_32 = arith.constant 0 : index
    %148 = vector.load %arg7[%c0_30, %c0_31, %c0_32] : memref<2x1x32xf32, #tpu.memory_space<vmem>>, vector<1x1x32xf32>
    %149 = vector.shape_cast %148 : vector<1x1x32xf32> to vector<1x32xf32>
    %150 = vector.broadcast %149 : vector<1x32xf32> to vector<16x32xf32>
    %151 = arith.addf %147, %150 : vector<16x32xf32>
    %152 = arith.addf %151, %24 : vector<16x32xf32>
    %c0_33 = arith.constant 0 : index
    %c0_34 = arith.constant 0 : index
    %c0_35 = arith.constant 0 : index
    %153 = vector.load %arg8[%c0_33, %c0_34, %c0_35] : memref<2x1x32xf32, #tpu.memory_space<vmem>>, vector<1x1x32xf32>
    %154 = vector.shape_cast %153 : vector<1x1x32xf32> to vector<1x32xf32>
    %c0_36 = arith.constant 0 : index
    %c0_37 = arith.constant 0 : index
    %c0_38 = arith.constant 0 : index
    %155 = vector.load %arg9[%c0_36, %c0_37, %c0_38] : memref<2x1x32xf32, #tpu.memory_space<vmem>>, vector<1x1x32xf32>
    %156 = vector.shape_cast %155 : vector<1x1x32xf32> to vector<1x32xf32>
    %cst_39 = arith.constant dense<0.000000e+00> : vector<16xf32>
    %157 = vector.multi_reduction <add>, %152, %cst_39 [1] : vector<16x32xf32> to vector<16xf32>
    %158 = vector.shape_cast %157 : vector<16xf32> to vector<16x1xf32>
    %cst_40 = arith.constant 3.200000e+01 : f32
    %159 = vector.broadcast %cst_40 : f32 to vector<16x1xf32>
    %160 = arith.divf %158, %159 : vector<16x1xf32>
    %161 = vector.broadcast %160 : vector<16x1xf32> to vector<16x32xf32>
    %162 = arith.subf %152, %161 : vector<16x32xf32>
    %163 = arith.mulf %162, %162 : vector<16x32xf32>
    %cst_41 = arith.constant dense<0.000000e+00> : vector<16xf32>
    %164 = vector.multi_reduction <add>, %163, %cst_41 [1] : vector<16x32xf32> to vector<16xf32>
    %165 = vector.shape_cast %164 : vector<16xf32> to vector<16x1xf32>
    %cst_42 = arith.constant 3.200000e+01 : f32
    %166 = vector.broadcast %cst_42 : f32 to vector<16x1xf32>
    %167 = arith.divf %165, %166 : vector<16x1xf32>
    %168 = vector.broadcast %160 : vector<16x1xf32> to vector<16x32xf32>
    %169 = arith.subf %152, %168 : vector<16x32xf32>
    %cst_43 = arith.constant 9.99999996E-13 : f32
    %170 = vector.broadcast %cst_43 : f32 to vector<16x1xf32>
    %171 = arith.addf %167, %170 : vector<16x1xf32>
    %172 = math.rsqrt %171 : vector<16x1xf32>
    %173 = vector.broadcast %172 : vector<16x1xf32> to vector<16x32xf32>
    %174 = arith.mulf %169, %173 : vector<16x32xf32>
    %175 = vector.broadcast %154 : vector<1x32xf32> to vector<16x32xf32>
    %176 = arith.mulf %174, %175 : vector<16x32xf32>
    %177 = vector.broadcast %156 : vector<1x32xf32> to vector<16x32xf32>
    %178 = arith.addf %176, %177 : vector<16x32xf32>
    %c0_44 = arith.constant 0 : index
    %c0_45 = arith.constant 0 : index
    %c0_46 = arith.constant 0 : index
    %179 = vector.load %arg10[%c0_44, %c0_45, %c0_46] : memref<2x32x64xf32, #tpu.memory_space<vmem>>, vector<1x32x64xf32>
    %180 = vector.shape_cast %179 : vector<1x32x64xf32> to vector<32x64xf32>
    %cst_47 = arith.constant dense<0.000000e+00> : vector<16x64xf32>
    %181 = tpu.matmul %178, %180, %cst_47 {dimension_numbers = #tpu.dot_dimension_numbers<[1], [0], [0], [1], [0, 0, 1, 1], [], []>} : vector<16x32xf32>, vector<32x64xf32>, vector<16x64xf32> -> vector<16x64xf32>
    %c0_48 = arith.constant 0 : index
    %c0_49 = arith.constant 0 : index
    %c0_50 = arith.constant 0 : index
    %182 = vector.load %arg11[%c0_48, %c0_49, %c0_50] : memref<2x1x64xf32, #tpu.memory_space<vmem>>, vector<1x1x64xf32>
    %183 = vector.shape_cast %182 : vector<1x1x64xf32> to vector<1x64xf32>
    %184 = vector.broadcast %183 : vector<1x64xf32> to vector<16x64xf32>
    %185 = arith.addf %181, %184 : vector<16x64xf32>
    %186 = arith.mulf %185, %185 : vector<16x64xf32>
    %187 = arith.mulf %185, %186 : vector<16x64xf32>
    %cst_51 = arith.constant 4.471500e-02 : f32
    %188 = vector.broadcast %cst_51 : f32 to vector<16x64xf32>
    %189 = arith.mulf %188, %187 : vector<16x64xf32>
    %190 = arith.addf %185, %189 : vector<16x64xf32>
    %cst_52 = arith.constant 0.797884583 : f32
    %191 = vector.broadcast %cst_52 : f32 to vector<16x64xf32>
    %192 = arith.mulf %191, %190 : vector<16x64xf32>
    %193 = math.tanh %192 : vector<16x64xf32>
    %cst_53 = arith.constant 1.000000e+00 : f32
    %194 = vector.broadcast %cst_53 : f32 to vector<16x64xf32>
    %195 = arith.addf %194, %193 : vector<16x64xf32>
    %cst_54 = arith.constant 5.000000e-01 : f32
    %196 = vector.broadcast %cst_54 : f32 to vector<16x64xf32>
    %197 = arith.mulf %196, %195 : vector<16x64xf32>
    %198 = arith.mulf %185, %197 : vector<16x64xf32>
    %c0_55 = arith.constant 0 : index
    %c0_56 = arith.constant 0 : index
    %c0_57 = arith.constant 0 : index
    %199 = vector.load %arg12[%c0_55, %c0_56, %c0_57] : memref<2x64x32xf32, #tpu.memory_space<vmem>>, vector<1x64x32xf32>
    %200 = vector.shape_cast %199 : vector<1x64x32xf32> to vector<64x32xf32>
    %cst_58 = arith.constant dense<0.000000e+00> : vector<16x32xf32>
    %201 = tpu.matmul %198, %200, %cst_58 {dimension_numbers = #tpu.dot_dimension_numbers<[1], [0], [0], [1], [0, 0, 1, 1], [], []>} : vector<16x64xf32>, vector<64x32xf32>, vector<16x32xf32> -> vector<16x32xf32>
    %c0_59 = arith.constant 0 : index
    %c0_60 = arith.constant 0 : index
    %c0_61 = arith.constant 0 : index
    %202 = vector.load %arg13[%c0_59, %c0_60, %c0_61] : memref<2x1x32xf32, #tpu.memory_space<vmem>>, vector<1x1x32xf32>
    %203 = vector.shape_cast %202 : vector<1x1x32xf32> to vector<1x32xf32>
    %204 = vector.broadcast %203 : vector<1x32xf32> to vector<16x32xf32>
    %205 = arith.addf %201, %204 : vector<16x32xf32>
    %206 = arith.addf %205, %178 : vector<16x32xf32>
    %c0_62 = arith.constant 0 : index
    %c0_63 = arith.constant 0 : index
    %c0_64 = arith.constant 0 : index
    %207 = vector.load %arg14[%c0_62, %c0_63, %c0_64] : memref<2x1x32xf32, #tpu.memory_space<vmem>>, vector<1x1x32xf32>
    %208 = vector.shape_cast %207 : vector<1x1x32xf32> to vector<1x32xf32>
    %c0_65 = arith.constant 0 : index
    %c0_66 = arith.constant 0 : index
    %c0_67 = arith.constant 0 : index
    %209 = vector.load %arg15[%c0_65, %c0_66, %c0_67] : memref<2x1x32xf32, #tpu.memory_space<vmem>>, vector<1x1x32xf32>
    %210 = vector.shape_cast %209 : vector<1x1x32xf32> to vector<1x32xf32>
    %cst_68 = arith.constant dense<0.000000e+00> : vector<16xf32>
    %211 = vector.multi_reduction <add>, %206, %cst_68 [1] : vector<16x32xf32> to vector<16xf32>
    %212 = vector.shape_cast %211 : vector<16xf32> to vector<16x1xf32>
    %cst_69 = arith.constant 3.200000e+01 : f32
    %213 = vector.broadcast %cst_69 : f32 to vector<16x1xf32>
    %214 = arith.divf %212, %213 : vector<16x1xf32>
    %215 = vector.broadcast %214 : vector<16x1xf32> to vector<16x32xf32>
    %216 = arith.subf %206, %215 : vector<16x32xf32>
    %217 = arith.mulf %216, %216 : vector<16x32xf32>
    %cst_70 = arith.constant dense<0.000000e+00> : vector<16xf32>
    %218 = vector.multi_reduction <add>, %217, %cst_70 [1] : vector<16x32xf32> to vector<16xf32>
    %219 = vector.shape_cast %218 : vector<16xf32> to vector<16x1xf32>
    %cst_71 = arith.constant 3.200000e+01 : f32
    %220 = vector.broadcast %cst_71 : f32 to vector<16x1xf32>
    %221 = arith.divf %219, %220 : vector<16x1xf32>
    %222 = vector.broadcast %214 : vector<16x1xf32> to vector<16x32xf32>
    %223 = arith.subf %206, %222 : vector<16x32xf32>
    %cst_72 = arith.constant 9.99999996E-13 : f32
    %224 = vector.broadcast %cst_72 : f32 to vector<16x1xf32>
    %225 = arith.addf %221, %224 : vector<16x1xf32>
    %226 = math.rsqrt %225 : vector<16x1xf32>
    %227 = vector.broadcast %226 : vector<16x1xf32> to vector<16x32xf32>
    %228 = arith.mulf %223, %227 : vector<16x32xf32>
    %229 = vector.broadcast %208 : vector<1x32xf32> to vector<16x32xf32>
    %230 = arith.mulf %228, %229 : vector<16x32xf32>
    %231 = vector.broadcast %210 : vector<1x32xf32> to vector<16x32xf32>
    %232 = arith.addf %230, %231 : vector<16x32xf32>
    %c1 = arith.constant 1 : index
    %c0_73 = arith.constant 0 : index
    %c0_74 = arith.constant 0 : index
    %233 = vector.load %arg4[%c1, %c0_73, %c0_74] : memref<2x32x96xf32, #tpu.memory_space<vmem>>, vector<1x32x96xf32>
    %234 = vector.shape_cast %233 : vector<1x32x96xf32> to vector<32x96xf32>
    %cst_75 = arith.constant dense<0.000000e+00> : vector<16x96xf32>
    %235 = tpu.matmul %232, %234, %cst_75 {dimension_numbers = #tpu.dot_dimension_numbers<[1], [0], [0], [1], [0, 0, 1, 1], [], []>} : vector<16x32xf32>, vector<32x96xf32>, vector<16x96xf32> -> vector<16x96xf32>
    %c1_76 = arith.constant 1 : index
    %c0_77 = arith.constant 0 : index
    %c0_78 = arith.constant 0 : index
    %236 = vector.load %arg5[%c1_76, %c0_77, %c0_78] : memref<2x1x96xf32, #tpu.memory_space<vmem>>, vector<1x1x96xf32>
    %237 = vector.shape_cast %236 : vector<1x1x96xf32> to vector<1x96xf32>
    %238 = vector.broadcast %237 : vector<1x96xf32> to vector<16x96xf32>
    %239 = arith.addf %235, %238 : vector<16x96xf32>
    %240 = vector.extract_strided_slice %239 {offsets = [0, 0], sizes = [16, 32], strides = [1, 1]} : vector<16x96xf32> to vector<16x32xf32>
    %241 = vector.extract_strided_slice %240 {offsets = [0, 0], sizes = [8, 8], strides = [1, 1]} : vector<16x32xf32> to vector<8x8xf32>
    %242 = vector.extract_strided_slice %240 {offsets = [0, 8], sizes = [8, 8], strides = [1, 1]} : vector<16x32xf32> to vector<8x8xf32>
    %243 = vector.extract_strided_slice %240 {offsets = [0, 16], sizes = [8, 8], strides = [1, 1]} : vector<16x32xf32> to vector<8x8xf32>
    %244 = vector.extract_strided_slice %240 {offsets = [0, 24], sizes = [8, 8], strides = [1, 1]} : vector<16x32xf32> to vector<8x8xf32>
    %245 = vector.extract_strided_slice %240 {offsets = [8, 0], sizes = [8, 8], strides = [1, 1]} : vector<16x32xf32> to vector<8x8xf32>
    %246 = vector.extract_strided_slice %240 {offsets = [8, 8], sizes = [8, 8], strides = [1, 1]} : vector<16x32xf32> to vector<8x8xf32>
    %247 = vector.extract_strided_slice %240 {offsets = [8, 16], sizes = [8, 8], strides = [1, 1]} : vector<16x32xf32> to vector<8x8xf32>
    %248 = vector.extract_strided_slice %240 {offsets = [8, 24], sizes = [8, 8], strides = [1, 1]} : vector<16x32xf32> to vector<8x8xf32>
    %249 = vector.shape_cast %241 : vector<8x8xf32> to vector<1x8x8xf32>
    %250 = vector.shape_cast %242 : vector<8x8xf32> to vector<1x8x8xf32>
    %251 = vector.shape_cast %243 : vector<8x8xf32> to vector<1x8x8xf32>
    %252 = vector.shape_cast %244 : vector<8x8xf32> to vector<1x8x8xf32>
    %253 = vector.shape_cast %245 : vector<8x8xf32> to vector<1x8x8xf32>
    %254 = vector.shape_cast %246 : vector<8x8xf32> to vector<1x8x8xf32>
    %255 = vector.shape_cast %247 : vector<8x8xf32> to vector<1x8x8xf32>
    %256 = vector.shape_cast %248 : vector<8x8xf32> to vector<1x8x8xf32>
    %257 = tpu.concatenate %249, %250, %251, %252, %253, %254, %255, %256 in 0 : vector<1x8x8xf32>, vector<1x8x8xf32>, vector<1x8x8xf32>, vector<1x8x8xf32>, vector<1x8x8xf32>, vector<1x8x8xf32>, vector<1x8x8xf32>, vector<1x8x8xf32> -> vector<8x8x8xf32>
    %258 = vector.extract_strided_slice %239 {offsets = [0, 32], sizes = [16, 32], strides = [1, 1]} : vector<16x96xf32> to vector<16x32xf32>
    %259 = vector.extract_strided_slice %258 {offsets = [0, 0], sizes = [8, 8], strides = [1, 1]} : vector<16x32xf32> to vector<8x8xf32>
    %260 = vector.extract_strided_slice %258 {offsets = [0, 8], sizes = [8, 8], strides = [1, 1]} : vector<16x32xf32> to vector<8x8xf32>
    %261 = vector.extract_strided_slice %258 {offsets = [0, 16], sizes = [8, 8], strides = [1, 1]} : vector<16x32xf32> to vector<8x8xf32>
    %262 = vector.extract_strided_slice %258 {offsets = [0, 24], sizes = [8, 8], strides = [1, 1]} : vector<16x32xf32> to vector<8x8xf32>
    %263 = vector.extract_strided_slice %258 {offsets = [8, 0], sizes = [8, 8], strides = [1, 1]} : vector<16x32xf32> to vector<8x8xf32>
    %264 = vector.extract_strided_slice %258 {offsets = [8, 8], sizes = [8, 8], strides = [1, 1]} : vector<16x32xf32> to vector<8x8xf32>
    %265 = vector.extract_strided_slice %258 {offsets = [8, 16], sizes = [8, 8], strides = [1, 1]} : vector<16x32xf32> to vector<8x8xf32>
    %266 = vector.extract_strided_slice %258 {offsets = [8, 24], sizes = [8, 8], strides = [1, 1]} : vector<16x32xf32> to vector<8x8xf32>
    %267 = vector.shape_cast %259 : vector<8x8xf32> to vector<1x8x8xf32>
    %268 = vector.shape_cast %260 : vector<8x8xf32> to vector<1x8x8xf32>
    %269 = vector.shape_cast %261 : vector<8x8xf32> to vector<1x8x8xf32>
    %270 = vector.shape_cast %262 : vector<8x8xf32> to vector<1x8x8xf32>
    %271 = vector.shape_cast %263 : vector<8x8xf32> to vector<1x8x8xf32>
    %272 = vector.shape_cast %264 : vector<8x8xf32> to vector<1x8x8xf32>
    %273 = vector.shape_cast %265 : vector<8x8xf32> to vector<1x8x8xf32>
    %274 = vector.shape_cast %266 : vector<8x8xf32> to vector<1x8x8xf32>
    %275 = tpu.concatenate %267, %268, %269, %270, %271, %272, %273, %274 in 0 : vector<1x8x8xf32>, vector<1x8x8xf32>, vector<1x8x8xf32>, vector<1x8x8xf32>, vector<1x8x8xf32>, vector<1x8x8xf32>, vector<1x8x8xf32>, vector<1x8x8xf32> -> vector<8x8x8xf32>
    %276 = vector.extract_strided_slice %239 {offsets = [0, 64], sizes = [16, 32], strides = [1, 1]} : vector<16x96xf32> to vector<16x32xf32>
    %277 = vector.extract_strided_slice %276 {offsets = [0, 0], sizes = [8, 8], strides = [1, 1]} : vector<16x32xf32> to vector<8x8xf32>
    %278 = vector.extract_strided_slice %276 {offsets = [0, 8], sizes = [8, 8], strides = [1, 1]} : vector<16x32xf32> to vector<8x8xf32>
    %279 = vector.extract_strided_slice %276 {offsets = [0, 16], sizes = [8, 8], strides = [1, 1]} : vector<16x32xf32> to vector<8x8xf32>
    %280 = vector.extract_strided_slice %276 {offsets = [0, 24], sizes = [8, 8], strides = [1, 1]} : vector<16x32xf32> to vector<8x8xf32>
    %281 = vector.extract_strided_slice %276 {offsets = [8, 0], sizes = [8, 8], strides = [1, 1]} : vector<16x32xf32> to vector<8x8xf32>
    %282 = vector.extract_strided_slice %276 {offsets = [8, 8], sizes = [8, 8], strides = [1, 1]} : vector<16x32xf32> to vector<8x8xf32>
    %283 = vector.extract_strided_slice %276 {offsets = [8, 16], sizes = [8, 8], strides = [1, 1]} : vector<16x32xf32> to vector<8x8xf32>
    %284 = vector.extract_strided_slice %276 {offsets = [8, 24], sizes = [8, 8], strides = [1, 1]} : vector<16x32xf32> to vector<8x8xf32>
    %285 = vector.shape_cast %277 : vector<8x8xf32> to vector<1x8x8xf32>
    %286 = vector.shape_cast %278 : vector<8x8xf32> to vector<1x8x8xf32>
    %287 = vector.shape_cast %279 : vector<8x8xf32> to vector<1x8x8xf32>
    %288 = vector.shape_cast %280 : vector<8x8xf32> to vector<1x8x8xf32>
    %289 = vector.shape_cast %281 : vector<8x8xf32> to vector<1x8x8xf32>
    %290 = vector.shape_cast %282 : vector<8x8xf32> to vector<1x8x8xf32>
    %291 = vector.shape_cast %283 : vector<8x8xf32> to vector<1x8x8xf32>
    %292 = vector.shape_cast %284 : vector<8x8xf32> to vector<1x8x8xf32>
    %293 = tpu.concatenate %285, %286, %287, %288, %289, %290, %291, %292 in 0 : vector<1x8x8xf32>, vector<1x8x8xf32>, vector<1x8x8xf32>, vector<1x8x8xf32>, vector<1x8x8xf32>, vector<1x8x8xf32>, vector<1x8x8xf32>, vector<1x8x8xf32> -> vector<8x8x8xf32>
    "tpu.trace_start"() <{level = 10 : i32, message = "gqd,gkd->gqk"}> : () -> ()
    %cst_79 = arith.constant dense<0.000000e+00> : vector<8x8x8xf32>
    %294 = tpu.matmul %257, %275, %cst_79 {dimension_numbers = #tpu.dot_dimension_numbers<[2], [2], [1], [1], [0, 0, 0, 1, 1, 1], [0], [0]>} : vector<8x8x8xf32>, vector<8x8x8xf32>, vector<8x8x8xf32> -> vector<8x8x8xf32>
    "tpu.trace_stop"() : () -> ()
    %295 = vector.broadcast %48 : f32 to vector<8x8x8xf32>
    %296 = arith.mulf %294, %295 : vector<8x8x8xf32>
    %297 = vector.broadcast %46 : vector<8x1x8xf32> to vector<8x8x8xf32>
    %298 = arith.addf %296, %297 : vector<8x8x8xf32>
    %cst_80 = arith.constant dense<0xFF800000> : vector<8x8xf32>
    %299 = vector.multi_reduction <maximumf>, %298, %cst_80 [2] : vector<8x8x8xf32> to vector<8x8xf32>
    %300 = vector.shape_cast %299 : vector<8x8xf32> to vector<8x8x1xf32>
    %301 = vector.broadcast %300 : vector<8x8x1xf32> to vector<8x8x8xf32>
    %302 = arith.subf %298, %301 : vector<8x8x8xf32>
    %303 = math.exp %302 : vector<8x8x8xf32>
    %cst_81 = arith.constant dense<0.000000e+00> : vector<8x8xf32>
    %304 = vector.multi_reduction <add>, %303, %cst_81 [2] : vector<8x8x8xf32> to vector<8x8xf32>
    %305 = vector.shape_cast %304 : vector<8x8xf32> to vector<8x8x1xf32>
    %306 = tpu.reciprocal %305 {approx = true} : vector<8x8x1xf32> -> vector<8x8x1xf32>
    %307 = vector.broadcast %306 : vector<8x8x1xf32> to vector<8x8x8xf32>
    %308 = arith.mulf %303, %307 : vector<8x8x8xf32>
    "tpu.trace_start"() <{level = 10 : i32, message = "gqk,gkd->gqd"}> : () -> ()
    %cst_82 = arith.constant dense<0.000000e+00> : vector<8x8x8xf32>
    %309 = tpu.matmul %308, %293, %cst_82 {dimension_numbers = #tpu.dot_dimension_numbers<[2], [1], [1], [2], [0, 0, 0, 1, 1, 2], [0], [0]>} : vector<8x8x8xf32>, vector<8x8x8xf32>, vector<8x8x8xf32> -> vector<8x8x8xf32>
    "tpu.trace_stop"() : () -> ()
    %310 = vector.extract_strided_slice %309 {offsets = [0, 0, 0], sizes = [1, 8, 8], strides = [1, 1, 1]} : vector<8x8x8xf32> to vector<1x8x8xf32>
    %311 = vector.shape_cast %310 : vector<1x8x8xf32> to vector<8x8xf32>
    %312 = vector.extract_strided_slice %309 {offsets = [1, 0, 0], sizes = [1, 8, 8], strides = [1, 1, 1]} : vector<8x8x8xf32> to vector<1x8x8xf32>
    %313 = vector.shape_cast %312 : vector<1x8x8xf32> to vector<8x8xf32>
    %314 = vector.extract_strided_slice %309 {offsets = [2, 0, 0], sizes = [1, 8, 8], strides = [1, 1, 1]} : vector<8x8x8xf32> to vector<1x8x8xf32>
    %315 = vector.shape_cast %314 : vector<1x8x8xf32> to vector<8x8xf32>
    %316 = vector.extract_strided_slice %309 {offsets = [3, 0, 0], sizes = [1, 8, 8], strides = [1, 1, 1]} : vector<8x8x8xf32> to vector<1x8x8xf32>
    %317 = vector.shape_cast %316 : vector<1x8x8xf32> to vector<8x8xf32>
    %318 = tpu.concatenate %311, %313, %315, %317 in 1 : vector<8x8xf32>, vector<8x8xf32>, vector<8x8xf32>, vector<8x8xf32> -> vector<8x32xf32>
    %319 = vector.extract_strided_slice %309 {offsets = [4, 0, 0], sizes = [1, 8, 8], strides = [1, 1, 1]} : vector<8x8x8xf32> to vector<1x8x8xf32>
    %320 = vector.shape_cast %319 : vector<1x8x8xf32> to vector<8x8xf32>
    %321 = vector.extract_strided_slice %309 {offsets = [5, 0, 0], sizes = [1, 8, 8], strides = [1, 1, 1]} : vector<8x8x8xf32> to vector<1x8x8xf32>
    %322 = vector.shape_cast %321 : vector<1x8x8xf32> to vector<8x8xf32>
    %323 = vector.extract_strided_slice %309 {offsets = [6, 0, 0], sizes = [1, 8, 8], strides = [1, 1, 1]} : vector<8x8x8xf32> to vector<1x8x8xf32>
    %324 = vector.shape_cast %323 : vector<1x8x8xf32> to vector<8x8xf32>
    %325 = vector.extract_strided_slice %309 {offsets = [7, 0, 0], sizes = [1, 8, 8], strides = [1, 1, 1]} : vector<8x8x8xf32> to vector<1x8x8xf32>
    %326 = vector.shape_cast %325 : vector<1x8x8xf32> to vector<8x8xf32>
    %327 = tpu.concatenate %320, %322, %324, %326 in 1 : vector<8x8xf32>, vector<8x8xf32>, vector<8x8xf32>, vector<8x8xf32> -> vector<8x32xf32>
    %328 = tpu.concatenate %318, %327 in 0 : vector<8x32xf32>, vector<8x32xf32> -> vector<16x32xf32>
    %c1_83 = arith.constant 1 : index
    %c0_84 = arith.constant 0 : index
    %c0_85 = arith.constant 0 : index
    %329 = vector.load %arg6[%c1_83, %c0_84, %c0_85] : memref<2x32x32xf32, #tpu.memory_space<vmem>>, vector<1x32x32xf32>
    %330 = vector.shape_cast %329 : vector<1x32x32xf32> to vector<32x32xf32>
    %cst_86 = arith.constant dense<0.000000e+00> : vector<16x32xf32>
    %331 = tpu.matmul %328, %330, %cst_86 {dimension_numbers = #tpu.dot_dimension_numbers<[1], [0], [0], [1], [0, 0, 1, 1], [], []>} : vector<16x32xf32>, vector<32x32xf32>, vector<16x32xf32> -> vector<16x32xf32>
    %c1_87 = arith.constant 1 : index
    %c0_88 = arith.constant 0 : index
    %c0_89 = arith.constant 0 : index
    %332 = vector.load %arg7[%c1_87, %c0_88, %c0_89] : memref<2x1x32xf32, #tpu.memory_space<vmem>>, vector<1x1x32xf32>
    %333 = vector.shape_cast %332 : vector<1x1x32xf32> to vector<1x32xf32>
    %334 = vector.broadcast %333 : vector<1x32xf32> to vector<16x32xf32>
    %335 = arith.addf %331, %334 : vector<16x32xf32>
    %336 = arith.addf %335, %232 : vector<16x32xf32>
    %c1_90 = arith.constant 1 : index
    %c0_91 = arith.constant 0 : index
    %c0_92 = arith.constant 0 : index
    %337 = vector.load %arg8[%c1_90, %c0_91, %c0_92] : memref<2x1x32xf32, #tpu.memory_space<vmem>>, vector<1x1x32xf32>
    %338 = vector.shape_cast %337 : vector<1x1x32xf32> to vector<1x32xf32>
    %c1_93 = arith.constant 1 : index
    %c0_94 = arith.constant 0 : index
    %c0_95 = arith.constant 0 : index
    %339 = vector.load %arg9[%c1_93, %c0_94, %c0_95] : memref<2x1x32xf32, #tpu.memory_space<vmem>>, vector<1x1x32xf32>
    %340 = vector.shape_cast %339 : vector<1x1x32xf32> to vector<1x32xf32>
    %cst_96 = arith.constant dense<0.000000e+00> : vector<16xf32>
    %341 = vector.multi_reduction <add>, %336, %cst_96 [1] : vector<16x32xf32> to vector<16xf32>
    %342 = vector.shape_cast %341 : vector<16xf32> to vector<16x1xf32>
    %cst_97 = arith.constant 3.200000e+01 : f32
    %343 = vector.broadcast %cst_97 : f32 to vector<16x1xf32>
    %344 = arith.divf %342, %343 : vector<16x1xf32>
    %345 = vector.broadcast %344 : vector<16x1xf32> to vector<16x32xf32>
    %346 = arith.subf %336, %345 : vector<16x32xf32>
    %347 = arith.mulf %346, %346 : vector<16x32xf32>
    %cst_98 = arith.constant dense<0.000000e+00> : vector<16xf32>
    %348 = vector.multi_reduction <add>, %347, %cst_98 [1] : vector<16x32xf32> to vector<16xf32>
    %349 = vector.shape_cast %348 : vector<16xf32> to vector<16x1xf32>
    %cst_99 = arith.constant 3.200000e+01 : f32
    %350 = vector.broadcast %cst_99 : f32 to vector<16x1xf32>
    %351 = arith.divf %349, %350 : vector<16x1xf32>
    %352 = vector.broadcast %344 : vector<16x1xf32> to vector<16x32xf32>
    %353 = arith.subf %336, %352 : vector<16x32xf32>
    %cst_100 = arith.constant 9.99999996E-13 : f32
    %354 = vector.broadcast %cst_100 : f32 to vector<16x1xf32>
    %355 = arith.addf %351, %354 : vector<16x1xf32>
    %356 = math.rsqrt %355 : vector<16x1xf32>
    %357 = vector.broadcast %356 : vector<16x1xf32> to vector<16x32xf32>
    %358 = arith.mulf %353, %357 : vector<16x32xf32>
    %359 = vector.broadcast %338 : vector<1x32xf32> to vector<16x32xf32>
    %360 = arith.mulf %358, %359 : vector<16x32xf32>
    %361 = vector.broadcast %340 : vector<1x32xf32> to vector<16x32xf32>
    %362 = arith.addf %360, %361 : vector<16x32xf32>
    %c1_101 = arith.constant 1 : index
    %c0_102 = arith.constant 0 : index
    %c0_103 = arith.constant 0 : index
    %363 = vector.load %arg10[%c1_101, %c0_102, %c0_103] : memref<2x32x64xf32, #tpu.memory_space<vmem>>, vector<1x32x64xf32>
    %364 = vector.shape_cast %363 : vector<1x32x64xf32> to vector<32x64xf32>
    %cst_104 = arith.constant dense<0.000000e+00> : vector<16x64xf32>
    %365 = tpu.matmul %362, %364, %cst_104 {dimension_numbers = #tpu.dot_dimension_numbers<[1], [0], [0], [1], [0, 0, 1, 1], [], []>} : vector<16x32xf32>, vector<32x64xf32>, vector<16x64xf32> -> vector<16x64xf32>
    %c1_105 = arith.constant 1 : index
    %c0_106 = arith.constant 0 : index
    %c0_107 = arith.constant 0 : index
    %366 = vector.load %arg11[%c1_105, %c0_106, %c0_107] : memref<2x1x64xf32, #tpu.memory_space<vmem>>, vector<1x1x64xf32>
    %367 = vector.shape_cast %366 : vector<1x1x64xf32> to vector<1x64xf32>
    %368 = vector.broadcast %367 : vector<1x64xf32> to vector<16x64xf32>
    %369 = arith.addf %365, %368 : vector<16x64xf32>
    %370 = arith.mulf %369, %369 : vector<16x64xf32>
    %371 = arith.mulf %369, %370 : vector<16x64xf32>
    %cst_108 = arith.constant 4.471500e-02 : f32
    %372 = vector.broadcast %cst_108 : f32 to vector<16x64xf32>
    %373 = arith.mulf %372, %371 : vector<16x64xf32>
    %374 = arith.addf %369, %373 : vector<16x64xf32>
    %cst_109 = arith.constant 0.797884583 : f32
    %375 = vector.broadcast %cst_109 : f32 to vector<16x64xf32>
    %376 = arith.mulf %375, %374 : vector<16x64xf32>
    %377 = math.tanh %376 : vector<16x64xf32>
    %cst_110 = arith.constant 1.000000e+00 : f32
    %378 = vector.broadcast %cst_110 : f32 to vector<16x64xf32>
    %379 = arith.addf %378, %377 : vector<16x64xf32>
    %cst_111 = arith.constant 5.000000e-01 : f32
    %380 = vector.broadcast %cst_111 : f32 to vector<16x64xf32>
    %381 = arith.mulf %380, %379 : vector<16x64xf32>
    %382 = arith.mulf %369, %381 : vector<16x64xf32>
    %c1_112 = arith.constant 1 : index
    %c0_113 = arith.constant 0 : index
    %c0_114 = arith.constant 0 : index
    %383 = vector.load %arg12[%c1_112, %c0_113, %c0_114] : memref<2x64x32xf32, #tpu.memory_space<vmem>>, vector<1x64x32xf32>
    %384 = vector.shape_cast %383 : vector<1x64x32xf32> to vector<64x32xf32>
    %cst_115 = arith.constant dense<0.000000e+00> : vector<16x32xf32>
    %385 = tpu.matmul %382, %384, %cst_115 {dimension_numbers = #tpu.dot_dimension_numbers<[1], [0], [0], [1], [0, 0, 1, 1], [], []>} : vector<16x64xf32>, vector<64x32xf32>, vector<16x32xf32> -> vector<16x32xf32>
    %c1_116 = arith.constant 1 : index
    %c0_117 = arith.constant 0 : index
    %c0_118 = arith.constant 0 : index
    %386 = vector.load %arg13[%c1_116, %c0_117, %c0_118] : memref<2x1x32xf32, #tpu.memory_space<vmem>>, vector<1x1x32xf32>
    %387 = vector.shape_cast %386 : vector<1x1x32xf32> to vector<1x32xf32>
    %388 = vector.broadcast %387 : vector<1x32xf32> to vector<16x32xf32>
    %389 = arith.addf %385, %388 : vector<16x32xf32>
    %390 = arith.addf %389, %362 : vector<16x32xf32>
    %c1_119 = arith.constant 1 : index
    %c0_120 = arith.constant 0 : index
    %c0_121 = arith.constant 0 : index
    %391 = vector.load %arg14[%c1_119, %c0_120, %c0_121] : memref<2x1x32xf32, #tpu.memory_space<vmem>>, vector<1x1x32xf32>
    %392 = vector.shape_cast %391 : vector<1x1x32xf32> to vector<1x32xf32>
    %c1_122 = arith.constant 1 : index
    %c0_123 = arith.constant 0 : index
    %c0_124 = arith.constant 0 : index
    %393 = vector.load %arg15[%c1_122, %c0_123, %c0_124] : memref<2x1x32xf32, #tpu.memory_space<vmem>>, vector<1x1x32xf32>
    %394 = vector.shape_cast %393 : vector<1x1x32xf32> to vector<1x32xf32>
    %cst_125 = arith.constant dense<0.000000e+00> : vector<16xf32>
    %395 = vector.multi_reduction <add>, %390, %cst_125 [1] : vector<16x32xf32> to vector<16xf32>
    %396 = vector.shape_cast %395 : vector<16xf32> to vector<16x1xf32>
    %cst_126 = arith.constant 3.200000e+01 : f32
    %397 = vector.broadcast %cst_126 : f32 to vector<16x1xf32>
    %398 = arith.divf %396, %397 : vector<16x1xf32>
    %399 = vector.broadcast %398 : vector<16x1xf32> to vector<16x32xf32>
    %400 = arith.subf %390, %399 : vector<16x32xf32>
    %401 = arith.mulf %400, %400 : vector<16x32xf32>
    %cst_127 = arith.constant dense<0.000000e+00> : vector<16xf32>
    %402 = vector.multi_reduction <add>, %401, %cst_127 [1] : vector<16x32xf32> to vector<16xf32>
    %403 = vector.shape_cast %402 : vector<16xf32> to vector<16x1xf32>
    %cst_128 = arith.constant 3.200000e+01 : f32
    %404 = vector.broadcast %cst_128 : f32 to vector<16x1xf32>
    %405 = arith.divf %403, %404 : vector<16x1xf32>
    %406 = vector.broadcast %398 : vector<16x1xf32> to vector<16x32xf32>
    %407 = arith.subf %390, %406 : vector<16x32xf32>
    %cst_129 = arith.constant 9.99999996E-13 : f32
    %408 = vector.broadcast %cst_129 : f32 to vector<16x1xf32>
    %409 = arith.addf %405, %408 : vector<16x1xf32>
    %410 = math.rsqrt %409 : vector<16x1xf32>
    %411 = vector.broadcast %410 : vector<16x1xf32> to vector<16x32xf32>
    %412 = arith.mulf %407, %411 : vector<16x32xf32>
    %413 = vector.broadcast %392 : vector<1x32xf32> to vector<16x32xf32>
    %414 = arith.mulf %412, %413 : vector<16x32xf32>
    %415 = vector.broadcast %394 : vector<1x32xf32> to vector<16x32xf32>
    %416 = arith.addf %414, %415 : vector<16x32xf32>
    %c0_130 = arith.constant 0 : index
    %c0_131 = arith.constant 0 : index
    %417 = vector.load %arg16[%c0_130, %c0_131] : memref<16x32xf32, #tpu.memory_space<vmem>>, vector<16x32xf32>
    tpu.vector_store %arg16[%c0_130, %c0_131], %416 {strides = array<i32>} : memref<16x32xf32, #tpu.memory_space<vmem>>, vector<16x32xf32>,
    return
  }
}

</mosaic_0001>

<llo_original>
// kernel: tpu_custom_call.1
$region0: #{tpu_custom_call.1}
  #allocation0 [shape = 'u32[]', space=smem, size = 0x4, offset = 0x4, fixed_abs, tag = 'smem constant byte address 0x4 - core index']
  #allocation1 [shape = 'u32[144,128]{1,0:T(1,128)}', space=vmem, size = 0x12000, scoped, tag = 'internal scratch']
  %s0 = inlined_call_operand.hbm [shape: f32[16,32], index: 0, kind: input, shape index: {}]
  %s1 = inlined_call_operand.hbm [shape: f32[2,8], index: 1, kind: input, shape index: {}]
  %s2 = inlined_call_operand.hbm [shape: f32[1,32], index: 2, kind: input, shape index: {}]
  %s3 = inlined_call_operand.hbm [shape: f32[1,32], index: 3, kind: input, shape index: {}]
  %s4 = inlined_call_operand.vmem [shape: f32[2,32,96], index: 4, kind: input, shape index: {}]
  %s5 = inlined_call_operand.vmem [shape: f32[2,1,96], index: 5, kind: input, shape index: {}]
  %s6 = inlined_call_operand.vmem [shape: f32[2,32,32], index: 6, kind: input, shape index: {}]
  %s7 = inlined_call_operand.vmem [shape: f32[2,1,32], index: 7, kind: input, shape index: {}]
  %s8 = inlined_call_operand.vmem [shape: f32[2,1,32], index: 8, kind: input, shape index: {}]
  %s9 = inlined_call_operand.vmem [shape: f32[2,1,32], index: 9, kind: input, shape index: {}]
  %s10 = inlined_call_operand.vmem [shape: f32[2,32,64], index: 10, kind: input, shape index: {}]
  %s11 = inlined_call_operand.vmem [shape: f32[2,1,64], index: 11, kind: input, shape index: {}]
  %s12 = inlined_call_operand.vmem [shape: f32[2,64,32], index: 12, kind: input, shape index: {}]
  %s13 = inlined_call_operand.vmem [shape: f32[2,1,32], index: 13, kind: input, shape index: {}]
  %s14 = inlined_call_operand.vmem [shape: f32[2,1,32], index: 14, kind: input, shape index: {}]
  %s15 = inlined_call_operand.vmem [shape: f32[2,1,32], index: 15, kind: input, shape index: {}]
  %s16 = inlined_call_operand.hbm [shape: f32[16,32], index: 16, kind: output, shape index: {}]
  %s17 = sld [smem:[#allocation0]]
  $region90: #{tpu_custom_call.1} parent=0
    _
  %s19 = ssub.s32 1, %s17
  %s20 = scalar_select 0, %s19, %s17
  $region1: #{tpu_custom_call.1} parent=0
    #allocation2 [shape = 'u8[8192]{0}', space=vmem, size = 0x2000, scoped, tag = 'input window, operand 0, single buffered']
    #allocation3 [shape = 's32[1]{0}', space=sflag, size = 0x4, scoped, tag = 'scoped memory for tpu_custom_call.1']
    #allocation4 [shape = 's32[1]{0}', space=sflag, size = 0x4, scoped, tag = 'scoped memory for tpu_custom_call.1']
    #allocation5 [shape = 'u8[1024]{0}', space=vmem, size = 0x400, scoped, tag = 'input window, operand 1, single buffered']
    #allocation6 [shape = 's32[1]{0}', space=sflag, size = 0x4, scoped, tag = 'scoped memory for tpu_custom_call.1']
    #allocation7 [shape = 'u8[512]{0}', space=vmem, size = 0x400, scoped, tag = 'input window, operand 2, single buffered']
    #allocation8 [shape = 'u8[512]{0}', space=vmem, size = 0x400, scoped, tag = 'input window, operand 3, single buffered']
    #allocation9 [shape = 's32[1]{0}', space=sflag, size = 0x4, scoped, tag = 'scoped memory for tpu_custom_call.1']
    #allocation10 [shape = 'u8[8192]{0}', space=vmem, size = 0x2000, scoped, tag = 'output window, operand 0, single buffered']
    %21 = vsyncpa [#allocation3], 0
    %22 = vsyncpa [#allocation6], 0
    %23 = vsyncpa [#allocation9], 0
    %24 = vsyncpa [#allocation4], 0
    // Predicated region
    $region2: #{tpu_custom_call.1} parent=1 // pred_check
      _
    $region3: #{tpu_custom_call.1} parent=1 // pred_check_branch
      %26 = sbr.rel (0) target = $region5
    $region4: #{tpu_custom_call.1} parent=1 // pred_region
      %s28 = ssub.s32 256, 256
      %29 = vsyncadd [#allocation3], %s28
      %s30 = sshll.u32 [#allocation2], 4
      %s31 = int_to_ptr.vmem [resolvable:$true] %s30
      %36 = dma.hbm_to_vmem [thread:$0]  %s0, 256, %s31, [#allocation3], 128, 128, 8
    $region5: #{tpu_custom_call.1} parent=1 // pred_fallthru
      _
    // Predicated region
    $region6: #{tpu_custom_call.1} parent=1 // pred_check
      _
    $region7: #{tpu_custom_call.1} parent=1 // pred_check_branch
      %38 = sbr.rel (0) target = $region9
    $region8: #{tpu_custom_call.1} parent=1 // pred_region
      %s40 = ssub.s32 32, 32
      %41 = vsyncadd [#allocation6], %s40
      %s43 = sshll.u32 [#allocation5], 4
      %s44 = int_to_ptr.vmem [resolvable:$true] %s43
      %46 = dma.hbm_to_vmem [thread:$0]  %s1, 32, %s44, [#allocation6]
    $region9: #{tpu_custom_call.1} parent=1 // pred_fallthru
      _
    // Predicated region
    $region10: #{tpu_custom_call.1} parent=1 // pred_check
      _
    $region11: #{tpu_custom_call.1} parent=1 // pred_check_branch
      %48 = sbr.rel (0) target = $region13
    $region12: #{tpu_custom_call.1} parent=1 // pred_region
      %s50 = ssub.s32 16, 16
      %51 = vsyncadd [#allocation6], %s50
      %s53 = sshll.u32 [#allocation7], 4
      %s54 = int_to_ptr.vmem [resolvable:$true] %s53
      %56 = dma.hbm_to_vmem [thread:$0]  %s2, 16, %s54, [#allocation6]
    $region13: #{tpu_custom_call.1} parent=1 // pred_fallthru
      _
    // Predicated region
    $region14: #{tpu_custom_call.1} parent=1 // pred_check
      _
    $region15: #{tpu_custom_call.1} parent=1 // pred_check_branch
      %58 = sbr.rel (0) target = $region17
    $region16: #{tpu_custom_call.1} parent=1 // pred_region
      %s60 = ssub.s32 16, 16
      %61 = vsyncadd [#allocation9], %s60
      %s63 = sshll.u32 [#allocation8], 4
      %s64 = int_to_ptr.vmem [resolvable:$true] %s63
      %66 = dma.hbm_to_vmem [thread:$0]  %s3, 16, %s64, [#allocation9]
    $region17: #{tpu_custom_call.1} parent=1 // pred_fallthru
      _
    // Predicated region
    $region18: #{tpu_custom_call.1} parent=1 // pred_check
      _
    $region19: #{tpu_custom_call.1} parent=1 // pred_check_branch
      %68 = sbr.rel (0) target = $region21
    $region20: #{tpu_custom_call.1} parent=1 // pred_region
      _
    $region21: #{tpu_custom_call.1} parent=1 // pred_fallthru
      _
    // Predicated region
    $region22: #{tpu_custom_call.1} parent=1 // pred_check
      _
    $region23: #{tpu_custom_call.1} parent=1 // pred_check_branch
      %70 = sbr.rel (0) target = $region25
    $region24: #{tpu_custom_call.1} parent=1 // pred_region
      _
    $region25: #{tpu_custom_call.1} parent=1 // pred_fallthru
      _
    // Predicated region
    $region26: #{tpu_custom_call.1} parent=1 // pred_check
      _
    $region27: #{tpu_custom_call.1} parent=1 // pred_check_branch
      %72 = sbr.rel (0) target = $region29
    $region28: #{tpu_custom_call.1} parent=1 // pred_region
      _
    $region29: #{tpu_custom_call.1} parent=1 // pred_fallthru
      _
    // Predicated region
    $region30: #{tpu_custom_call.1} parent=1 // pred_check
      _
    $region31: #{tpu_custom_call.1} parent=1 // pred_check_branch
      %74 = sbr.rel (0) target = $region33
    $region32: #{tpu_custom_call.1} parent=1 // pred_region
      _
    $region33: #{tpu_custom_call.1} parent=1 // pred_fallthru
      _
    // Predicated region
    $region34: #{tpu_custom_call.1} parent=1 // pred_check
      _
    $region35: #{tpu_custom_call.1} parent=1 // pred_check_branch
      %76 = sbr.rel (0) target = $region37
    $region36: #{tpu_custom_call.1} parent=1 // pred_region
      _
    $region37: #{tpu_custom_call.1} parent=1 // pred_fallthru
      _
    // Predicated region
    $region38: #{tpu_custom_call.1} parent=1 // pred_check
      _
    $region39: #{tpu_custom_call.1} parent=1 // pred_check_branch
      %78 = sbr.rel (0) target = $region41
    $region40: #{tpu_custom_call.1} parent=1 // pred_region
      _
    $region41: #{tpu_custom_call.1} parent=1 // pred_fallthru
      _
    // Predicated region
    $region42: #{tpu_custom_call.1} parent=1 // pred_check
      _
    $region43: #{tpu_custom_call.1} parent=1 // pred_check_branch
      %80 = sbr.rel (0) target = $region45
    $region44: #{tpu_custom_call.1} parent=1 // pred_region
      _
    $region45: #{tpu_custom_call.1} parent=1 // pred_fallthru
      _
    // Predicated region
    $region46: #{tpu_custom_call.1} parent=1 // pred_check
      _
    $region47: #{tpu_custom_call.1} parent=1 // pred_check_branch
      %82 = sbr.rel (0) target = $region49
    $region48: #{tpu_custom_call.1} parent=1 // pred_region
      _
    $region49: #{tpu_custom_call.1} parent=1 // pred_fallthru
      _
    // Predicated region
    $region50: #{tpu_custom_call.1} parent=1 // pred_check
      _
    $region51: #{tpu_custom_call.1} parent=1 // pred_check_branch
      %84 = sbr.rel (0) target = $region53
    $region52: #{tpu_custom_call.1} parent=1 // pred_region
      _
    $region53: #{tpu_custom_call.1} parent=1 // pred_fallthru
      _
    // Predicated region
    $region54: #{tpu_custom_call.1} parent=1 // pred_check
      _
    $region55: #{tpu_custom_call.1} parent=1 // pred_check_branch
      %86 = sbr.rel (0) target = $region57
    $region56: #{tpu_custom_call.1} parent=1 // pred_region
      _
    $region57: #{tpu_custom_call.1} parent=1 // pred_fallthru
      _
    // Predicated region
    $region58: #{tpu_custom_call.1} parent=1 // pred_check
      _
    $region59: #{tpu_custom_call.1} parent=1 // pred_check_branch
      %88 = sbr.rel (0) target = $region61
    $region60: #{tpu_custom_call.1} parent=1 // pred_region
      _
    $region61: #{tpu_custom_call.1} parent=1 // pred_fallthru
      _
    // Predicated region
    $region62: #{tpu_custom_call.1} parent=1 // pred_check
      _
    $region63: #{tpu_custom_call.1} parent=1 // pred_check_branch
      %90 = sbr.rel (0) target = $region65
    $region64: #{tpu_custom_call.1} parent=1 // pred_region
      _
    $region65: #{tpu_custom_call.1} parent=1 // pred_fallthru
      _
    // Predicated region
    $region66: #{tpu_custom_call.1} parent=1 // pred_check
      _
    $region67: #{tpu_custom_call.1} parent=1 // pred_check_branch
      %92 = sbr.rel (0) target = $region69
    $region68: #{tpu_custom_call.1} parent=1 // pred_region
      %93 = dma.done [#allocation3], 256
    $region69: #{tpu_custom_call.1} parent=1 // pred_fallthru
      _
    // Predicated region
    $region70: #{tpu_custom_call.1} parent=1 // pred_check
      _
    $region71: #{tpu_custom_call.1} parent=1 // pred_check_branch
      %95 = sbr.rel (0) target = $region73
    $region72: #{tpu_custom_call.1} parent=1 // pred_region
      %96 = dma.done [#allocation6], 32
    $region73: #{tpu_custom_call.1} parent=1 // pred_fallthru
      _
    // Predicated region
    $region74: #{tpu_custom_call.1} parent=1 // pred_check
      _
    $region75: #{tpu_custom_call.1} parent=1 // pred_check_branch
      %98 = sbr.rel (0) target = $region77
    $region76: #{tpu_custom_call.1} parent=1 // pred_region
      %99 = dma.done [#allocation6], 16
    $region77: #{tpu_custom_call.1} parent=1 // pred_fallthru
      _
    // Predicated region
    $region78: #{tpu_custom_call.1} parent=1 // pred_check
      _
    $region79: #{tpu_custom_call.1} parent=1 // pred_check_branch
      %101 = sbr.rel (0) target = $region81
    $region80: #{tpu_custom_call.1} parent=1 // pred_region
      %102 = dma.done [#allocation9], 16
    $region81: #{tpu_custom_call.1} parent=1 // pred_fallthru
      _
    %v103 = vld [vmem:[#allocation2] sm:$0xff]
    %v104 = vld [vmem:[#allocation2 + $0x8] sm:$0xff]
    %v105 = vld [vmem:[#allocation7] sm:$0x1]
    %v106 = vld [vmem:[#allocation8] sm:$0x1]
    %vm107 = vcmask 261120
    %v108 = vsel %vm107, %v103, 0.0
    %109 = vadd.xlane.f32.xlu0 %v108
    %v110 = vpop.xlane.xlu0 %109
    %v111 = vsel %vm107, %v104, 0.0
    %112 = vadd.xlane.f32.xlu0 %v111
    %v113 = vpop.xlane.xlu0 %112
    %v114 = vrcp.pop 32.0
    %v115 = vmul.f32 %v110, %v114
    %v116 = vmul.f32 %v113, %v114
    %v117 = vsub.f32 %v103, %v115
    %v118 = vsub.f32 %v104, %v116
    %v119 = vmul.f32 %v117, %v117
    %v120 = vmul.f32 %v118, %v118
    %v121 = vsel %vm107, %v119, 0.0
    %122 = vadd.xlane.f32.xlu0 %v121
    %v123 = vpop.xlane.xlu0 %122
    %v124 = vsel %vm107, %v120, 0.0
    %125 = vadd.xlane.f32.xlu0 %v124
    %v126 = vpop.xlane.xlu0 %125
    %v127 = vmul.f32 %v123, %v114
    %v128 = vmul.f32 %v126, %v114
    %v129 = vadd.f32 %v127, 1e-12
    %v130 = vadd.f32 %v128, 1e-12
    %v131 = vrsqrt.pop %v129
    %v132 = vrsqrt.pop %v130
    %v133 = vmul.f32 %v117, %v131
    %v134 = vmul.f32 %v118, %v132
    %v136 = vlaneseq
    %v137 = vshrl.u32 %v136, 7
    %v138 = vsub.s32 0, %v137
    %v139 = vrot.slane %v105, %v138
    %v141 = vmul.f32 %v133, %v139
    %v142 = vmul.f32 %v134, %v139
    %v144 = vlaneseq
    %v145 = vshrl.u32 %v144, 7
    %v146 = vsub.s32 0, %v145
    %v147 = vrot.slane %v106, %v146
    %v149 = vadd.f32 %v141, %v147
    %v150 = vadd.f32 %v142, %v147
    %v151 = vld [vmem:[#allocation5] sm:$0x3]
    %v152 = vsub.f32 1.0, %v151
    %v153 = vmul.f32 %v152, -1e+09
    %v155 = vrot.slane %v153, 1
    %v157 = vld [vmem:[%s4] sm:$0xff]
    %v158 = vld [vmem:[%s4 + $0x8] sm:$0xff]
    %v159 = vld [vmem:[%s4 + $0x10] sm:$0xff]
    %v160 = vld [vmem:[%s4 + $0x18] sm:$0xff]
    %v161 = vld [vmem:[%s5] sm:$0x1]
    %v163 = vlaneseq
    %v164 = vshrl.u32 %v163, 7
    %v165 = vsub.s32 0, %v164
    %v166 = vrot.slane %v161, %v165
    %v169 = vsel %vm107, %v149, 0
    %v172 = vsel %vm107, %v150, 0
    %174 = vmatprep.subr.mxu0 0.0
    %175 = vmatpush1.msra.mxu0 0.0
    %176 = vmatprep.subr.mxu0 0.0
    %177 = vmatpush1.msra.mxu0 0.0
    %178 = vmatprep.subr.mxu0 0.0
    %179 = vmatpush1.msra.mxu0 0.0
    %180 = vmatprep.subr.mxu0 0.0
    %181 = vmatpush1.msra.mxu0 0.0
    %182 = vmatprep.subr.mxu0 0.0
    %183 = vmatpush1.msra.mxu0 0.0
    %184 = vmatprep.subr.mxu0 0.0
    %185 = vmatpush1.msra.mxu0 0.0
    %186 = vmatprep.subr.mxu0 0.0
    %187 = vmatpush1.msra.mxu0 0.0
    %188 = vmatprep.subr.mxu0 0.0
    %189 = vmatpush1.msra.mxu0 0.0
    %190 = vmatprep.subr.mxu0 0.0
    %191 = vmatpush1.msra.mxu0 0.0
    %192 = vmatprep.subr.mxu0 0.0
    %193 = vmatpush1.msra.mxu0 0.0
    %194 = vmatprep.subr.mxu0 0.0
    %195 = vmatpush1.msra.mxu0 0.0
    %196 = vmatprep.subr.mxu0 0.0
    %197 = vmatpush1.msra.mxu0 0.0
    %198 = vmatprep.subr.mxu0 0.0
    %199 = vmatpush1.msra.mxu0 %v160
    %200 = vmatprep.subr.mxu0 0.0
    %201 = vmatpush1.msra.mxu0 %v159
    %202 = vmatprep.subr.mxu0 0.0
    %203 = vmatpush1.msra.mxu0 %v158
    %204 = vmatprep.subr.mxu0 0.0
    %205 = vmatpush1.msra.mxu0 %v157
    %206 = vmatprep.subr.mxu0 0.0
    %207 = vmatpush2.msra.mxu0 0.0
    %208 = vmatprep.subr.mxu0 0.0
    %209 = vmatpush2.msra.mxu0 0.0
    %210 = vmatprep.subr.mxu0 0.0
    %211 = vmatpush2.msra.mxu0 0.0
    %212 = vmatprep.subr.mxu0 0.0
    %213 = vmatpush2.msra.mxu0 0.0
    %214 = vmatprep.subr.mxu0 0.0
    %215 = vmatpush2.msra.mxu0 0.0
    %216 = vmatprep.subr.mxu0 0.0
    %217 = vmatpush2.msra.mxu0 0.0
    %218 = vmatprep.subr.mxu0 0.0
    %219 = vmatpush2.msra.mxu0 0.0
    %220 = vmatprep.subr.mxu0 0.0
    %221 = vmatpush2.msra.mxu0 0.0
    %222 = vmatprep.subr.mxu0 0.0
    %223 = vmatpush2.msra.mxu0 0.0
    %224 = vmatprep.subr.mxu0 0.0
    %225 = vmatpush2.msra.mxu0 0.0
    %226 = vmatprep.subr.mxu0 0.0
    %227 = vmatpush2.msra.mxu0 0.0
    %228 = vmatprep.subr.mxu0 0.0
    %229 = vmatpush2.msra.mxu0 0.0
    %230 = vmatprep.subr.mxu0 0.0
    %231 = vmatpush2.msra.mxu0 0.0
    %232 = vmatprep.subr.mxu0 0.0
    %233 = vmatpush2.msra.mxu0 0.0
    %234 = vmatprep.subr.mxu0 0.0
    %235 = vmatpush2.msra.mxu0 0.0
    %236 = vmatprep.subr.mxu0 0.0
    %237 = vmatpush2.msra.mxu0 0.0
    %238 = vmatprep.mubr.f32.mxu0 0.0
    %239 = vmatmul.mubr.f32.gmra.mxu0 %v169
    %v240 = vpop.f32.mrf.mxu0
    %v241 = vadd.f32 %v166, %v240
    %v242 = vpop.f32.mrf.mxu0
    %243 = vmatprep.mubr.f32.mxu0 0.0
    %244 = vmatmul.mubr.f32.gmra.mxu0 %v172
    %v245 = vpop.f32.mrf.mxu0
    %v246 = vadd.f32 %v166, %v245
    %v247 = vpop.f32.mrf.mxu0
    %248 = vdwg.mxu0
    %250 = vrot.lane.b32.xlu0 %v241, 120
    %v251 = vpop.permute.xlu0 %250
    %252 = vrot.lane.b32.xlu0 %v241, 112
    %v253 = vpop.permute.xlu0 %252
    %254 = vrot.lane.b32.xlu0 %v241, 104
    %v255 = vpop.permute.xlu0 %254
    %257 = vrot.lane.b32.xlu0 %v246, 120
    %v258 = vpop.permute.xlu0 %257
    %259 = vrot.lane.b32.xlu0 %v246, 112
    %v260 = vpop.permute.xlu0 %259
    %261 = vrot.lane.b32.xlu0 %v246, 104
    %v262 = vpop.permute.xlu0 %261
    %263 = vrot.lane.b32.xlu0 %v241, 96
    %v264 = vpop.permute.xlu0 %263
    %vm265 = vcmask 64512
    %v266 = vsel %vm265, %v241, 0
    %v268 = vsel %vm265, %v264, 0
    %270 = vmatprep.subr.mxu0 0.0
    %271 = vmatpush1.xpose.msra.mxu0 0.0
    %272 = vmatprep.subr.mxu0 0.0
    %273 = vmatpush1.xpose.msra.mxu0 0.0
    %274 = vmatprep.subr.mxu0 0.0
    %275 = vmatpush1.xpose.msra.mxu0 0.0
    %276 = vmatprep.subr.mxu0 0.0
    %277 = vmatpush1.xpose.msra.mxu0 0.0
    %278 = vmatprep.subr.mxu0 0.0
    %279 = vmatpush1.xpose.msra.mxu0 0.0
    %280 = vmatprep.subr.mxu0 0.0
    %281 = vmatpush1.xpose.msra.mxu0 0.0
    %282 = vmatprep.subr.mxu0 0.0
    %283 = vmatpush1.xpose.msra.mxu0 0.0
    %284 = vmatprep.subr.mxu0 0.0
    %285 = vmatpush1.xpose.msra.mxu0 0.0
    %286 = vmatprep.subr.mxu0 0.0
    %287 = vmatpush1.xpose.msra.mxu0 0.0
    %288 = vmatprep.subr.mxu0 0.0
    %289 = vmatpush1.xpose.msra.mxu0 0.0
    %290 = vmatprep.subr.mxu0 0.0
    %291 = vmatpush1.xpose.msra.mxu0 0.0
    %292 = vmatprep.subr.mxu0 0.0
    %293 = vmatpush1.xpose.msra.mxu0 0.0
    %294 = vmatprep.subr.mxu0 0.0
    %295 = vmatpush1.xpose.msra.mxu0 0.0
    %296 = vmatprep.subr.mxu0 0.0
    %297 = vmatpush1.xpose.msra.mxu0 0.0
    %298 = vmatprep.subr.mxu0 0.0
    %299 = vmatpush1.xpose.msra.mxu0 0.0
    %300 = vmatprep.subr.mxu0 0.0
    %301 = vmatpush1.xpose.msra.mxu0 %v268
    %302 = vmatprep.subr.mxu0 0.0
    %303 = vmatpush2.xpose.msra.mxu0 0.0
    %304 = vmatprep.subr.mxu0 0.0
    %305 = vmatpush2.xpose.msra.mxu0 0.0
    %306 = vmatprep.subr.mxu0 0.0
    %307 = vmatpush2.xpose.msra.mxu0 0.0
    %308 = vmatprep.subr.mxu0 0.0
    %309 = vmatpush2.xpose.msra.mxu0 0.0
    %310 = vmatprep.subr.mxu0 0.0
    %311 = vmatpush2.xpose.msra.mxu0 0.0
    %312 = vmatprep.subr.mxu0 0.0
    %313 = vmatpush2.xpose.msra.mxu0 0.0
    %314 = vmatprep.subr.mxu0 0.0
    %315 = vmatpush2.xpose.msra.mxu0 0.0
    %316 = vmatprep.subr.mxu0 0.0
    %317 = vmatpush2.xpose.msra.mxu0 0.0
    %318 = vmatprep.subr.mxu0 0.0
    %319 = vmatpush2.xpose.msra.mxu0 0.0
    %320 = vmatprep.subr.mxu0 0.0
    %321 = vmatpush2.xpose.msra.mxu0 0.0
    %322 = vmatprep.subr.mxu0 0.0
    %323 = vmatpush2.xpose.msra.mxu0 0.0
    %324 = vmatprep.subr.mxu0 0.0
    %325 = vmatpush2.xpose.msra.mxu0 0.0
    %326 = vmatprep.subr.mxu0 0.0
    %327 = vmatpush2.xpose.msra.mxu0 0.0
    %328 = vmatprep.subr.mxu0 0.0
    %329 = vmatpush2.xpose.msra.mxu0 0.0
    %330 = vmatprep.subr.mxu0 0.0
    %331 = vmatpush2.xpose.msra.mxu0 0.0
    %332 = vmatprep.subr.mxu0 0.0
    %333 = vmatpush2.xpose.msra.mxu0 0.0
    %334 = vmatprep.mubr.f32.mxu0 0.0
    %335 = vmatmul.mubr.f32.gmra.mxu0 %v266
    %v336 = vpop.f32.mrf.mxu0
    %v337 = vadd.f32 0.0, %v336
    %v338 = vpop.f32.mrf.mxu0
    %339 = vdwg.mxu0
    %340 = vrot.lane.b32.xlu0 %v251, 96
    %v341 = vpop.permute.xlu0 %340
    %v342 = vsel %vm265, %v251, 0
    %v344 = vsel %vm265, %v341, 0
    %346 = vmatprep.subr.mxu0 0.0
    %347 = vmatpush1.xpose.msra.mxu0 0.0
    %348 = vmatprep.subr.mxu0 0.0
    %349 = vmatpush1.xpose.msra.mxu0 0.0
    %350 = vmatprep.subr.mxu0 0.0
    %351 = vmatpush1.xpose.msra.mxu0 0.0
    %352 = vmatprep.subr.mxu0 0.0
    %353 = vmatpush1.xpose.msra.mxu0 0.0
    %354 = vmatprep.subr.mxu0 0.0
    %355 = vmatpush1.xpose.msra.mxu0 0.0
    %356 = vmatprep.subr.mxu0 0.0
    %357 = vmatpush1.xpose.msra.mxu0 0.0
    %358 = vmatprep.subr.mxu0 0.0
    %359 = vmatpush1.xpose.msra.mxu0 0.0
    %360 = vmatprep.subr.mxu0 0.0
    %361 = vmatpush1.xpose.msra.mxu0 0.0
    %362 = vmatprep.subr.mxu0 0.0
    %363 = vmatpush1.xpose.msra.mxu0 0.0
    %364 = vmatprep.subr.mxu0 0.0
    %365 = vmatpush1.xpose.msra.mxu0 0.0
    %366 = vmatprep.subr.mxu0 0.0
    %367 = vmatpush1.xpose.msra.mxu0 0.0
    %368 = vmatprep.subr.mxu0 0.0
    %369 = vmatpush1.xpose.msra.mxu0 0.0
    %370 = vmatprep.subr.mxu0 0.0
    %371 = vmatpush1.xpose.msra.mxu0 0.0
    %372 = vmatprep.subr.mxu0 0.0
    %373 = vmatpush1.xpose.msra.mxu0 0.0
    %374 = vmatprep.subr.mxu0 0.0
    %375 = vmatpush1.xpose.msra.mxu0 0.0
    %376 = vmatprep.subr.mxu0 0.0
    %377 = vmatpush1.xpose.msra.mxu0 %v344
    %378 = vmatprep.subr.mxu0 0.0
    %379 = vmatpush2.xpose.msra.mxu0 0.0
    %380 = vmatprep.subr.mxu0 0.0
    %381 = vmatpush2.xpose.msra.mxu0 0.0
    %382 = vmatprep.subr.mxu0 0.0
    %383 = vmatpush2.xpose.msra.mxu0 0.0
    %384 = vmatprep.subr.mxu0 0.0
    %385 = vmatpush2.xpose.msra.mxu0 0.0
    %386 = vmatprep.subr.mxu0 0.0
    %387 = vmatpush2.xpose.msra.mxu0 0.0
    %388 = vmatprep.subr.mxu0 0.0
    %389 = vmatpush2.xpose.msra.mxu0 0.0
    %390 = vmatprep.subr.mxu0 0.0
    %391 = vmatpush2.xpose.msra.mxu0 0.0
    %392 = vmatprep.subr.mxu0 0.0
    %393 = vmatpush2.xpose.msra.mxu0 0.0
    %394 = vmatprep.subr.mxu0 0.0
    %395 = vmatpush2.xpose.msra.mxu0 0.0
    %396 = vmatprep.subr.mxu0 0.0
    %397 = vmatpush2.xpose.msra.mxu0 0.0
    %398 = vmatprep.subr.mxu0 0.0
    %399 = vmatpush2.xpose.msra.mxu0 0.0
    %400 = vmatprep.subr.mxu0 0.0
    %401 = vmatpush2.xpose.msra.mxu0 0.0
    %402 = vmatprep.subr.mxu0 0.0
    %403 = vmatpush2.xpose.msra.mxu0 0.0
    %404 = vmatprep.subr.mxu0 0.0
    %405 = vmatpush2.xpose.msra.mxu0 0.0
    %406 = vmatprep.subr.mxu0 0.0
    %407 = vmatpush2.xpose.msra.mxu0 0.0
    %408 = vmatprep.subr.mxu0 0.0
    %409 = vmatpush2.xpose.msra.mxu0 0.0
    %410 = vmatprep.mubr.f32.mxu0 0.0
    %411 = vmatmul.mubr.f32.gmra.mxu0 %v342
    %v412 = vpop.f32.mrf.mxu0
    %v413 = vadd.f32 0.0, %v412
    %v414 = vpop.f32.mrf.mxu0
    %415 = vdwg.mxu0
    %416 = vrot.lane.b32.xlu0 %v253, 96
    %v417 = vpop.permute.xlu0 %416
    %v418 = vsel %vm265, %v253, 0
    %v420 = vsel %vm265, %v417, 0
    %422 = vmatprep.subr.mxu0 0.0
    %423 = vmatpush1.xpose.msra.mxu0 0.0
    %424 = vmatprep.subr.mxu0 0.0
    %425 = vmatpush1.xpose.msra.mxu0 0.0
    %426 = vmatprep.subr.mxu0 0.0
    %427 = vmatpush1.xpose.msra.mxu0 0.0
    %428 = vmatprep.subr.mxu0 0.0
    %429 = vmatpush1.xpose.msra.mxu0 0.0
    %430 = vmatprep.subr.mxu0 0.0
    %431 = vmatpush1.xpose.msra.mxu0 0.0
    %432 = vmatprep.subr.mxu0 0.0
    %433 = vmatpush1.xpose.msra.mxu0 0.0
    %434 = vmatprep.subr.mxu0 0.0
    %435 = vmatpush1.xpose.msra.mxu0 0.0
    %436 = vmatprep.subr.mxu0 0.0
    %437 = vmatpush1.xpose.msra.mxu0 0.0
    %438 = vmatprep.subr.mxu0 0.0
    %439 = vmatpush1.xpose.msra.mxu0 0.0
    %440 = vmatprep.subr.mxu0 0.0
    %441 = vmatpush1.xpose.msra.mxu0 0.0
    %442 = vmatprep.subr.mxu0 0.0
    %443 = vmatpush1.xpose.msra.mxu0 0.0
    %444 = vmatprep.subr.mxu0 0.0
    %445 = vmatpush1.xpose.msra.mxu0 0.0
    %446 = vmatprep.subr.mxu0 0.0
    %447 = vmatpush1.xpose.msra.mxu0 0.0
    %448 = vmatprep.subr.mxu0 0.0
    %449 = vmatpush1.xpose.msra.mxu0 0.0
    %450 = vmatprep.subr.mxu0 0.0
    %451 = vmatpush1.xpose.msra.mxu0 0.0
    %452 = vmatprep.subr.mxu0 0.0
    %453 = vmatpush1.xpose.msra.mxu0 %v420
    %454 = vmatprep.subr.mxu0 0.0
    %455 = vmatpush2.xpose.msra.mxu0 0.0
    %456 = vmatprep.subr.mxu0 0.0
    %457 = vmatpush2.xpose.msra.mxu0 0.0
    %458 = vmatprep.subr.mxu0 0.0
    %459 = vmatpush2.xpose.msra.mxu0 0.0
    %460 = vmatprep.subr.mxu0 0.0
    %461 = vmatpush2.xpose.msra.mxu0 0.0
    %462 = vmatprep.subr.mxu0 0.0
    %463 = vmatpush2.xpose.msra.mxu0 0.0
    %464 = vmatprep.subr.mxu0 0.0
    %465 = vmatpush2.xpose.msra.mxu0 0.0
    %466 = vmatprep.subr.mxu0 0.0
    %467 = vmatpush2.xpose.msra.mxu0 0.0
    %468 = vmatprep.subr.mxu0 0.0
    %469 = vmatpush2.xpose.msra.mxu0 0.0
    %470 = vmatprep.subr.mxu0 0.0
    %471 = vmatpush2.xpose.msra.mxu0 0.0
    %472 = vmatprep.subr.mxu0 0.0
    %473 = vmatpush2.xpose.msra.mxu0 0.0
    %474 = vmatprep.subr.mxu0 0.0
    %475 = vmatpush2.xpose.msra.mxu0 0.0
    %476 = vmatprep.subr.mxu0 0.0
    %477 = vmatpush2.xpose.msra.mxu0 0.0
    %478 = vmatprep.subr.mxu0 0.0
    %479 = vmatpush2.xpose.msra.mxu0 0.0
    %480 = vmatprep.subr.mxu0 0.0
    %481 = vmatpush2.xpose.msra.mxu0 0.0
    %482 = vmatprep.subr.mxu0 0.0
    %483 = vmatpush2.xpose.msra.mxu0 0.0
    %484 = vmatprep.subr.mxu0 0.0
    %485 = vmatpush2.xpose.msra.mxu0 0.0
    %486 = vmatprep.mubr.f32.mxu0 0.0
    %487 = vmatmul.mubr.f32.gmra.mxu0 %v418
    %v488 = vpop.f32.mrf.mxu0
    %v489 = vadd.f32 0.0, %v488
    %v490 = vpop.f32.mrf.mxu0
    %491 = vdwg.mxu0
    %492 = vrot.lane.b32.xlu0 %v255, 96
    %v493 = vpop.permute.xlu0 %492
    %v494 = vsel %vm265, %v255, 0
    %v496 = vsel %vm265, %v493, 0
    %498 = vmatprep.subr.mxu0 0.0
    %499 = vmatpush1.xpose.msra.mxu0 0.0
    %500 = vmatprep.subr.mxu0 0.0
    %501 = vmatpush1.xpose.msra.mxu0 0.0
    %502 = vmatprep.subr.mxu0 0.0
    %503 = vmatpush1.xpose.msra.mxu0 0.0
    %504 = vmatprep.subr.mxu0 0.0
    %505 = vmatpush1.xpose.msra.mxu0 0.0
    %506 = vmatprep.subr.mxu0 0.0
    %507 = vmatpush1.xpose.msra.mxu0 0.0
    %508 = vmatprep.subr.mxu0 0.0
    %509 = vmatpush1.xpose.msra.mxu0 0.0
    %510 = vmatprep.subr.mxu0 0.0
    %511 = vmatpush1.xpose.msra.mxu0 0.0
    %512 = vmatprep.subr.mxu0 0.0
    %513 = vmatpush1.xpose.msra.mxu0 0.0
    %514 = vmatprep.subr.mxu0 0.0
    %515 = vmatpush1.xpose.msra.mxu0 0.0
    %516 = vmatprep.subr.mxu0 0.0
    %517 = vmatpush1.xpose.msra.mxu0 0.0
    %518 = vmatprep.subr.mxu0 0.0
    %519 = vmatpush1.xpose.msra.mxu0 0.0
    %520 = vmatprep.subr.mxu0 0.0
    %521 = vmatpush1.xpose.msra.mxu0 0.0
    %522 = vmatprep.subr.mxu0 0.0
    %523 = vmatpush1.xpose.msra.mxu0 0.0
    %524 = vmatprep.subr.mxu0 0.0
    %525 = vmatpush1.xpose.msra.mxu0 0.0
    %526 = vmatprep.subr.mxu0 0.0
    %527 = vmatpush1.xpose.msra.mxu0 0.0
    %528 = vmatprep.subr.mxu0 0.0
    %529 = vmatpush1.xpose.msra.mxu0 %v496
    %530 = vmatprep.subr.mxu0 0.0
    %531 = vmatpush2.xpose.msra.mxu0 0.0
    %532 = vmatprep.subr.mxu0 0.0
    %533 = vmatpush2.xpose.msra.mxu0 0.0
    %534 = vmatprep.subr.mxu0 0.0
    %535 = vmatpush2.xpose.msra.mxu0 0.0
    %536 = vmatprep.subr.mxu0 0.0
    %537 = vmatpush2.xpose.msra.mxu0 0.0
    %538 = vmatprep.subr.mxu0 0.0
    %539 = vmatpush2.xpose.msra.mxu0 0.0
    %540 = vmatprep.subr.mxu0 0.0
    %541 = vmatpush2.xpose.msra.mxu0 0.0
    %542 = vmatprep.subr.mxu0 0.0
    %543 = vmatpush2.xpose.msra.mxu0 0.0
    %544 = vmatprep.subr.mxu0 0.0
    %545 = vmatpush2.xpose.msra.mxu0 0.0
    %546 = vmatprep.subr.mxu0 0.0
    %547 = vmatpush2.xpose.msra.mxu0 0.0
    %548 = vmatprep.subr.mxu0 0.0
    %549 = vmatpush2.xpose.msra.mxu0 0.0
    %550 = vmatprep.subr.mxu0 0.0
    %551 = vmatpush2.xpose.msra.mxu0 0.0
    %552 = vmatprep.subr.mxu0 0.0
    %553 = vmatpush2.xpose.msra.mxu0 0.0
    %554 = vmatprep.subr.mxu0 0.0
    %555 = vmatpush2.xpose.msra.mxu0 0.0
    %556 = vmatprep.subr.mxu0 0.0
    %557 = vmatpush2.xpose.msra.mxu0 0.0
    %558 = vmatprep.subr.mxu0 0.0
    %559 = vmatpush2.xpose.msra.mxu0 0.0
    %560 = vmatprep.subr.mxu0 0.0
    %561 = vmatpush2.xpose.msra.mxu0 0.0
    %562 = vmatprep.mubr.f32.mxu0 0.0
    %563 = vmatmul.mubr.f32.gmra.mxu0 %v494
    %v564 = vpop.f32.mrf.mxu0
    %v565 = vadd.f32 0.0, %v564
    %v566 = vpop.f32.mrf.mxu0
    %567 = vdwg.mxu0
    %568 = vrot.lane.b32.xlu0 %v246, 96
    %v569 = vpop.permute.xlu0 %568
    %v570 = vsel %vm265, %v246, 0
    %v572 = vsel %vm265, %v569, 0
    %574 = vmatprep.subr.mxu0 0.0
    %575 = vmatpush1.xpose.msra.mxu0 0.0
    %576 = vmatprep.subr.mxu0 0.0
    %577 = vmatpush1.xpose.msra.mxu0 0.0
    %578 = vmatprep.subr.mxu0 0.0
    %579 = vmatpush1.xpose.msra.mxu0 0.0
    %580 = vmatprep.subr.mxu0 0.0
    %581 = vmatpush1.xpose.msra.mxu0 0.0
    %582 = vmatprep.subr.mxu0 0.0
    %583 = vmatpush1.xpose.msra.mxu0 0.0
    %584 = vmatprep.subr.mxu0 0.0
    %585 = vmatpush1.xpose.msra.mxu0 0.0
    %586 = vmatprep.subr.mxu0 0.0
    %587 = vmatpush1.xpose.msra.mxu0 0.0
    %588 = vmatprep.subr.mxu0 0.0
    %589 = vmatpush1.xpose.msra.mxu0 0.0
    %590 = vmatprep.subr.mxu0 0.0
    %591 = vmatpush1.xpose.msra.mxu0 0.0
    %592 = vmatprep.subr.mxu0 0.0
    %593 = vmatpush1.xpose.msra.mxu0 0.0
    %594 = vmatprep.subr.mxu0 0.0
    %595 = vmatpush1.xpose.msra.mxu0 0.0
    %596 = vmatprep.subr.mxu0 0.0
    %597 = vmatpush1.xpose.msra.mxu0 0.0
    %598 = vmatprep.subr.mxu0 0.0
    %599 = vmatpush1.xpose.msra.mxu0 0.0
    %600 = vmatprep.subr.mxu0 0.0
    %601 = vmatpush1.xpose.msra.mxu0 0.0
    %602 = vmatprep.subr.mxu0 0.0
    %603 = vmatpush1.xpose.msra.mxu0 0.0
    %604 = vmatprep.subr.mxu0 0.0
    %605 = vmatpush1.xpose.msra.mxu0 %v572
    %606 = vmatprep.subr.mxu0 0.0
    %607 = vmatpush2.xpose.msra.mxu0 0.0
    %608 = vmatprep.subr.mxu0 0.0
    %609 = vmatpush2.xpose.msra.mxu0 0.0
    %610 = vmatprep.subr.mxu0 0.0
    %611 = vmatpush2.xpose.msra.mxu0 0.0
    %612 = vmatprep.subr.mxu0 0.0
    %613 = vmatpush2.xpose.msra.mxu0 0.0
    %614 = vmatprep.subr.mxu0 0.0
    %615 = vmatpush2.xpose.msra.mxu0 0.0
    %616 = vmatprep.subr.mxu0 0.0
    %617 = vmatpush2.xpose.msra.mxu0 0.0
    %618 = vmatprep.subr.mxu0 0.0
    %619 = vmatpush2.xpose.msra.mxu0 0.0
    %620 = vmatprep.subr.mxu0 0.0
    %621 = vmatpush2.xpose.msra.mxu0 0.0
    %622 = vmatprep.subr.mxu0 0.0
    %623 = vmatpush2.xpose.msra.mxu0 0.0
    %624 = vmatprep.subr.mxu0 0.0
    %625 = vmatpush2.xpose.msra.mxu0 0.0
    %626 = vmatprep.subr.mxu0 0.0
    %627 = vmatpush2.xpose.msra.mxu0 0.0
    %628 = vmatprep.subr.mxu0 0.0
    %629 = vmatpush2.xpose.msra.mxu0 0.0
    %630 = vmatprep.subr.mxu0 0.0
    %631 = vmatpush2.xpose.msra.mxu0 0.0
    %632 = vmatprep.subr.mxu0 0.0
    %633 = vmatpush2.xpose.msra.mxu0 0.0
    %634 = vmatprep.subr.mxu0 0.0
    %635 = vmatpush2.xpose.msra.mxu0 0.0
    %636 = vmatprep.subr.mxu0 0.0
    %637 = vmatpush2.xpose.msra.mxu0 0.0
    %638 = vmatprep.mubr.f32.mxu0 0.0
    %639 = vmatmul.mubr.f32.gmra.mxu0 %v570
    %v640 = vpop.f32.mrf.mxu0
    %v641 = vadd.f32 0.0, %v640
    %v642 = vpop.f32.mrf.mxu0
    %643 = vdwg.mxu0
    %644 = vrot.lane.b32.xlu0 %v258, 96
    %v645 = vpop.permute.xlu0 %644
    %v646 = vsel %vm265, %v258, 0
    %v648 = vsel %vm265, %v645, 0
    %650 = vmatprep.subr.mxu0 0.0
    %651 = vmatpush1.xpose.msra.mxu0 0.0
    %652 = vmatprep.subr.mxu0 0.0
    %653 = vmatpush1.xpose.msra.mxu0 0.0
    %654 = vmatprep.subr.mxu0 0.0
    %655 = vmatpush1.xpose.msra.mxu0 0.0
    %656 = vmatprep.subr.mxu0 0.0
    %657 = vmatpush1.xpose.msra.mxu0 0.0
    %658 = vmatprep.subr.mxu0 0.0
    %659 = vmatpush1.xpose.msra.mxu0 0.0
    %660 = vmatprep.subr.mxu0 0.0
    %661 = vmatpush1.xpose.msra.mxu0 0.0
    %662 = vmatprep.subr.mxu0 0.0
    %663 = vmatpush1.xpose.msra.mxu0 0.0
    %664 = vmatprep.subr.mxu0 0.0
    %665 = vmatpush1.xpose.msra.mxu0 0.0
    %666 = vmatprep.subr.mxu0 0.0
    %667 = vmatpush1.xpose.msra.mxu0 0.0
    %668 = vmatprep.subr.mxu0 0.0
    %669 = vmatpush1.xpose.msra.mxu0 0.0
    %670 = vmatprep.subr.mxu0 0.0
    %671 = vmatpush1.xpose.msra.mxu0 0.0
    %672 = vmatprep.subr.mxu0 0.0
    %673 = vmatpush1.xpose.msra.mxu0 0.0
    %674 = vmatprep.subr.mxu0 0.0
    %675 = vmatpush1.xpose.msra.mxu0 0.0
    %676 = vmatprep.subr.mxu0 0.0
    %677 = vmatpush1.xpose.msra.mxu0 0.0
    %678 = vmatprep.subr.mxu0 0.0
    %679 = vmatpush1.xpose.msra.mxu0 0.0
    %680 = vmatprep.subr.mxu0 0.0
    %681 = vmatpush1.xpose.msra.mxu0 %v648
    %682 = vmatprep.subr.mxu0 0.0
    %683 = vmatpush2.xpose.msra.mxu0 0.0
    %684 = vmatprep.subr.mxu0 0.0
    %685 = vmatpush2.xpose.msra.mxu0 0.0
    %686 = vmatprep.subr.mxu0 0.0
    %687 = vmatpush2.xpose.msra.mxu0 0.0
    %688 = vmatprep.subr.mxu0 0.0
    %689 = vmatpush2.xpose.msra.mxu0 0.0
    %690 = vmatprep.subr.mxu0 0.0
    %691 = vmatpush2.xpose.msra.mxu0 0.0
    %692 = vmatprep.subr.mxu0 0.0
    %693 = vmatpush2.xpose.msra.mxu0 0.0
    %694 = vmatprep.subr.mxu0 0.0
    %695 = vmatpush2.xpose.msra.mxu0 0.0
    %696 = vmatprep.subr.mxu0 0.0
    %697 = vmatpush2.xpose.msra.mxu0 0.0
    %698 = vmatprep.subr.mxu0 0.0
    %699 = vmatpush2.xpose.msra.mxu0 0.0
    %700 = vmatprep.subr.mxu0 0.0
    %701 = vmatpush2.xpose.msra.mxu0 0.0
    %702 = vmatprep.subr.mxu0 0.0
    %703 = vmatpush2.xpose.msra.mxu0 0.0
    %704 = vmatprep.subr.mxu0 0.0
    %705 = vmatpush2.xpose.msra.mxu0 0.0
    %706 = vmatprep.subr.mxu0 0.0
    %707 = vmatpush2.xpose.msra.mxu0 0.0
    %708 = vmatprep.subr.mxu0 0.0
    %709 = vmatpush2.xpose.msra.mxu0 0.0
    %710 = vmatprep.subr.mxu0 0.0
    %711 = vmatpush2.xpose.msra.mxu0 0.0
    %712 = vmatprep.subr.mxu0 0.0
    %713 = vmatpush2.xpose.msra.mxu0 0.0
    %714 = vmatprep.mubr.f32.mxu0 0.0
    %715 = vmatmul.mubr.f32.gmra.mxu0 %v646
    %v716 = vpop.f32.mrf.mxu0
    %v717 = vadd.f32 0.0, %v716
    %v718 = vpop.f32.mrf.mxu0
    %719 = vdwg.mxu0
    %720 = vrot.lane.b32.xlu0 %v260, 96
    %v721 = vpop.permute.xlu0 %720
    %v722 = vsel %vm265, %v260, 0
    %v724 = vsel %vm265, %v721, 0
    %726 = vmatprep.subr.mxu0 0.0
    %727 = vmatpush1.xpose.msra.mxu0 0.0
    %728 = vmatprep.subr.mxu0 0.0
    %729 = vmatpush1.xpose.msra.mxu0 0.0
    %730 = vmatprep.subr.mxu0 0.0
    %731 = vmatpush1.xpose.msra.mxu0 0.0
    %732 = vmatprep.subr.mxu0 0.0
    %733 = vmatpush1.xpose.msra.mxu0 0.0
    %734 = vmatprep.subr.mxu0 0.0
    %735 = vmatpush1.xpose.msra.mxu0 0.0
    %736 = vmatprep.subr.mxu0 0.0
    %737 = vmatpush1.xpose.msra.mxu0 0.0
    %738 = vmatprep.subr.mxu0 0.0
    %739 = vmatpush1.xpose.msra.mxu0 0.0
    %740 = vmatprep.subr.mxu0 0.0
    %741 = vmatpush1.xpose.msra.mxu0 0.0
    %742 = vmatprep.subr.mxu0 0.0
    %743 = vmatpush1.xpose.msra.mxu0 0.0
    %744 = vmatprep.subr.mxu0 0.0
    %745 = vmatpush1.xpose.msra.mxu0 0.0
    %746 = vmatprep.subr.mxu0 0.0
    %747 = vmatpush1.xpose.msra.mxu0 0.0
    %748 = vmatprep.subr.mxu0 0.0
    %749 = vmatpush1.xpose.msra.mxu0 0.0
    %750 = vmatprep.subr.mxu0 0.0
    %751 = vmatpush1.xpose.msra.mxu0 0.0
    %752 = vmatprep.subr.mxu0 0.0
    %753 = vmatpush1.xpose.msra.mxu0 0.0
    %754 = vmatprep.subr.mxu0 0.0
    %755 = vmatpush1.xpose.msra.mxu0 0.0
    %756 = vmatprep.subr.mxu0 0.0
    %757 = vmatpush1.xpose.msra.mxu0 %v724
    %758 = vmatprep.subr.mxu0 0.0
    %759 = vmatpush2.xpose.msra.mxu0 0.0
    %760 = vmatprep.subr.mxu0 0.0
    %761 = vmatpush2.xpose.msra.mxu0 0.0
    %762 = vmatprep.subr.mxu0 0.0
    %763 = vmatpush2.xpose.msra.mxu0 0.0
    %764 = vmatprep.subr.mxu0 0.0
    %765 = vmatpush2.xpose.msra.mxu0 0.0
    %766 = vmatprep.subr.mxu0 0.0
    %767 = vmatpush2.xpose.msra.mxu0 0.0
    %768 = vmatprep.subr.mxu0 0.0
    %769 = vmatpush2.xpose.msra.mxu0 0.0
    %770 = vmatprep.subr.mxu0 0.0
    %771 = vmatpush2.xpose.msra.mxu0 0.0
    %772 = vmatprep.subr.mxu0 0.0
    %773 = vmatpush2.xpose.msra.mxu0 0.0
    %774 = vmatprep.subr.mxu0 0.0
    %775 = vmatpush2.xpose.msra.mxu0 0.0
    %776 = vmatprep.subr.mxu0 0.0
    %777 = vmatpush2.xpose.msra.mxu0 0.0
    %778 = vmatprep.subr.mxu0 0.0
    %779 = vmatpush2.xpose.msra.mxu0 0.0
    %780 = vmatprep.subr.mxu0 0.0
    %781 = vmatpush2.xpose.msra.mxu0 0.0
    %782 = vmatprep.subr.mxu0 0.0
    %783 = vmatpush2.xpose.msra.mxu0 0.0
    %784 = vmatprep.subr.mxu0 0.0
    %785 = vmatpush2.xpose.msra.mxu0 0.0
    %786 = vmatprep.subr.mxu0 0.0
    %787 = vmatpush2.xpose.msra.mxu0 0.0
    %788 = vmatprep.subr.mxu0 0.0
    %789 = vmatpush2.xpose.msra.mxu0 0.0
    %790 = vmatprep.mubr.f32.mxu0 0.0
    %791 = vmatmul.mubr.f32.gmra.mxu0 %v722
    %v792 = vpop.f32.mrf.mxu0
    %v793 = vadd.f32 0.0, %v792
    %v794 = vpop.f32.mrf.mxu0
    %795 = vdwg.mxu0
    %796 = vrot.lane.b32.xlu0 %v262, 96
    %v797 = vpop.permute.xlu0 %796
    %v798 = vsel %vm265, %v262, 0
    %v800 = vsel %vm265, %v797, 0
    %802 = vmatprep.subr.mxu0 0.0
    %803 = vmatpush1.xpose.msra.mxu0 0.0
    %804 = vmatprep.subr.mxu0 0.0
    %805 = vmatpush1.xpose.msra.mxu0 0.0
    %806 = vmatprep.subr.mxu0 0.0
    %807 = vmatpush1.xpose.msra.mxu0 0.0
    %808 = vmatprep.subr.mxu0 0.0
    %809 = vmatpush1.xpose.msra.mxu0 0.0
    %810 = vmatprep.subr.mxu0 0.0
    %811 = vmatpush1.xpose.msra.mxu0 0.0
    %812 = vmatprep.subr.mxu0 0.0
    %813 = vmatpush1.xpose.msra.mxu0 0.0
    %814 = vmatprep.subr.mxu0 0.0
    %815 = vmatpush1.xpose.msra.mxu0 0.0
    %816 = vmatprep.subr.mxu0 0.0
    %817 = vmatpush1.xpose.msra.mxu0 0.0
    %818 = vmatprep.subr.mxu0 0.0
    %819 = vmatpush1.xpose.msra.mxu0 0.0
    %820 = vmatprep.subr.mxu0 0.0
    %821 = vmatpush1.xpose.msra.mxu0 0.0
    %822 = vmatprep.subr.mxu0 0.0
    %823 = vmatpush1.xpose.msra.mxu0 0.0
    %824 = vmatprep.subr.mxu0 0.0
    %825 = vmatpush1.xpose.msra.mxu0 0.0
    %826 = vmatprep.subr.mxu0 0.0
    %827 = vmatpush1.xpose.msra.mxu0 0.0
    %828 = vmatprep.subr.mxu0 0.0
    %829 = vmatpush1.xpose.msra.mxu0 0.0
    %830 = vmatprep.subr.mxu0 0.0
    %831 = vmatpush1.xpose.msra.mxu0 0.0
    %832 = vmatprep.subr.mxu0 0.0
    %833 = vmatpush1.xpose.msra.mxu0 %v800
    %834 = vmatprep.subr.mxu0 0.0
    %835 = vmatpush2.xpose.msra.mxu0 0.0
    %836 = vmatprep.subr.mxu0 0.0
    %837 = vmatpush2.xpose.msra.mxu0 0.0
    %838 = vmatprep.subr.mxu0 0.0
    %839 = vmatpush2.xpose.msra.mxu0 0.0
    %840 = vmatprep.subr.mxu0 0.0
    %841 = vmatpush2.xpose.msra.mxu0 0.0
    %842 = vmatprep.subr.mxu0 0.0
    %843 = vmatpush2.xpose.msra.mxu0 0.0
    %844 = vmatprep.subr.mxu0 0.0
    %845 = vmatpush2.xpose.msra.mxu0 0.0
    %846 = vmatprep.subr.mxu0 0.0
    %847 = vmatpush2.xpose.msra.mxu0 0.0
    %848 = vmatprep.subr.mxu0 0.0
    %849 = vmatpush2.xpose.msra.mxu0 0.0
    %850 = vmatprep.subr.mxu0 0.0
    %851 = vmatpush2.xpose.msra.mxu0 0.0
    %852 = vmatprep.subr.mxu0 0.0
    %853 = vmatpush2.xpose.msra.mxu0 0.0
    %854 = vmatprep.subr.mxu0 0.0
    %855 = vmatpush2.xpose.msra.mxu0 0.0
    %856 = vmatprep.subr.mxu0 0.0
    %857 = vmatpush2.xpose.msra.mxu0 0.0
    %858 = vmatprep.subr.mxu0 0.0
    %859 = vmatpush2.xpose.msra.mxu0 0.0
    %860 = vmatprep.subr.mxu0 0.0
    %861 = vmatpush2.xpose.msra.mxu0 0.0
    %862 = vmatprep.subr.mxu0 0.0
    %863 = vmatpush2.xpose.msra.mxu0 0.0
    %864 = vmatprep.subr.mxu0 0.0
    %865 = vmatpush2.xpose.msra.mxu0 0.0
    %866 = vmatprep.mubr.f32.mxu0 0.0
    %867 = vmatmul.mubr.f32.gmra.mxu0 %v798
    %v868 = vpop.f32.mrf.mxu0
    %v869 = vadd.f32 0.0, %v868
    %v870 = vpop.f32.mrf.mxu0
    %871 = vdwg.mxu0
    %v872 = vmul.f32 %v337, 0.35355338
    %v873 = vmul.f32 %v413, 0.35355338
    %v874 = vmul.f32 %v489, 0.35355338
    %v875 = vmul.f32 %v565, 0.35355338
    %v876 = vmul.f32 %v641, 0.35355338
    %v877 = vmul.f32 %v717, 0.35355338
    %v878 = vmul.f32 %v793, 0.35355338
    %v879 = vmul.f32 %v869, 0.35355338
    %v880 = vlaneseq
    %v881 = vshrl.u32 %v880, 7
    %v882 = vsub.s32 0, %v881
    %v883 = vrot.slane %v153, %v882
    %v884 = vlaneseq
    %v885 = vshrl.u32 %v884, 7
    %v886 = vsub.s32 0, %v885
    %v887 = vrot.slane %v155, %v886
    %v888 = vadd.f32 %v872, %v883
    %v889 = vadd.f32 %v873, %v883
    %v890 = vadd.f32 %v874, %v883
    %v891 = vadd.f32 %v875, %v883
    %v892 = vadd.f32 %v876, %v887
    %v893 = vadd.f32 %v877, %v887
    %v894 = vadd.f32 %v878, %v887
    %v895 = vadd.f32 %v879, %v887
    %v896 = vsel %vm265, %v888, -inf
    %897 = vmax.xlane.f32.xlu0 %v896
    %v898 = vpop.xlane.xlu0 %897
    %v899 = vsel %vm265, %v889, -inf
    %900 = vmax.xlane.f32.xlu0 %v899
    %v901 = vpop.xlane.xlu0 %900
    %v902 = vsel %vm265, %v890, -inf
    %903 = vmax.xlane.f32.xlu0 %v902
    %v904 = vpop.xlane.xlu0 %903
    %v905 = vsel %vm265, %v891, -inf
    %906 = vmax.xlane.f32.xlu0 %v905
    %v907 = vpop.xlane.xlu0 %906
    %v908 = vsel %vm265, %v892, -inf
    %909 = vmax.xlane.f32.xlu0 %v908
    %v910 = vpop.xlane.xlu0 %909
    %v911 = vsel %vm265, %v893, -inf
    %912 = vmax.xlane.f32.xlu0 %v911
    %v913 = vpop.xlane.xlu0 %912
    %v914 = vsel %vm265, %v894, -inf
    %915 = vmax.xlane.f32.xlu0 %v914
    %v916 = vpop.xlane.xlu0 %915
    %v917 = vsel %vm265, %v895, -inf
    %918 = vmax.xlane.f32.xlu0 %v917
    %v919 = vpop.xlane.xlu0 %918
    %v920 = vsub.f32 %v888, %v898
    %v921 = vsub.f32 %v889, %v901
    %v922 = vsub.f32 %v890, %v904
    %v923 = vsub.f32 %v891, %v907
    %v924 = vsub.f32 %v892, %v910
    %v925 = vsub.f32 %v893, %v913
    %v926 = vsub.f32 %v894, %v916
    %v927 = vsub.f32 %v895, %v919
    %v928 = vmul.f32 %v920, 1.442695
    %v929 = vpow.pop %v928
    %v930 = vmul.f32 %v921, 1.442695
    %v931 = vpow.pop %v930
    %v932 = vmul.f32 %v922, 1.442695
    %v933 = vpow.pop %v932
    %v934 = vmul.f32 %v923, 1.442695
    %v935 = vpow.pop %v934
    %v936 = vmul.f32 %v924, 1.442695
    %v937 = vpow.pop %v936
    %v938 = vmul.f32 %v925, 1.442695
    %v939 = vpow.pop %v938
    %v940 = vmul.f32 %v926, 1.442695
    %v941 = vpow.pop %v940
    %v942 = vmul.f32 %v927, 1.442695
    %v943 = vpow.pop %v942
    %v944 = vsel %vm265, %v929, 0.0
    %945 = vadd.xlane.f32.xlu0 %v944
    %v946 = vpop.xlane.xlu0 %945
    %v947 = vsel %vm265, %v931, 0.0
    %948 = vadd.xlane.f32.xlu0 %v947
    %v949 = vpop.xlane.xlu0 %948
    %v950 = vsel %vm265, %v933, 0.0
    %951 = vadd.xlane.f32.xlu0 %v950
    %v952 = vpop.xlane.xlu0 %951
    %v953 = vsel %vm265, %v935, 0.0
    %954 = vadd.xlane.f32.xlu0 %v953
    %v955 = vpop.xlane.xlu0 %954
    %v956 = vsel %vm265, %v937, 0.0
    %957 = vadd.xlane.f32.xlu0 %v956
    %v958 = vpop.xlane.xlu0 %957
    %v959 = vsel %vm265, %v939, 0.0
    %960 = vadd.xlane.f32.xlu0 %v959
    %v961 = vpop.xlane.xlu0 %960
    %v962 = vsel %vm265, %v941, 0.0
    %963 = vadd.xlane.f32.xlu0 %v962
    %v964 = vpop.xlane.xlu0 %963
    %v965 = vsel %vm265, %v943, 0.0
    %966 = vadd.xlane.f32.xlu0 %v965
    %v967 = vpop.xlane.xlu0 %966
    %v968 = vrcp.pop %v946
    %v969 = vrcp.pop %v949
    %v970 = vrcp.pop %v952
    %v971 = vrcp.pop %v955
    %v972 = vrcp.pop %v958
    %v973 = vrcp.pop %v961
    %v974 = vrcp.pop %v964
    %v975 = vrcp.pop %v967
    %v976 = vmul.f32 %v929, %v968
    %v977 = vmul.f32 %v931, %v969
    %v978 = vmul.f32 %v933, %v970
    %v979 = vmul.f32 %v935, %v971
    %v980 = vmul.f32 %v937, %v972
    %v981 = vmul.f32 %v939, %v973
    %v982 = vmul.f32 %v941, %v974
    %v983 = vmul.f32 %v943, %v975
    %984 = vrot.lane.b32.xlu0 %v241, 64
    %v985 = vpop.permute.xlu0 %984
    %v988 = vsel %vm265, %v976, 0
    %990 = vmatprep.subr.mxu0 0.0
    %991 = vmatpush1.msra.mxu0 0.0
    %992 = vmatprep.subr.mxu0 0.0
    %993 = vmatpush1.msra.mxu0 0.0
    %994 = vmatprep.subr.mxu0 0.0
    %995 = vmatpush1.msra.mxu0 0.0
    %996 = vmatprep.subr.mxu0 0.0
    %997 = vmatpush1.msra.mxu0 0.0
    %998 = vmatprep.subr.mxu0 0.0
    %999 = vmatpush1.msra.mxu0 0.0
    %1000 = vmatprep.subr.mxu0 0.0
    %1001 = vmatpush1.msra.mxu0 0.0
    %1002 = vmatprep.subr.mxu0 0.0
    %1003 = vmatpush1.msra.mxu0 0.0
    %1004 = vmatprep.subr.mxu0 0.0
    %1005 = vmatpush1.msra.mxu0 0.0
    %1006 = vmatprep.subr.mxu0 0.0
    %1007 = vmatpush1.msra.mxu0 0.0
    %1008 = vmatprep.subr.mxu0 0.0
    %1009 = vmatpush1.msra.mxu0 0.0
    %1010 = vmatprep.subr.mxu0 0.0
    %1011 = vmatpush1.msra.mxu0 0.0
    %1012 = vmatprep.subr.mxu0 0.0
    %1013 = vmatpush1.msra.mxu0 0.0
    %1014 = vmatprep.subr.mxu0 0.0
    %1015 = vmatpush1.msra.mxu0 0.0
    %1016 = vmatprep.subr.mxu0 0.0
    %1017 = vmatpush1.msra.mxu0 0.0
    %1018 = vmatprep.subr.mxu0 0.0
    %1019 = vmatpush1.msra.mxu0 0.0
    %1020 = vmatprep.subr.mxu0 0.0
    %1021 = vmatpush1.msra.mxu0 %v985
    %1022 = vmatprep.subr.mxu0 0.0
    %1023 = vmatpush2.msra.mxu0 0.0
    %1024 = vmatprep.subr.mxu0 0.0
    %1025 = vmatpush2.msra.mxu0 0.0
    %1026 = vmatprep.subr.mxu0 0.0
    %1027 = vmatpush2.msra.mxu0 0.0
    %1028 = vmatprep.subr.mxu0 0.0
    %1029 = vmatpush2.msra.mxu0 0.0
    %1030 = vmatprep.subr.mxu0 0.0
    %1031 = vmatpush2.msra.mxu0 0.0
    %1032 = vmatprep.subr.mxu0 0.0
    %1033 = vmatpush2.msra.mxu0 0.0
    %1034 = vmatprep.subr.mxu0 0.0
    %1035 = vmatpush2.msra.mxu0 0.0
    %1036 = vmatprep.subr.mxu0 0.0
    %1037 = vmatpush2.msra.mxu0 0.0
    %1038 = vmatprep.subr.mxu0 0.0
    %1039 = vmatpush2.msra.mxu0 0.0
    %1040 = vmatprep.subr.mxu0 0.0
    %1041 = vmatpush2.msra.mxu0 0.0
    %1042 = vmatprep.subr.mxu0 0.0
    %1043 = vmatpush2.msra.mxu0 0.0
    %1044 = vmatprep.subr.mxu0 0.0
    %1045 = vmatpush2.msra.mxu0 0.0
    %1046 = vmatprep.subr.mxu0 0.0
    %1047 = vmatpush2.msra.mxu0 0.0
    %1048 = vmatprep.subr.mxu0 0.0
    %1049 = vmatpush2.msra.mxu0 0.0
    %1050 = vmatprep.subr.mxu0 0.0
    %1051 = vmatpush2.msra.mxu0 0.0
    %1052 = vmatprep.subr.mxu0 0.0
    %1053 = vmatpush2.msra.mxu0 0.0
    %1054 = vmatprep.mubr.f32.mxu0 0.0
    %1055 = vmatmul.mubr.f32.gmra.mxu0 %v988
    %v1056 = vpop.f32.mrf.mxu0
    %v1057 = vadd.f32 0.0, %v1056
    %v1058 = vpop.f32.mrf.mxu0
    %1059 = vdwg.mxu0
    %1060 = vrot.lane.b32.xlu0 %v251, 64
    %v1061 = vpop.permute.xlu0 %1060
    %v1064 = vsel %vm265, %v977, 0
    %1066 = vmatprep.subr.mxu0 0.0
    %1067 = vmatpush1.msra.mxu0 0.0
    %1068 = vmatprep.subr.mxu0 0.0
    %1069 = vmatpush1.msra.mxu0 0.0
    %1070 = vmatprep.subr.mxu0 0.0
    %1071 = vmatpush1.msra.mxu0 0.0
    %1072 = vmatprep.subr.mxu0 0.0
    %1073 = vmatpush1.msra.mxu0 0.0
    %1074 = vmatprep.subr.mxu0 0.0
    %1075 = vmatpush1.msra.mxu0 0.0
    %1076 = vmatprep.subr.mxu0 0.0
    %1077 = vmatpush1.msra.mxu0 0.0
    %1078 = vmatprep.subr.mxu0 0.0
    %1079 = vmatpush1.msra.mxu0 0.0
    %1080 = vmatprep.subr.mxu0 0.0
    %1081 = vmatpush1.msra.mxu0 0.0
    %1082 = vmatprep.subr.mxu0 0.0
    %1083 = vmatpush1.msra.mxu0 0.0
    %1084 = vmatprep.subr.mxu0 0.0
    %1085 = vmatpush1.msra.mxu0 0.0
    %1086 = vmatprep.subr.mxu0 0.0
    %1087 = vmatpush1.msra.mxu0 0.0
    %1088 = vmatprep.subr.mxu0 0.0
    %1089 = vmatpush1.msra.mxu0 0.0
    %1090 = vmatprep.subr.mxu0 0.0
    %1091 = vmatpush1.msra.mxu0 0.0
    %1092 = vmatprep.subr.mxu0 0.0
    %1093 = vmatpush1.msra.mxu0 0.0
    %1094 = vmatprep.subr.mxu0 0.0
    %1095 = vmatpush1.msra.mxu0 0.0
    %1096 = vmatprep.subr.mxu0 0.0
    %1097 = vmatpush1.msra.mxu0 %v1061
    %1098 = vmatprep.subr.mxu0 0.0
    %1099 = vmatpush2.msra.mxu0 0.0
    %1100 = vmatprep.subr.mxu0 0.0
    %1101 = vmatpush2.msra.mxu0 0.0
    %1102 = vmatprep.subr.mxu0 0.0
    %1103 = vmatpush2.msra.mxu0 0.0
    %1104 = vmatprep.subr.mxu0 0.0
    %1105 = vmatpush2.msra.mxu0 0.0
    %1106 = vmatprep.subr.mxu0 0.0
    %1107 = vmatpush2.msra.mxu0 0.0
    %1108 = vmatprep.subr.mxu0 0.0
    %1109 = vmatpush2.msra.mxu0 0.0
    %1110 = vmatprep.subr.mxu0 0.0
    %1111 = vmatpush2.msra.mxu0 0.0
    %1112 = vmatprep.subr.mxu0 0.0
    %1113 = vmatpush2.msra.mxu0 0.0
    %1114 = vmatprep.subr.mxu0 0.0
    %1115 = vmatpush2.msra.mxu0 0.0
    %1116 = vmatprep.subr.mxu0 0.0
    %1117 = vmatpush2.msra.mxu0 0.0
    %1118 = vmatprep.subr.mxu0 0.0
    %1119 = vmatpush2.msra.mxu0 0.0
    %1120 = vmatprep.subr.mxu0 0.0
    %1121 = vmatpush2.msra.mxu0 0.0
    %1122 = vmatprep.subr.mxu0 0.0
    %1123 = vmatpush2.msra.mxu0 0.0
    %1124 = vmatprep.subr.mxu0 0.0
    %1125 = vmatpush2.msra.mxu0 0.0
    %1126 = vmatprep.subr.mxu0 0.0
    %1127 = vmatpush2.msra.mxu0 0.0
    %1128 = vmatprep.subr.mxu0 0.0
    %1129 = vmatpush2.msra.mxu0 0.0
    %1130 = vmatprep.mubr.f32.mxu0 0.0
    %1131 = vmatmul.mubr.f32.gmra.mxu0 %v1064
    %v1132 = vpop.f32.mrf.mxu0
    %v1133 = vadd.f32 0.0, %v1132
    %v1134 = vpop.f32.mrf.mxu0
    %1135 = vdwg.mxu0
    %1136 = vrot.lane.b32.xlu0 %v253, 64
    %v1137 = vpop.permute.xlu0 %1136
    %v1140 = vsel %vm265, %v978, 0
    %1142 = vmatprep.subr.mxu0 0.0
    %1143 = vmatpush1.msra.mxu0 0.0
    %1144 = vmatprep.subr.mxu0 0.0
    %1145 = vmatpush1.msra.mxu0 0.0
    %1146 = vmatprep.subr.mxu0 0.0
    %1147 = vmatpush1.msra.mxu0 0.0
    %1148 = vmatprep.subr.mxu0 0.0
    %1149 = vmatpush1.msra.mxu0 0.0
    %1150 = vmatprep.subr.mxu0 0.0
    %1151 = vmatpush1.msra.mxu0 0.0
    %1152 = vmatprep.subr.mxu0 0.0
    %1153 = vmatpush1.msra.mxu0 0.0
    %1154 = vmatprep.subr.mxu0 0.0
    %1155 = vmatpush1.msra.mxu0 0.0
    %1156 = vmatprep.subr.mxu0 0.0
    %1157 = vmatpush1.msra.mxu0 0.0
    %1158 = vmatprep.subr.mxu0 0.0
    %1159 = vmatpush1.msra.mxu0 0.0
    %1160 = vmatprep.subr.mxu0 0.0
    %1161 = vmatpush1.msra.mxu0 0.0
    %1162 = vmatprep.subr.mxu0 0.0
    %1163 = vmatpush1.msra.mxu0 0.0
    %1164 = vmatprep.subr.mxu0 0.0
    %1165 = vmatpush1.msra.mxu0 0.0
    %1166 = vmatprep.subr.mxu0 0.0
    %1167 = vmatpush1.msra.mxu0 0.0
    %1168 = vmatprep.subr.mxu0 0.0
    %1169 = vmatpush1.msra.mxu0 0.0
    %1170 = vmatprep.subr.mxu0 0.0
    %1171 = vmatpush1.msra.mxu0 0.0
    %1172 = vmatprep.subr.mxu0 0.0
    %1173 = vmatpush1.msra.mxu0 %v1137
    %1174 = vmatprep.subr.mxu0 0.0
    %1175 = vmatpush2.msra.mxu0 0.0
    %1176 = vmatprep.subr.mxu0 0.0
    %1177 = vmatpush2.msra.mxu0 0.0
    %1178 = vmatprep.subr.mxu0 0.0
    %1179 = vmatpush2.msra.mxu0 0.0
    %1180 = vmatprep.subr.mxu0 0.0
    %1181 = vmatpush2.msra.mxu0 0.0
    %1182 = vmatprep.subr.mxu0 0.0
    %1183 = vmatpush2.msra.mxu0 0.0
    %1184 = vmatprep.subr.mxu0 0.0
    %1185 = vmatpush2.msra.mxu0 0.0
    %1186 = vmatprep.subr.mxu0 0.0
    %1187 = vmatpush2.msra.mxu0 0.0
    %1188 = vmatprep.subr.mxu0 0.0
    %1189 = vmatpush2.msra.mxu0 0.0
    %1190 = vmatprep.subr.mxu0 0.0
    %1191 = vmatpush2.msra.mxu0 0.0
    %1192 = vmatprep.subr.mxu0 0.0
    %1193 = vmatpush2.msra.mxu0 0.0
    %1194 = vmatprep.subr.mxu0 0.0
    %1195 = vmatpush2.msra.mxu0 0.0
    %1196 = vmatprep.subr.mxu0 0.0
    %1197 = vmatpush2.msra.mxu0 0.0
    %1198 = vmatprep.subr.mxu0 0.0
    %1199 = vmatpush2.msra.mxu0 0.0
    %1200 = vmatprep.subr.mxu0 0.0
    %1201 = vmatpush2.msra.mxu0 0.0
    %1202 = vmatprep.subr.mxu0 0.0
    %1203 = vmatpush2.msra.mxu0 0.0
    %1204 = vmatprep.subr.mxu0 0.0
    %1205 = vmatpush2.msra.mxu0 0.0
    %1206 = vmatprep.mubr.f32.mxu0 0.0
    %1207 = vmatmul.mubr.f32.gmra.mxu0 %v1140
    %v1208 = vpop.f32.mrf.mxu0
    %v1209 = vadd.f32 0.0, %v1208
    %v1210 = vpop.f32.mrf.mxu0
    %1211 = vdwg.mxu0
    %1212 = vrot.lane.b32.xlu0 %v255, 64
    %v1213 = vpop.permute.xlu0 %1212
    %v1216 = vsel %vm265, %v979, 0
    %1218 = vmatprep.subr.mxu0 0.0
    %1219 = vmatpush1.msra.mxu0 0.0
    %1220 = vmatprep.subr.mxu0 0.0
    %1221 = vmatpush1.msra.mxu0 0.0
    %1222 = vmatprep.subr.mxu0 0.0
    %1223 = vmatpush1.msra.mxu0 0.0
    %1224 = vmatprep.subr.mxu0 0.0
    %1225 = vmatpush1.msra.mxu0 0.0
    %1226 = vmatprep.subr.mxu0 0.0
    %1227 = vmatpush1.msra.mxu0 0.0
    %1228 = vmatprep.subr.mxu0 0.0
    %1229 = vmatpush1.msra.mxu0 0.0
    %1230 = vmatprep.subr.mxu0 0.0
    %1231 = vmatpush1.msra.mxu0 0.0
    %1232 = vmatprep.subr.mxu0 0.0
    %1233 = vmatpush1.msra.mxu0 0.0
    %1234 = vmatprep.subr.mxu0 0.0
    %1235 = vmatpush1.msra.mxu0 0.0
    %1236 = vmatprep.subr.mxu0 0.0
    %1237 = vmatpush1.msra.mxu0 0.0
    %1238 = vmatprep.subr.mxu0 0.0
    %1239 = vmatpush1.msra.mxu0 0.0
    %1240 = vmatprep.subr.mxu0 0.0
    %1241 = vmatpush1.msra.mxu0 0.0
    %1242 = vmatprep.subr.mxu0 0.0
    %1243 = vmatpush1.msra.mxu0 0.0
    %1244 = vmatprep.subr.mxu0 0.0
    %1245 = vmatpush1.msra.mxu0 0.0
    %1246 = vmatprep.subr.mxu0 0.0
    %1247 = vmatpush1.msra.mxu0 0.0
    %1248 = vmatprep.subr.mxu0 0.0
    %1249 = vmatpush1.msra.mxu0 %v1213
    %1250 = vmatprep.subr.mxu0 0.0
    %1251 = vmatpush2.msra.mxu0 0.0
    %1252 = vmatprep.subr.mxu0 0.0
    %1253 = vmatpush2.msra.mxu0 0.0
    %1254 = vmatprep.subr.mxu0 0.0
    %1255 = vmatpush2.msra.mxu0 0.0
    %1256 = vmatprep.subr.mxu0 0.0
    %1257 = vmatpush2.msra.mxu0 0.0
    %1258 = vmatprep.subr.mxu0 0.0
    %1259 = vmatpush2.msra.mxu0 0.0
    %1260 = vmatprep.subr.mxu0 0.0
    %1261 = vmatpush2.msra.mxu0 0.0
    %1262 = vmatprep.subr.mxu0 0.0
    %1263 = vmatpush2.msra.mxu0 0.0
    %1264 = vmatprep.subr.mxu0 0.0
    %1265 = vmatpush2.msra.mxu0 0.0
    %1266 = vmatprep.subr.mxu0 0.0
    %1267 = vmatpush2.msra.mxu0 0.0
    %1268 = vmatprep.subr.mxu0 0.0
    %1269 = vmatpush2.msra.mxu0 0.0
    %1270 = vmatprep.subr.mxu0 0.0
    %1271 = vmatpush2.msra.mxu0 0.0
    %1272 = vmatprep.subr.mxu0 0.0
    %1273 = vmatpush2.msra.mxu0 0.0
    %1274 = vmatprep.subr.mxu0 0.0
    %1275 = vmatpush2.msra.mxu0 0.0
    %1276 = vmatprep.subr.mxu0 0.0
    %1277 = vmatpush2.msra.mxu0 0.0
    %1278 = vmatprep.subr.mxu0 0.0
    %1279 = vmatpush2.msra.mxu0 0.0
    %1280 = vmatprep.subr.mxu0 0.0
    %1281 = vmatpush2.msra.mxu0 0.0
    %1282 = vmatprep.mubr.f32.mxu0 0.0
    %1283 = vmatmul.mubr.f32.gmra.mxu0 %v1216
    %v1284 = vpop.f32.mrf.mxu0
    %v1285 = vadd.f32 0.0, %v1284
    %v1286 = vpop.f32.mrf.mxu0
    %1287 = vdwg.mxu0
    %1288 = vrot.lane.b32.xlu0 %v246, 64
    %v1289 = vpop.permute.xlu0 %1288
    %v1292 = vsel %vm265, %v980, 0
    %1294 = vmatprep.subr.mxu0 0.0
    %1295 = vmatpush1.msra.mxu0 0.0
    %1296 = vmatprep.subr.mxu0 0.0
    %1297 = vmatpush1.msra.mxu0 0.0
    %1298 = vmatprep.subr.mxu0 0.0
    %1299 = vmatpush1.msra.mxu0 0.0
    %1300 = vmatprep.subr.mxu0 0.0
    %1301 = vmatpush1.msra.mxu0 0.0
    %1302 = vmatprep.subr.mxu0 0.0
    %1303 = vmatpush1.msra.mxu0 0.0
    %1304 = vmatprep.subr.mxu0 0.0
    %1305 = vmatpush1.msra.mxu0 0.0
    %1306 = vmatprep.subr.mxu0 0.0
    %1307 = vmatpush1.msra.mxu0 0.0
    %1308 = vmatprep.subr.mxu0 0.0
    %1309 = vmatpush1.msra.mxu0 0.0
    %1310 = vmatprep.subr.mxu0 0.0
    %1311 = vmatpush1.msra.mxu0 0.0
    %1312 = vmatprep.subr.mxu0 0.0
    %1313 = vmatpush1.msra.mxu0 0.0
    %1314 = vmatprep.subr.mxu0 0.0
    %1315 = vmatpush1.msra.mxu0 0.0
    %1316 = vmatprep.subr.mxu0 0.0
    %1317 = vmatpush1.msra.mxu0 0.0
    %1318 = vmatprep.subr.mxu0 0.0
    %1319 = vmatpush1.msra.mxu0 0.0
    %1320 = vmatprep.subr.mxu0 0.0
    %1321 = vmatpush1.msra.mxu0 0.0
    %1322 = vmatprep.subr.mxu0 0.0
    %1323 = vmatpush1.msra.mxu0 0.0
    %1324 = vmatprep.subr.mxu0 0.0
    %1325 = vmatpush1.msra.mxu0 %v1289
    %1326 = vmatprep.subr.mxu0 0.0
    %1327 = vmatpush2.msra.mxu0 0.0
    %1328 = vmatprep.subr.mxu0 0.0
    %1329 = vmatpush2.msra.mxu0 0.0
    %1330 = vmatprep.subr.mxu0 0.0
    %1331 = vmatpush2.msra.mxu0 0.0
    %1332 = vmatprep.subr.mxu0 0.0
    %1333 = vmatpush2.msra.mxu0 0.0
    %1334 = vmatprep.subr.mxu0 0.0
    %1335 = vmatpush2.msra.mxu0 0.0
    %1336 = vmatprep.subr.mxu0 0.0
    %1337 = vmatpush2.msra.mxu0 0.0
    %1338 = vmatprep.subr.mxu0 0.0
    %1339 = vmatpush2.msra.mxu0 0.0
    %1340 = vmatprep.subr.mxu0 0.0
    %1341 = vmatpush2.msra.mxu0 0.0
    %1342 = vmatprep.subr.mxu0 0.0
    %1343 = vmatpush2.msra.mxu0 0.0
    %1344 = vmatprep.subr.mxu0 0.0
    %1345 = vmatpush2.msra.mxu0 0.0
    %1346 = vmatprep.subr.mxu0 0.0
    %1347 = vmatpush2.msra.mxu0 0.0
    %1348 = vmatprep.subr.mxu0 0.0
    %1349 = vmatpush2.msra.mxu0 0.0
    %1350 = vmatprep.subr.mxu0 0.0
    %1351 = vmatpush2.msra.mxu0 0.0
    %1352 = vmatprep.subr.mxu0 0.0
    %1353 = vmatpush2.msra.mxu0 0.0
    %1354 = vmatprep.subr.mxu0 0.0
    %1355 = vmatpush2.msra.mxu0 0.0
    %1356 = vmatprep.subr.mxu0 0.0
    %1357 = vmatpush2.msra.mxu0 0.0
    %1358 = vmatprep.mubr.f32.mxu0 0.0
    %1359 = vmatmul.mubr.f32.gmra.mxu0 %v1292
    %v1360 = vpop.f32.mrf.mxu0
    %v1361 = vadd.f32 0.0, %v1360
    %v1362 = vpop.f32.mrf.mxu0
    %1363 = vdwg.mxu0
    %1364 = vrot.lane.b32.xlu0 %v258, 64
    %v1365 = vpop.permute.xlu0 %1364
    %v1368 = vsel %vm265, %v981, 0
    %1370 = vmatprep.subr.mxu0 0.0
    %1371 = vmatpush1.msra.mxu0 0.0
    %1372 = vmatprep.subr.mxu0 0.0
    %1373 = vmatpush1.msra.mxu0 0.0
    %1374 = vmatprep.subr.mxu0 0.0
    %1375 = vmatpush1.msra.mxu0 0.0
    %1376 = vmatprep.subr.mxu0 0.0
    %1377 = vmatpush1.msra.mxu0 0.0
    %1378 = vmatprep.subr.mxu0 0.0
    %1379 = vmatpush1.msra.mxu0 0.0
    %1380 = vmatprep.subr.mxu0 0.0
    %1381 = vmatpush1.msra.mxu0 0.0
    %1382 = vmatprep.subr.mxu0 0.0
    %1383 = vmatpush1.msra.mxu0 0.0
    %1384 = vmatprep.subr.mxu0 0.0
    %1385 = vmatpush1.msra.mxu0 0.0
    %1386 = vmatprep.subr.mxu0 0.0
    %1387 = vmatpush1.msra.mxu0 0.0
    %1388 = vmatprep.subr.mxu0 0.0
    %1389 = vmatpush1.msra.mxu0 0.0
    %1390 = vmatprep.subr.mxu0 0.0
    %1391 = vmatpush1.msra.mxu0 0.0
    %1392 = vmatprep.subr.mxu0 0.0
    %1393 = vmatpush1.msra.mxu0 0.0
    %1394 = vmatprep.subr.mxu0 0.0
    %1395 = vmatpush1.msra.mxu0 0.0
    %1396 = vmatprep.subr.mxu0 0.0
    %1397 = vmatpush1.msra.mxu0 0.0
    %1398 = vmatprep.subr.mxu0 0.0
    %1399 = vmatpush1.msra.mxu0 0.0
    %1400 = vmatprep.subr.mxu0 0.0
    %1401 = vmatpush1.msra.mxu0 %v1365
    %1402 = vmatprep.subr.mxu0 0.0
    %1403 = vmatpush2.msra.mxu0 0.0
    %1404 = vmatprep.subr.mxu0 0.0
    %1405 = vmatpush2.msra.mxu0 0.0
    %1406 = vmatprep.subr.mxu0 0.0
    %1407 = vmatpush2.msra.mxu0 0.0
    %1408 = vmatprep.subr.mxu0 0.0
    %1409 = vmatpush2.msra.mxu0 0.0
    %1410 = vmatprep.subr.mxu0 0.0
    %1411 = vmatpush2.msra.mxu0 0.0
    %1412 = vmatprep.subr.mxu0 0.0
    %1413 = vmatpush2.msra.mxu0 0.0
    %1414 = vmatprep.subr.mxu0 0.0
    %1415 = vmatpush2.msra.mxu0 0.0
    %1416 = vmatprep.subr.mxu0 0.0
    %1417 = vmatpush2.msra.mxu0 0.0
    %1418 = vmatprep.subr.mxu0 0.0
    %1419 = vmatpush2.msra.mxu0 0.0
    %1420 = vmatprep.subr.mxu0 0.0
    %1421 = vmatpush2.msra.mxu0 0.0
    %1422 = vmatprep.subr.mxu0 0.0
    %1423 = vmatpush2.msra.mxu0 0.0
    %1424 = vmatprep.subr.mxu0 0.0
    %1425 = vmatpush2.msra.mxu0 0.0
    %1426 = vmatprep.subr.mxu0 0.0
    %1427 = vmatpush2.msra.mxu0 0.0
    %1428 = vmatprep.subr.mxu0 0.0
    %1429 = vmatpush2.msra.mxu0 0.0
    %1430 = vmatprep.subr.mxu0 0.0
    %1431 = vmatpush2.msra.mxu0 0.0
    %1432 = vmatprep.subr.mxu0 0.0
    %1433 = vmatpush2.msra.mxu0 0.0
    %1434 = vmatprep.mubr.f32.mxu0 0.0
    %1435 = vmatmul.mubr.f32.gmra.mxu0 %v1368
    %v1436 = vpop.f32.mrf.mxu0
    %v1437 = vadd.f32 0.0, %v1436
    %v1438 = vpop.f32.mrf.mxu0
    %1439 = vdwg.mxu0
    %1440 = vrot.lane.b32.xlu0 %v260, 64
    %v1441 = vpop.permute.xlu0 %1440
    %v1444 = vsel %vm265, %v982, 0
    %1446 = vmatprep.subr.mxu0 0.0
    %1447 = vmatpush1.msra.mxu0 0.0
    %1448 = vmatprep.subr.mxu0 0.0
    %1449 = vmatpush1.msra.mxu0 0.0
    %1450 = vmatprep.subr.mxu0 0.0
    %1451 = vmatpush1.msra.mxu0 0.0
    %1452 = vmatprep.subr.mxu0 0.0
    %1453 = vmatpush1.msra.mxu0 0.0
    %1454 = vmatprep.subr.mxu0 0.0
    %1455 = vmatpush1.msra.mxu0 0.0
    %1456 = vmatprep.subr.mxu0 0.0
    %1457 = vmatpush1.msra.mxu0 0.0
    %1458 = vmatprep.subr.mxu0 0.0
    %1459 = vmatpush1.msra.mxu0 0.0
    %1460 = vmatprep.subr.mxu0 0.0
    %1461 = vmatpush1.msra.mxu0 0.0
    %1462 = vmatprep.subr.mxu0 0.0
    %1463 = vmatpush1.msra.mxu0 0.0
    %1464 = vmatprep.subr.mxu0 0.0
    %1465 = vmatpush1.msra.mxu0 0.0
    %1466 = vmatprep.subr.mxu0 0.0
    %1467 = vmatpush1.msra.mxu0 0.0
    %1468 = vmatprep.subr.mxu0 0.0
    %1469 = vmatpush1.msra.mxu0 0.0
    %1470 = vmatprep.subr.mxu0 0.0
    %1471 = vmatpush1.msra.mxu0 0.0
    %1472 = vmatprep.subr.mxu0 0.0
    %1473 = vmatpush1.msra.mxu0 0.0
    %1474 = vmatprep.subr.mxu0 0.0
    %1475 = vmatpush1.msra.mxu0 0.0
    %1476 = vmatprep.subr.mxu0 0.0
    %1477 = vmatpush1.msra.mxu0 %v1441
    %1478 = vmatprep.subr.mxu0 0.0
    %1479 = vmatpush2.msra.mxu0 0.0
    %1480 = vmatprep.subr.mxu0 0.0
    %1481 = vmatpush2.msra.mxu0 0.0
    %1482 = vmatprep.subr.mxu0 0.0
    %1483 = vmatpush2.msra.mxu0 0.0
    %1484 = vmatprep.subr.mxu0 0.0
    %1485 = vmatpush2.msra.mxu0 0.0
    %1486 = vmatprep.subr.mxu0 0.0
    %1487 = vmatpush2.msra.mxu0 0.0
    %1488 = vmatprep.subr.mxu0 0.0
    %1489 = vmatpush2.msra.mxu0 0.0
    %1490 = vmatprep.subr.mxu0 0.0
    %1491 = vmatpush2.msra.mxu0 0.0
    %1492 = vmatprep.subr.mxu0 0.0
    %1493 = vmatpush2.msra.mxu0 0.0
    %1494 = vmatprep.subr.mxu0 0.0
    %1495 = vmatpush2.msra.mxu0 0.0
    %1496 = vmatprep.subr.mxu0 0.0
    %1497 = vmatpush2.msra.mxu0 0.0
    %1498 = vmatprep.subr.mxu0 0.0
    %1499 = vmatpush2.msra.mxu0 0.0
    %1500 = vmatprep.subr.mxu0 0.0
    %1501 = vmatpush2.msra.mxu0 0.0
    %1502 = vmatprep.subr.mxu0 0.0
    %1503 = vmatpush2.msra.mxu0 0.0
    %1504 = vmatprep.subr.mxu0 0.0
    %1505 = vmatpush2.msra.mxu0 0.0
    %1506 = vmatprep.subr.mxu0 0.0
    %1507 = vmatpush2.msra.mxu0 0.0
    %1508 = vmatprep.subr.mxu0 0.0
    %1509 = vmatpush2.msra.mxu0 0.0
    %1510 = vmatprep.mubr.f32.mxu0 0.0
    %1511 = vmatmul.mubr.f32.gmra.mxu0 %v1444
    %v1512 = vpop.f32.mrf.mxu0
    %v1513 = vadd.f32 0.0, %v1512
    %v1514 = vpop.f32.mrf.mxu0
    %1515 = vdwg.mxu0
    %1516 = vrot.lane.b32.xlu0 %v262, 64
    %v1517 = vpop.permute.xlu0 %1516
    %v1520 = vsel %vm265, %v983, 0
    %1522 = vmatprep.subr.mxu0 0.0
    %1523 = vmatpush1.msra.mxu0 0.0
    %1524 = vmatprep.subr.mxu0 0.0
    %1525 = vmatpush1.msra.mxu0 0.0
    %1526 = vmatprep.subr.mxu0 0.0
    %1527 = vmatpush1.msra.mxu0 0.0
    %1528 = vmatprep.subr.mxu0 0.0
    %1529 = vmatpush1.msra.mxu0 0.0
    %1530 = vmatprep.subr.mxu0 0.0
    %1531 = vmatpush1.msra.mxu0 0.0
    %1532 = vmatprep.subr.mxu0 0.0
    %1533 = vmatpush1.msra.mxu0 0.0
    %1534 = vmatprep.subr.mxu0 0.0
    %1535 = vmatpush1.msra.mxu0 0.0
    %1536 = vmatprep.subr.mxu0 0.0
    %1537 = vmatpush1.msra.mxu0 0.0
    %1538 = vmatprep.subr.mxu0 0.0
    %1539 = vmatpush1.msra.mxu0 0.0
    %1540 = vmatprep.subr.mxu0 0.0
    %1541 = vmatpush1.msra.mxu0 0.0
    %1542 = vmatprep.subr.mxu0 0.0
    %1543 = vmatpush1.msra.mxu0 0.0
    %1544 = vmatprep.subr.mxu0 0.0
    %1545 = vmatpush1.msra.mxu0 0.0
    %1546 = vmatprep.subr.mxu0 0.0
    %1547 = vmatpush1.msra.mxu0 0.0
    %1548 = vmatprep.subr.mxu0 0.0
    %1549 = vmatpush1.msra.mxu0 0.0
    %1550 = vmatprep.subr.mxu0 0.0
    %1551 = vmatpush1.msra.mxu0 0.0
    %1552 = vmatprep.subr.mxu0 0.0
    %1553 = vmatpush1.msra.mxu0 %v1517
    %1554 = vmatprep.subr.mxu0 0.0
    %1555 = vmatpush2.msra.mxu0 0.0
    %1556 = vmatprep.subr.mxu0 0.0
    %1557 = vmatpush2.msra.mxu0 0.0
    %1558 = vmatprep.subr.mxu0 0.0
    %1559 = vmatpush2.msra.mxu0 0.0
    %1560 = vmatprep.subr.mxu0 0.0
    %1561 = vmatpush2.msra.mxu0 0.0
    %1562 = vmatprep.subr.mxu0 0.0
    %1563 = vmatpush2.msra.mxu0 0.0
    %1564 = vmatprep.subr.mxu0 0.0
    %1565 = vmatpush2.msra.mxu0 0.0
    %1566 = vmatprep.subr.mxu0 0.0
    %1567 = vmatpush2.msra.mxu0 0.0
    %1568 = vmatprep.subr.mxu0 0.0
    %1569 = vmatpush2.msra.mxu0 0.0
    %1570 = vmatprep.subr.mxu0 0.0
    %1571 = vmatpush2.msra.mxu0 0.0
    %1572 = vmatprep.subr.mxu0 0.0
    %1573 = vmatpush2.msra.mxu0 0.0
    %1574 = vmatprep.subr.mxu0 0.0
    %1575 = vmatpush2.msra.mxu0 0.0
    %1576 = vmatprep.subr.mxu0 0.0
    %1577 = vmatpush2.msra.mxu0 0.0
    %1578 = vmatprep.subr.mxu0 0.0
    %1579 = vmatpush2.msra.mxu0 0.0
    %1580 = vmatprep.subr.mxu0 0.0
    %1581 = vmatpush2.msra.mxu0 0.0
    %1582 = vmatprep.subr.mxu0 0.0
    %1583 = vmatpush2.msra.mxu0 0.0
    %1584 = vmatprep.subr.mxu0 0.0
    %1585 = vmatpush2.msra.mxu0 0.0
    %1586 = vmatprep.mubr.f32.mxu0 0.0
    %1587 = vmatmul.mubr.f32.gmra.mxu0 %v1520
    %v1588 = vpop.f32.mrf.mxu0
    %v1589 = vadd.f32 0.0, %v1588
    %v1590 = vpop.f32.mrf.mxu0
    %1591 = vdwg.mxu0
    %1593 = vrot.lane.b32.xlu0 %v1133, 8
    %v1594 = vpop.permute.xlu0 %1593
    %1597 = vrot.lane.b32.xlu0 %v1209, 16
    %v1598 = vpop.permute.xlu0 %1597
    %1601 = vrot.lane.b32.xlu0 %v1285, 24
    %v1602 = vpop.permute.xlu0 %1601
    %v1604 = vsel %vm265, %v1057, %v1594
    %vm1605 = vcmask 130048
    %v1606 = vsel %vm1605, %v1604, %v1598
    %vm1607 = vcmask 195584
    %v1608 = vsel %vm1607, %v1606, %v1602
    %1610 = vrot.lane.b32.xlu0 %v1437, 8
    %v1611 = vpop.permute.xlu0 %1610
    %1614 = vrot.lane.b32.xlu0 %v1513, 16
    %v1615 = vpop.permute.xlu0 %1614
    %1618 = vrot.lane.b32.xlu0 %v1589, 24
    %v1619 = vpop.permute.xlu0 %1618
    %v1621 = vsel %vm265, %v1361, %v1611
    %v1622 = vsel %vm1605, %v1621, %v1615
    %v1623 = vsel %vm1607, %v1622, %v1619
    %v1624 = vld [vmem:[%s6] sm:$0xff]
    %v1625 = vld [vmem:[%s6 + $0x8] sm:$0xff]
    %v1626 = vld [vmem:[%s6 + $0x10] sm:$0xff]
    %v1627 = vld [vmem:[%s6 + $0x18] sm:$0xff]
    %v1628 = vld [vmem:[%s7] sm:$0x1]
    %v1630 = vlaneseq
    %v1631 = vshrl.u32 %v1630, 7
    %v1632 = vsub.s32 0, %v1631
    %v1633 = vrot.slane %v1628, %v1632
    %v1636 = vsel %vm107, %v1608, 0
    %v1639 = vsel %vm107, %v1623, 0
    %1641 = vmatprep.subr.mxu0 0.0
    %1642 = vmatpush1.msra.mxu0 0.0
    %1643 = vmatprep.subr.mxu0 0.0
    %1644 = vmatpush1.msra.mxu0 0.0
    %1645 = vmatprep.subr.mxu0 0.0
    %1646 = vmatpush1.msra.mxu0 0.0
    %1647 = vmatprep.subr.mxu0 0.0
    %1648 = vmatpush1.msra.mxu0 0.0
    %1649 = vmatprep.subr.mxu0 0.0
    %1650 = vmatpush1.msra.mxu0 0.0
    %1651 = vmatprep.subr.mxu0 0.0
    %1652 = vmatpush1.msra.mxu0 0.0
    %1653 = vmatprep.subr.mxu0 0.0
    %1654 = vmatpush1.msra.mxu0 0.0
    %1655 = vmatprep.subr.mxu0 0.0
    %1656 = vmatpush1.msra.mxu0 0.0
    %1657 = vmatprep.subr.mxu0 0.0
    %1658 = vmatpush1.msra.mxu0 0.0
    %1659 = vmatprep.subr.mxu0 0.0
    %1660 = vmatpush1.msra.mxu0 0.0
    %1661 = vmatprep.subr.mxu0 0.0
    %1662 = vmatpush1.msra.mxu0 0.0
    %1663 = vmatprep.subr.mxu0 0.0
    %1664 = vmatpush1.msra.mxu0 0.0
    %1665 = vmatprep.subr.mxu0 0.0
    %1666 = vmatpush1.msra.mxu0 %v1627
    %1667 = vmatprep.subr.mxu0 0.0
    %1668 = vmatpush1.msra.mxu0 %v1626
    %1669 = vmatprep.subr.mxu0 0.0
    %1670 = vmatpush1.msra.mxu0 %v1625
    %1671 = vmatprep.subr.mxu0 0.0
    %1672 = vmatpush1.msra.mxu0 %v1624
    %1673 = vmatprep.subr.mxu0 0.0
    %1674 = vmatpush2.msra.mxu0 0.0
    %1675 = vmatprep.subr.mxu0 0.0
    %1676 = vmatpush2.msra.mxu0 0.0
    %1677 = vmatprep.subr.mxu0 0.0
    %1678 = vmatpush2.msra.mxu0 0.0
    %1679 = vmatprep.subr.mxu0 0.0
    %1680 = vmatpush2.msra.mxu0 0.0
    %1681 = vmatprep.subr.mxu0 0.0
    %1682 = vmatpush2.msra.mxu0 0.0
    %1683 = vmatprep.subr.mxu0 0.0
    %1684 = vmatpush2.msra.mxu0 0.0
    %1685 = vmatprep.subr.mxu0 0.0
    %1686 = vmatpush2.msra.mxu0 0.0
    %1687 = vmatprep.subr.mxu0 0.0
    %1688 = vmatpush2.msra.mxu0 0.0
    %1689 = vmatprep.subr.mxu0 0.0
    %1690 = vmatpush2.msra.mxu0 0.0
    %1691 = vmatprep.subr.mxu0 0.0
    %1692 = vmatpush2.msra.mxu0 0.0
    %1693 = vmatprep.subr.mxu0 0.0
    %1694 = vmatpush2.msra.mxu0 0.0
    %1695 = vmatprep.subr.mxu0 0.0
    %1696 = vmatpush2.msra.mxu0 0.0
    %1697 = vmatprep.subr.mxu0 0.0
    %1698 = vmatpush2.msra.mxu0 0.0
    %1699 = vmatprep.subr.mxu0 0.0
    %1700 = vmatpush2.msra.mxu0 0.0
    %1701 = vmatprep.subr.mxu0 0.0
    %1702 = vmatpush2.msra.mxu0 0.0
    %1703 = vmatprep.subr.mxu0 0.0
    %1704 = vmatpush2.msra.mxu0 0.0
    %1705 = vmatprep.mubr.f32.mxu0 0.0
    %1706 = vmatmul.mubr.f32.gmra.mxu0 %v1636
    %v1707 = vpop.f32.mrf.mxu0
    %v1708 = vadd.f32 %v1633, %v1707
    %v1709 = vpop.f32.mrf.mxu0
    %1710 = vmatprep.mubr.f32.mxu0 0.0
    %1711 = vmatmul.mubr.f32.gmra.mxu0 %v1639
    %v1712 = vpop.f32.mrf.mxu0
    %v1713 = vadd.f32 %v1633, %v1712
    %v1714 = vpop.f32.mrf.mxu0
    %1715 = vdwg.mxu0
    %v1716 = vadd.f32 %v1708, %v149
    %v1717 = vadd.f32 %v1713, %v150
    %v1718 = vld [vmem:[%s8] sm:$0x1]
    %v1719 = vld [vmem:[%s9] sm:$0x1]
    %v1720 = vsel %vm107, %v1716, 0.0
    %1721 = vadd.xlane.f32.xlu0 %v1720
    %v1722 = vpop.xlane.xlu0 %1721
    %v1723 = vsel %vm107, %v1717, 0.0
    %1724 = vadd.xlane.f32.xlu0 %v1723
    %v1725 = vpop.xlane.xlu0 %1724
    %v1726 = vmul.f32 %v1722, %v114
    %v1727 = vmul.f32 %v1725, %v114
    %v1728 = vsub.f32 %v1716, %v1726
    %v1729 = vsub.f32 %v1717, %v1727
    %v1730 = vmul.f32 %v1728, %v1728
    %v1731 = vmul.f32 %v1729, %v1729
    %v1732 = vsel %vm107, %v1730, 0.0
    %1733 = vadd.xlane.f32.xlu0 %v1732
    %v1734 = vpop.xlane.xlu0 %1733
    %v1735 = vsel %vm107, %v1731, 0.0
    %1736 = vadd.xlane.f32.xlu0 %v1735
    %v1737 = vpop.xlane.xlu0 %1736
    %v1738 = vmul.f32 %v1734, %v114
    %v1739 = vmul.f32 %v1737, %v114
    %v1740 = vadd.f32 %v1738, 1e-12
    %v1741 = vadd.f32 %v1739, 1e-12
    %v1742 = vrsqrt.pop %v1740
    %v1743 = vrsqrt.pop %v1741
    %v1744 = vmul.f32 %v1728, %v1742
    %v1745 = vmul.f32 %v1729, %v1743
    %v1747 = vlaneseq
    %v1748 = vshrl.u32 %v1747, 7
    %v1749 = vsub.s32 0, %v1748
    %v1750 = vrot.slane %v1718, %v1749
    %v1752 = vmul.f32 %v1744, %v1750
    %v1753 = vmul.f32 %v1745, %v1750
    %v1755 = vlaneseq
    %v1756 = vshrl.u32 %v1755, 7
    %v1757 = vsub.s32 0, %v1756
    %v1758 = vrot.slane %v1719, %v1757
    %v1760 = vadd.f32 %v1752, %v1758
    %v1761 = vadd.f32 %v1753, %v1758
    %v1762 = vld [vmem:[%s10] sm:$0xff]
    %v1763 = vld [vmem:[%s10 + $0x8] sm:$0xff]
    %v1764 = vld [vmem:[%s10 + $0x10] sm:$0xff]
    %v1765 = vld [vmem:[%s10 + $0x18] sm:$0xff]
    %v1766 = vld [vmem:[%s11] sm:$0x1]
    %v1768 = vlaneseq
    %v1769 = vshrl.u32 %v1768, 7
    %v1770 = vsub.s32 0, %v1769
    %v1771 = vrot.slane %v1766, %v1770
    %v1774 = vsel %vm107, %v1760, 0
    %v1777 = vsel %vm107, %v1761, 0
    %1779 = vmatprep.subr.mxu0 0.0
    %1780 = vmatpush1.msra.mxu0 0.0
    %1781 = vmatprep.subr.mxu0 0.0
    %1782 = vmatpush1.msra.mxu0 0.0
    %1783 = vmatprep.subr.mxu0 0.0
    %1784 = vmatpush1.msra.mxu0 0.0
    %1785 = vmatprep.subr.mxu0 0.0
    %1786 = vmatpush1.msra.mxu0 0.0
    %1787 = vmatprep.subr.mxu0 0.0
    %1788 = vmatpush1.msra.mxu0 0.0
    %1789 = vmatprep.subr.mxu0 0.0
    %1790 = vmatpush1.msra.mxu0 0.0
    %1791 = vmatprep.subr.mxu0 0.0
    %1792 = vmatpush1.msra.mxu0 0.0
    %1793 = vmatprep.subr.mxu0 0.0
    %1794 = vmatpush1.msra.mxu0 0.0
    %1795 = vmatprep.subr.mxu0 0.0
    %1796 = vmatpush1.msra.mxu0 0.0
    %1797 = vmatprep.subr.mxu0 0.0
    %1798 = vmatpush1.msra.mxu0 0.0
    %1799 = vmatprep.subr.mxu0 0.0
    %1800 = vmatpush1.msra.mxu0 0.0
    %1801 = vmatprep.subr.mxu0 0.0
    %1802 = vmatpush1.msra.mxu0 0.0
    %1803 = vmatprep.subr.mxu0 0.0
    %1804 = vmatpush1.msra.mxu0 %v1765
    %1805 = vmatprep.subr.mxu0 0.0
    %1806 = vmatpush1.msra.mxu0 %v1764
    %1807 = vmatprep.subr.mxu0 0.0
    %1808 = vmatpush1.msra.mxu0 %v1763
    %1809 = vmatprep.subr.mxu0 0.0
    %1810 = vmatpush1.msra.mxu0 %v1762
    %1811 = vmatprep.subr.mxu0 0.0
    %1812 = vmatpush2.msra.mxu0 0.0
    %1813 = vmatprep.subr.mxu0 0.0
    %1814 = vmatpush2.msra.mxu0 0.0
    %1815 = vmatprep.subr.mxu0 0.0
    %1816 = vmatpush2.msra.mxu0 0.0
    %1817 = vmatprep.subr.mxu0 0.0
    %1818 = vmatpush2.msra.mxu0 0.0
    %1819 = vmatprep.subr.mxu0 0.0
    %1820 = vmatpush2.msra.mxu0 0.0
    %1821 = vmatprep.subr.mxu0 0.0
    %1822 = vmatpush2.msra.mxu0 0.0
    %1823 = vmatprep.subr.mxu0 0.0
    %1824 = vmatpush2.msra.mxu0 0.0
    %1825 = vmatprep.subr.mxu0 0.0
    %1826 = vmatpush2.msra.mxu0 0.0
    %1827 = vmatprep.subr.mxu0 0.0
    %1828 = vmatpush2.msra.mxu0 0.0
    %1829 = vmatprep.subr.mxu0 0.0
    %1830 = vmatpush2.msra.mxu0 0.0
    %1831 = vmatprep.subr.mxu0 0.0
    %1832 = vmatpush2.msra.mxu0 0.0
    %1833 = vmatprep.subr.mxu0 0.0
    %1834 = vmatpush2.msra.mxu0 0.0
    %1835 = vmatprep.subr.mxu0 0.0
    %1836 = vmatpush2.msra.mxu0 0.0
    %1837 = vmatprep.subr.mxu0 0.0
    %1838 = vmatpush2.msra.mxu0 0.0
    %1839 = vmatprep.subr.mxu0 0.0
    %1840 = vmatpush2.msra.mxu0 0.0
    %1841 = vmatprep.subr.mxu0 0.0
    %1842 = vmatpush2.msra.mxu0 0.0
    %1843 = vmatprep.mubr.f32.mxu0 0.0
    %1844 = vmatmul.mubr.f32.gmra.mxu0 %v1774
    %v1845 = vpop.f32.mrf.mxu0
    %v1846 = vadd.f32 %v1771, %v1845
    %v1847 = vpop.f32.mrf.mxu0
    %1848 = vmatprep.mubr.f32.mxu0 0.0
    %1849 = vmatmul.mubr.f32.gmra.mxu0 %v1777
    %v1850 = vpop.f32.mrf.mxu0
    %v1851 = vadd.f32 %v1771, %v1850
    %v1852 = vpop.f32.mrf.mxu0
    %1853 = vdwg.mxu0
    %v1854 = vmul.f32 %v1846, %v1846
    %v1855 = vmul.f32 %v1851, %v1851
    %v1856 = vmul.f32 %v1846, %v1854
    %v1857 = vmul.f32 %v1851, %v1855
    %v1858 = vmul.f32 %v1856, 0.044715
    %v1859 = vmul.f32 %v1857, 0.044715
    %v1860 = vadd.f32 %v1846, %v1858
    %v1861 = vadd.f32 %v1851, %v1859
    %v1862 = vmul.f32 %v1860, 0.7978846
    %v1863 = vmul.f32 %v1861, 0.7978846
    %v1864 = vtanh.pop %v1862
    %v1865 = vtanh.pop %v1863
    %v1866 = vadd.f32 %v1864, 1.0
    %v1867 = vadd.f32 %v1865, 1.0
    %v1868 = vmul.f32 %v1866, 0.5
    %v1869 = vmul.f32 %v1867, 0.5
    %v1870 = vmul.f32 %v1846, %v1868
    %v1871 = vmul.f32 %v1851, %v1869
    %v1872 = vld [vmem:[%s12] sm:$0xff]
    %v1873 = vld [vmem:[%s12 + $0x8] sm:$0xff]
    %v1874 = vld [vmem:[%s12 + $0x10] sm:$0xff]
    %v1875 = vld [vmem:[%s12 + $0x18] sm:$0xff]
    %v1876 = vld [vmem:[%s12 + $0x20] sm:$0xff]
    %v1877 = vld [vmem:[%s12 + $0x28] sm:$0xff]
    %v1878 = vld [vmem:[%s12 + $0x30] sm:$0xff]
    %v1879 = vld [vmem:[%s12 + $0x38] sm:$0xff]
    %v1880 = vld [vmem:[%s13] sm:$0x1]
    %v1882 = vlaneseq
    %v1883 = vshrl.u32 %v1882, 7
    %v1884 = vsub.s32 0, %v1883
    %v1885 = vrot.slane %v1880, %v1884
    %vm1887 = vcmask 523264
    %v1889 = vsel %vm1887, %v1870, 0
    %v1892 = vsel %vm1887, %v1871, 0
    %1894 = vmatprep.subr.mxu0 0.0
    %1895 = vmatpush1.msra.mxu0 0.0
    %1896 = vmatprep.subr.mxu0 0.0
    %1897 = vmatpush1.msra.mxu0 0.0
    %1898 = vmatprep.subr.mxu0 0.0
    %1899 = vmatpush1.msra.mxu0 0.0
    %1900 = vmatprep.subr.mxu0 0.0
    %1901 = vmatpush1.msra.mxu0 0.0
    %1902 = vmatprep.subr.mxu0 0.0
    %1903 = vmatpush1.msra.mxu0 0.0
    %1904 = vmatprep.subr.mxu0 0.0
    %1905 = vmatpush1.msra.mxu0 0.0
    %1906 = vmatprep.subr.mxu0 0.0
    %1907 = vmatpush1.msra.mxu0 0.0
    %1908 = vmatprep.subr.mxu0 0.0
    %1909 = vmatpush1.msra.mxu0 0.0
    %1910 = vmatprep.subr.mxu0 0.0
    %1911 = vmatpush1.msra.mxu0 %v1879
    %1912 = vmatprep.subr.mxu0 0.0
    %1913 = vmatpush1.msra.mxu0 %v1878
    %1914 = vmatprep.subr.mxu0 0.0
    %1915 = vmatpush1.msra.mxu0 %v1877
    %1916 = vmatprep.subr.mxu0 0.0
    %1917 = vmatpush1.msra.mxu0 %v1876
    %1918 = vmatprep.subr.mxu0 0.0
    %1919 = vmatpush1.msra.mxu0 %v1875
    %1920 = vmatprep.subr.mxu0 0.0
    %1921 = vmatpush1.msra.mxu0 %v1874
    %1922 = vmatprep.subr.mxu0 0.0
    %1923 = vmatpush1.msra.mxu0 %v1873
    %1924 = vmatprep.subr.mxu0 0.0
    %1925 = vmatpush1.msra.mxu0 %v1872
    %1926 = vmatprep.subr.mxu0 0.0
    %1927 = vmatpush2.msra.mxu0 0.0
    %1928 = vmatprep.subr.mxu0 0.0
    %1929 = vmatpush2.msra.mxu0 0.0
    %1930 = vmatprep.subr.mxu0 0.0
    %1931 = vmatpush2.msra.mxu0 0.0
    %1932 = vmatprep.subr.mxu0 0.0
    %1933 = vmatpush2.msra.mxu0 0.0
    %1934 = vmatprep.subr.mxu0 0.0
    %1935 = vmatpush2.msra.mxu0 0.0
    %1936 = vmatprep.subr.mxu0 0.0
    %1937 = vmatpush2.msra.mxu0 0.0
    %1938 = vmatprep.subr.mxu0 0.0
    %1939 = vmatpush2.msra.mxu0 0.0
    %1940 = vmatprep.subr.mxu0 0.0
    %1941 = vmatpush2.msra.mxu0 0.0
    %1942 = vmatprep.subr.mxu0 0.0
    %1943 = vmatpush2.msra.mxu0 0.0
    %1944 = vmatprep.subr.mxu0 0.0
    %1945 = vmatpush2.msra.mxu0 0.0
    %1946 = vmatprep.subr.mxu0 0.0
    %1947 = vmatpush2.msra.mxu0 0.0
    %1948 = vmatprep.subr.mxu0 0.0
    %1949 = vmatpush2.msra.mxu0 0.0
    %1950 = vmatprep.subr.mxu0 0.0
    %1951 = vmatpush2.msra.mxu0 0.0
    %1952 = vmatprep.subr.mxu0 0.0
    %1953 = vmatpush2.msra.mxu0 0.0
    %1954 = vmatprep.subr.mxu0 0.0
    %1955 = vmatpush2.msra.mxu0 0.0
    %1956 = vmatprep.subr.mxu0 0.0
    %1957 = vmatpush2.msra.mxu0 0.0
    %1958 = vmatprep.mubr.f32.mxu0 0.0
    %1959 = vmatmul.mubr.f32.gmra.mxu0 %v1889
    %v1960 = vpop.f32.mrf.mxu0
    %v1961 = vadd.f32 %v1885, %v1960
    %v1962 = vpop.f32.mrf.mxu0
    %1963 = vmatprep.mubr.f32.mxu0 0.0
    %1964 = vmatmul.mubr.f32.gmra.mxu0 %v1892
    %v1965 = vpop.f32.mrf.mxu0
    %v1966 = vadd.f32 %v1885, %v1965
    %v1967 = vpop.f32.mrf.mxu0
    %1968 = vdwg.mxu0
    %v1969 = vadd.f32 %v1961, %v1760
    %v1970 = vadd.f32 %v1966, %v1761
    %v1971 = vld [vmem:[%s14] sm:$0x1]
    %v1972 = vld [vmem:[%s15] sm:$0x1]
    %v1973 = vsel %vm107, %v1969, 0.0
    %1974 = vadd.xlane.f32.xlu0 %v1973
    %v1975 = vpop.xlane.xlu0 %1974
    %v1976 = vsel %vm107, %v1970, 0.0
    %1977 = vadd.xlane.f32.xlu0 %v1976
    %v1978 = vpop.xlane.xlu0 %1977
    %v1979 = vmul.f32 %v1975, %v114
    %v1980 = vmul.f32 %v1978, %v114
    %v1981 = vsub.f32 %v1969, %v1979
    %v1982 = vsub.f32 %v1970, %v1980
    %v1983 = vmul.f32 %v1981, %v1981
    %v1984 = vmul.f32 %v1982, %v1982
    %v1985 = vsel %vm107, %v1983, 0.0
    %1986 = vadd.xlane.f32.xlu0 %v1985
    %v1987 = vpop.xlane.xlu0 %1986
    %v1988 = vsel %vm107, %v1984, 0.0
    %1989 = vadd.xlane.f32.xlu0 %v1988
    %v1990 = vpop.xlane.xlu0 %1989
    %v1991 = vmul.f32 %v1987, %v114
    %v1992 = vmul.f32 %v1990, %v114
    %v1993 = vadd.f32 %v1991, 1e-12
    %v1994 = vadd.f32 %v1992, 1e-12
    %v1995 = vrsqrt.pop %v1993
    %v1996 = vrsqrt.pop %v1994
    %v1997 = vmul.f32 %v1981, %v1995
    %v1998 = vmul.f32 %v1982, %v1996
    %v2000 = vlaneseq
    %v2001 = vshrl.u32 %v2000, 7
    %v2002 = vsub.s32 0, %v2001
    %v2003 = vrot.slane %v1971, %v2002
    %v2005 = vmul.f32 %v1997, %v2003
    %v2006 = vmul.f32 %v1998, %v2003
    %v2008 = vlaneseq
    %v2009 = vshrl.u32 %v2008, 7
    %v2010 = vsub.s32 0, %v2009
    %v2011 = vrot.slane %v1972, %v2010
    %v2013 = vadd.f32 %v2005, %v2011
    %v2014 = vadd.f32 %v2006, %v2011
    %s2015 = scalar_lea.vmem %s4, 32
    %v2016 = vld [vmem:[%s2015] sm:$0xff]
    %v2017 = vld [vmem:[%s2015 + $0x8] sm:$0xff]
    %v2018 = vld [vmem:[%s2015 + $0x10] sm:$0xff]
    %v2019 = vld [vmem:[%s2015 + $0x18] sm:$0xff]
    %s2020 = scalar_lea.vmem %s5, 1
    %v2021 = vld [vmem:[%s2020] sm:$0x1]
    %v2023 = vlaneseq
    %v2024 = vshrl.u32 %v2023, 7
    %v2025 = vsub.s32 0, %v2024
    %v2026 = vrot.slane %v2021, %v2025
    %v2029 = vsel %vm107, %v2013, 0
    %v2032 = vsel %vm107, %v2014, 0
    %2034 = vmatprep.subr.mxu0 0.0
    %2035 = vmatpush1.msra.mxu0 0.0
    %2036 = vmatprep.subr.mxu0 0.0
    %2037 = vmatpush1.msra.mxu0 0.0
    %2038 = vmatprep.subr.mxu0 0.0
    %2039 = vmatpush1.msra.mxu0 0.0
    %2040 = vmatprep.subr.mxu0 0.0
    %2041 = vmatpush1.msra.mxu0 0.0
    %2042 = vmatprep.subr.mxu0 0.0
    %2043 = vmatpush1.msra.mxu0 0.0
    %2044 = vmatprep.subr.mxu0 0.0
    %2045 = vmatpush1.msra.mxu0 0.0
    %2046 = vmatprep.subr.mxu0 0.0
    %2047 = vmatpush1.msra.mxu0 0.0
    %2048 = vmatprep.subr.mxu0 0.0
    %2049 = vmatpush1.msra.mxu0 0.0
    %2050 = vmatprep.subr.mxu0 0.0
    %2051 = vmatpush1.msra.mxu0 0.0
    %2052 = vmatprep.subr.mxu0 0.0
    %2053 = vmatpush1.msra.mxu0 0.0
    %2054 = vmatprep.subr.mxu0 0.0
    %2055 = vmatpush1.msra.mxu0 0.0
    %2056 = vmatprep.subr.mxu0 0.0
    %2057 = vmatpush1.msra.mxu0 0.0
    %2058 = vmatprep.subr.mxu0 0.0
    %2059 = vmatpush1.msra.mxu0 %v2019
    %2060 = vmatprep.subr.mxu0 0.0
    %2061 = vmatpush1.msra.mxu0 %v2018
    %2062 = vmatprep.subr.mxu0 0.0
    %2063 = vmatpush1.msra.mxu0 %v2017
    %2064 = vmatprep.subr.mxu0 0.0
    %2065 = vmatpush1.msra.mxu0 %v2016
    %2066 = vmatprep.subr.mxu0 0.0
    %2067 = vmatpush2.msra.mxu0 0.0
    %2068 = vmatprep.subr.mxu0 0.0
    %2069 = vmatpush2.msra.mxu0 0.0
    %2070 = vmatprep.subr.mxu0 0.0
    %2071 = vmatpush2.msra.mxu0 0.0
    %2072 = vmatprep.subr.mxu0 0.0
    %2073 = vmatpush2.msra.mxu0 0.0
    %2074 = vmatprep.subr.mxu0 0.0
    %2075 = vmatpush2.msra.mxu0 0.0
    %2076 = vmatprep.subr.mxu0 0.0
    %2077 = vmatpush2.msra.mxu0 0.0
    %2078 = vmatprep.subr.mxu0 0.0
    %2079 = vmatpush2.msra.mxu0 0.0
    %2080 = vmatprep.subr.mxu0 0.0
    %2081 = vmatpush2.msra.mxu0 0.0
    %2082 = vmatprep.subr.mxu0 0.0
    %2083 = vmatpush2.msra.mxu0 0.0
    %2084 = vmatprep.subr.mxu0 0.0
    %2085 = vmatpush2.msra.mxu0 0.0
    %2086 = vmatprep.subr.mxu0 0.0
    %2087 = vmatpush2.msra.mxu0 0.0
    %2088 = vmatprep.subr.mxu0 0.0
    %2089 = vmatpush2.msra.mxu0 0.0
    %2090 = vmatprep.subr.mxu0 0.0
    %2091 = vmatpush2.msra.mxu0 0.0
    %2092 = vmatprep.subr.mxu0 0.0
    %2093 = vmatpush2.msra.mxu0 0.0
    %2094 = vmatprep.subr.mxu0 0.0
    %2095 = vmatpush2.msra.mxu0 0.0
    %2096 = vmatprep.subr.mxu0 0.0
    %2097 = vmatpush2.msra.mxu0 0.0
    %2098 = vmatprep.mubr.f32.mxu0 0.0
    %2099 = vmatmul.mubr.f32.gmra.mxu0 %v2029
    %v2100 = vpop.f32.mrf.mxu0
    %v2101 = vadd.f32 %v2026, %v2100
    %v2102 = vpop.f32.mrf.mxu0
    %2103 = vmatprep.mubr.f32.mxu0 0.0
    %2104 = vmatmul.mubr.f32.gmra.mxu0 %v2032
    %v2105 = vpop.f32.mrf.mxu0
    %v2106 = vadd.f32 %v2026, %v2105
    %v2107 = vpop.f32.mrf.mxu0
    %2108 = vdwg.mxu0
    %2110 = vrot.lane.b32.xlu0 %v2101, 120
    %v2111 = vpop.permute.xlu0 %2110
    %2112 = vrot.lane.b32.xlu0 %v2101, 112
    %v2113 = vpop.permute.xlu0 %2112
    %2114 = vrot.lane.b32.xlu0 %v2101, 104
    %v2115 = vpop.permute.xlu0 %2114
    %2117 = vrot.lane.b32.xlu0 %v2106, 120
    %v2118 = vpop.permute.xlu0 %2117
    %2119 = vrot.lane.b32.xlu0 %v2106, 112
    %v2120 = vpop.permute.xlu0 %2119
    %2121 = vrot.lane.b32.xlu0 %v2106, 104
    %v2122 = vpop.permute.xlu0 %2121
    %2123 = vrot.lane.b32.xlu0 %v2101, 96
    %v2124 = vpop.permute.xlu0 %2123
    %v2125 = vsel %vm265, %v2101, 0
    %v2127 = vsel %vm265, %v2124, 0
    %2129 = vmatprep.subr.mxu0 0.0
    %2130 = vmatpush1.xpose.msra.mxu0 0.0
    %2131 = vmatprep.subr.mxu0 0.0
    %2132 = vmatpush1.xpose.msra.mxu0 0.0
    %2133 = vmatprep.subr.mxu0 0.0
    %2134 = vmatpush1.xpose.msra.mxu0 0.0
    %2135 = vmatprep.subr.mxu0 0.0
    %2136 = vmatpush1.xpose.msra.mxu0 0.0
    %2137 = vmatprep.subr.mxu0 0.0
    %2138 = vmatpush1.xpose.msra.mxu0 0.0
    %2139 = vmatprep.subr.mxu0 0.0
    %2140 = vmatpush1.xpose.msra.mxu0 0.0
    %2141 = vmatprep.subr.mxu0 0.0
    %2142 = vmatpush1.xpose.msra.mxu0 0.0
    %2143 = vmatprep.subr.mxu0 0.0
    %2144 = vmatpush1.xpose.msra.mxu0 0.0
    %2145 = vmatprep.subr.mxu0 0.0
    %2146 = vmatpush1.xpose.msra.mxu0 0.0
    %2147 = vmatprep.subr.mxu0 0.0
    %2148 = vmatpush1.xpose.msra.mxu0 0.0
    %2149 = vmatprep.subr.mxu0 0.0
    %2150 = vmatpush1.xpose.msra.mxu0 0.0
    %2151 = vmatprep.subr.mxu0 0.0
    %2152 = vmatpush1.xpose.msra.mxu0 0.0
    %2153 = vmatprep.subr.mxu0 0.0
    %2154 = vmatpush1.xpose.msra.mxu0 0.0
    %2155 = vmatprep.subr.mxu0 0.0
    %2156 = vmatpush1.xpose.msra.mxu0 0.0
    %2157 = vmatprep.subr.mxu0 0.0
    %2158 = vmatpush1.xpose.msra.mxu0 0.0
    %2159 = vmatprep.subr.mxu0 0.0
    %2160 = vmatpush1.xpose.msra.mxu0 %v2127
    %2161 = vmatprep.subr.mxu0 0.0
    %2162 = vmatpush2.xpose.msra.mxu0 0.0
    %2163 = vmatprep.subr.mxu0 0.0
    %2164 = vmatpush2.xpose.msra.mxu0 0.0
    %2165 = vmatprep.subr.mxu0 0.0
    %2166 = vmatpush2.xpose.msra.mxu0 0.0
    %2167 = vmatprep.subr.mxu0 0.0
    %2168 = vmatpush2.xpose.msra.mxu0 0.0
    %2169 = vmatprep.subr.mxu0 0.0
    %2170 = vmatpush2.xpose.msra.mxu0 0.0
    %2171 = vmatprep.subr.mxu0 0.0
    %2172 = vmatpush2.xpose.msra.mxu0 0.0
    %2173 = vmatprep.subr.mxu0 0.0
    %2174 = vmatpush2.xpose.msra.mxu0 0.0
    %2175 = vmatprep.subr.mxu0 0.0
    %2176 = vmatpush2.xpose.msra.mxu0 0.0
    %2177 = vmatprep.subr.mxu0 0.0
    %2178 = vmatpush2.xpose.msra.mxu0 0.0
    %2179 = vmatprep.subr.mxu0 0.0
    %2180 = vmatpush2.xpose.msra.mxu0 0.0
    %2181 = vmatprep.subr.mxu0 0.0
    %2182 = vmatpush2.xpose.msra.mxu0 0.0
    %2183 = vmatprep.subr.mxu0 0.0
    %2184 = vmatpush2.xpose.msra.mxu0 0.0
    %2185 = vmatprep.subr.mxu0 0.0
    %2186 = vmatpush2.xpose.msra.mxu0 0.0
    %2187 = vmatprep.subr.mxu0 0.0
    %2188 = vmatpush2.xpose.msra.mxu0 0.0
    %2189 = vmatprep.subr.mxu0 0.0
    %2190 = vmatpush2.xpose.msra.mxu0 0.0
    %2191 = vmatprep.subr.mxu0 0.0
    %2192 = vmatpush2.xpose.msra.mxu0 0.0
    %2193 = vmatprep.mubr.f32.mxu0 0.0
    %2194 = vmatmul.mubr.f32.gmra.mxu0 %v2125
    %v2195 = vpop.f32.mrf.mxu0
    %v2196 = vadd.f32 0.0, %v2195
    %v2197 = vpop.f32.mrf.mxu0
    %2198 = vdwg.mxu0
    %2199 = vrot.lane.b32.xlu0 %v2111, 96
    %v2200 = vpop.permute.xlu0 %2199
    %v2201 = vsel %vm265, %v2111, 0
    %v2203 = vsel %vm265, %v2200, 0
    %2205 = vmatprep.subr.mxu0 0.0
    %2206 = vmatpush1.xpose.msra.mxu0 0.0
    %2207 = vmatprep.subr.mxu0 0.0
    %2208 = vmatpush1.xpose.msra.mxu0 0.0
    %2209 = vmatprep.subr.mxu0 0.0
    %2210 = vmatpush1.xpose.msra.mxu0 0.0
    %2211 = vmatprep.subr.mxu0 0.0
    %2212 = vmatpush1.xpose.msra.mxu0 0.0
    %2213 = vmatprep.subr.mxu0 0.0
    %2214 = vmatpush1.xpose.msra.mxu0 0.0
    %2215 = vmatprep.subr.mxu0 0.0
    %2216 = vmatpush1.xpose.msra.mxu0 0.0
    %2217 = vmatprep.subr.mxu0 0.0
    %2218 = vmatpush1.xpose.msra.mxu0 0.0
    %2219 = vmatprep.subr.mxu0 0.0
    %2220 = vmatpush1.xpose.msra.mxu0 0.0
    %2221 = vmatprep.subr.mxu0 0.0
    %2222 = vmatpush1.xpose.msra.mxu0 0.0
    %2223 = vmatprep.subr.mxu0 0.0
    %2224 = vmatpush1.xpose.msra.mxu0 0.0
    %2225 = vmatprep.subr.mxu0 0.0
    %2226 = vmatpush1.xpose.msra.mxu0 0.0
    %2227 = vmatprep.subr.mxu0 0.0
    %2228 = vmatpush1.xpose.msra.mxu0 0.0
    %2229 = vmatprep.subr.mxu0 0.0
    %2230 = vmatpush1.xpose.msra.mxu0 0.0
    %2231 = vmatprep.subr.mxu0 0.0
    %2232 = vmatpush1.xpose.msra.mxu0 0.0
    %2233 = vmatprep.subr.mxu0 0.0
    %2234 = vmatpush1.xpose.msra.mxu0 0.0
    %2235 = vmatprep.subr.mxu0 0.0
    %2236 = vmatpush1.xpose.msra.mxu0 %v2203
    %2237 = vmatprep.subr.mxu0 0.0
    %2238 = vmatpush2.xpose.msra.mxu0 0.0
    %2239 = vmatprep.subr.mxu0 0.0
    %2240 = vmatpush2.xpose.msra.mxu0 0.0
    %2241 = vmatprep.subr.mxu0 0.0
    %2242 = vmatpush2.xpose.msra.mxu0 0.0
    %2243 = vmatprep.subr.mxu0 0.0
    %2244 = vmatpush2.xpose.msra.mxu0 0.0
    %2245 = vmatprep.subr.mxu0 0.0
    %2246 = vmatpush2.xpose.msra.mxu0 0.0
    %2247 = vmatprep.subr.mxu0 0.0
    %2248 = vmatpush2.xpose.msra.mxu0 0.0
    %2249 = vmatprep.subr.mxu0 0.0
    %2250 = vmatpush2.xpose.msra.mxu0 0.0
    %2251 = vmatprep.subr.mxu0 0.0
    %2252 = vmatpush2.xpose.msra.mxu0 0.0
    %2253 = vmatprep.subr.mxu0 0.0
    %2254 = vmatpush2.xpose.msra.mxu0 0.0
    %2255 = vmatprep.subr.mxu0 0.0
    %2256 = vmatpush2.xpose.msra.mxu0 0.0
    %2257 = vmatprep.subr.mxu0 0.0
    %2258 = vmatpush2.xpose.msra.mxu0 0.0
    %2259 = vmatprep.subr.mxu0 0.0
    %2260 = vmatpush2.xpose.msra.mxu0 0.0
    %2261 = vmatprep.subr.mxu0 0.0
    %2262 = vmatpush2.xpose.msra.mxu0 0.0
    %2263 = vmatprep.subr.mxu0 0.0
    %2264 = vmatpush2.xpose.msra.mxu0 0.0
    %2265 = vmatprep.subr.mxu0 0.0
    %2266 = vmatpush2.xpose.msra.mxu0 0.0
    %2267 = vmatprep.subr.mxu0 0.0
    %2268 = vmatpush2.xpose.msra.mxu0 0.0
    %2269 = vmatprep.mubr.f32.mxu0 0.0
    %2270 = vmatmul.mubr.f32.gmra.mxu0 %v2201
    %v2271 = vpop.f32.mrf.mxu0
    %v2272 = vadd.f32 0.0, %v2271
    %v2273 = vpop.f32.mrf.mxu0
    %2274 = vdwg.mxu0
    %2275 = vrot.lane.b32.xlu0 %v2113, 96
    %v2276 = vpop.permute.xlu0 %2275
    %v2277 = vsel %vm265, %v2113, 0
    %v2279 = vsel %vm265, %v2276, 0
    %2281 = vmatprep.subr.mxu0 0.0
    %2282 = vmatpush1.xpose.msra.mxu0 0.0
    %2283 = vmatprep.subr.mxu0 0.0
    %2284 = vmatpush1.xpose.msra.mxu0 0.0
    %2285 = vmatprep.subr.mxu0 0.0
    %2286 = vmatpush1.xpose.msra.mxu0 0.0
    %2287 = vmatprep.subr.mxu0 0.0
    %2288 = vmatpush1.xpose.msra.mxu0 0.0
    %2289 = vmatprep.subr.mxu0 0.0
    %2290 = vmatpush1.xpose.msra.mxu0 0.0
    %2291 = vmatprep.subr.mxu0 0.0
    %2292 = vmatpush1.xpose.msra.mxu0 0.0
    %2293 = vmatprep.subr.mxu0 0.0
    %2294 = vmatpush1.xpose.msra.mxu0 0.0
    %2295 = vmatprep.subr.mxu0 0.0
    %2296 = vmatpush1.xpose.msra.mxu0 0.0
    %2297 = vmatprep.subr.mxu0 0.0
    %2298 = vmatpush1.xpose.msra.mxu0 0.0
    %2299 = vmatprep.subr.mxu0 0.0
    %2300 = vmatpush1.xpose.msra.mxu0 0.0
    %2301 = vmatprep.subr.mxu0 0.0
    %2302 = vmatpush1.xpose.msra.mxu0 0.0
    %2303 = vmatprep.subr.mxu0 0.0
    %2304 = vmatpush1.xpose.msra.mxu0 0.0
    %2305 = vmatprep.subr.mxu0 0.0
    %2306 = vmatpush1.xpose.msra.mxu0 0.0
    %2307 = vmatprep.subr.mxu0 0.0
    %2308 = vmatpush1.xpose.msra.mxu0 0.0
    %2309 = vmatprep.subr.mxu0 0.0
    %2310 = vmatpush1.xpose.msra.mxu0 0.0
    %2311 = vmatprep.subr.mxu0 0.0
    %2312 = vmatpush1.xpose.msra.mxu0 %v2279
    %2313 = vmatprep.subr.mxu0 0.0
    %2314 = vmatpush2.xpose.msra.mxu0 0.0
    %2315 = vmatprep.subr.mxu0 0.0
    %2316 = vmatpush2.xpose.msra.mxu0 0.0
    %2317 = vmatprep.subr.mxu0 0.0
    %2318 = vmatpush2.xpose.msra.mxu0 0.0
    %2319 = vmatprep.subr.mxu0 0.0
    %2320 = vmatpush2.xpose.msra.mxu0 0.0
    %2321 = vmatprep.subr.mxu0 0.0
    %2322 = vmatpush2.xpose.msra.mxu0 0.0
    %2323 = vmatprep.subr.mxu0 0.0
    %2324 = vmatpush2.xpose.msra.mxu0 0.0
    %2325 = vmatprep.subr.mxu0 0.0
    %2326 = vmatpush2.xpose.msra.mxu0 0.0
    %2327 = vmatprep.subr.mxu0 0.0
    %2328 = vmatpush2.xpose.msra.mxu0 0.0
    %2329 = vmatprep.subr.mxu0 0.0
    %2330 = vmatpush2.xpose.msra.mxu0 0.0
    %2331 = vmatprep.subr.mxu0 0.0
    %2332 = vmatpush2.xpose.msra.mxu0 0.0
    %2333 = vmatprep.subr.mxu0 0.0
    %2334 = vmatpush2.xpose.msra.mxu0 0.0
    %2335 = vmatprep.subr.mxu0 0.0
    %2336 = vmatpush2.xpose.msra.mxu0 0.0
    %2337 = vmatprep.subr.mxu0 0.0
    %2338 = vmatpush2.xpose.msra.mxu0 0.0
    %2339 = vmatprep.subr.mxu0 0.0
    %2340 = vmatpush2.xpose.msra.mxu0 0.0
    %2341 = vmatprep.subr.mxu0 0.0
    %2342 = vmatpush2.xpose.msra.mxu0 0.0
    %2343 = vmatprep.subr.mxu0 0.0
    %2344 = vmatpush2.xpose.msra.mxu0 0.0
    %2345 = vmatprep.mubr.f32.mxu0 0.0
    %2346 = vmatmul.mubr.f32.gmra.mxu0 %v2277
    %v2347 = vpop.f32.mrf.mxu0
    %v2348 = vadd.f32 0.0, %v2347
    %v2349 = vpop.f32.mrf.mxu0
    %2350 = vdwg.mxu0
    %2351 = vrot.lane.b32.xlu0 %v2115, 96
    %v2352 = vpop.permute.xlu0 %2351
    %v2353 = vsel %vm265, %v2115, 0
    %v2355 = vsel %vm265, %v2352, 0
    %2357 = vmatprep.subr.mxu0 0.0
    %2358 = vmatpush1.xpose.msra.mxu0 0.0
    %2359 = vmatprep.subr.mxu0 0.0
    %2360 = vmatpush1.xpose.msra.mxu0 0.0
    %2361 = vmatprep.subr.mxu0 0.0
    %2362 = vmatpush1.xpose.msra.mxu0 0.0
    %2363 = vmatprep.subr.mxu0 0.0
    %2364 = vmatpush1.xpose.msra.mxu0 0.0
    %2365 = vmatprep.subr.mxu0 0.0
    %2366 = vmatpush1.xpose.msra.mxu0 0.0
    %2367 = vmatprep.subr.mxu0 0.0
    %2368 = vmatpush1.xpose.msra.mxu0 0.0
    %2369 = vmatprep.subr.mxu0 0.0
    %2370 = vmatpush1.xpose.msra.mxu0 0.0
    %2371 = vmatprep.subr.mxu0 0.0
    %2372 = vmatpush1.xpose.msra.mxu0 0.0
    %2373 = vmatprep.subr.mxu0 0.0
    %2374 = vmatpush1.xpose.msra.mxu0 0.0
    %2375 = vmatprep.subr.mxu0 0.0
    %2376 = vmatpush1.xpose.msra.mxu0 0.0
    %2377 = vmatprep.subr.mxu0 0.0
    %2378 = vmatpush1.xpose.msra.mxu0 0.0
    %2379 = vmatprep.subr.mxu0 0.0
    %2380 = vmatpush1.xpose.msra.mxu0 0.0
    %2381 = vmatprep.subr.mxu0 0.0
    %2382 = vmatpush1.xpose.msra.mxu0 0.0
    %2383 = vmatprep.subr.mxu0 0.0
    %2384 = vmatpush1.xpose.msra.mxu0 0.0
    %2385 = vmatprep.subr.mxu0 0.0
    %2386 = vmatpush1.xpose.msra.mxu0 0.0
    %2387 = vmatprep.subr.mxu0 0.0
    %2388 = vmatpush1.xpose.msra.mxu0 %v2355
    %2389 = vmatprep.subr.mxu0 0.0
    %2390 = vmatpush2.xpose.msra.mxu0 0.0
    %2391 = vmatprep.subr.mxu0 0.0
    %2392 = vmatpush2.xpose.msra.mxu0 0.0
    %2393 = vmatprep.subr.mxu0 0.0
    %2394 = vmatpush2.xpose.msra.mxu0 0.0
    %2395 = vmatprep.subr.mxu0 0.0
    %2396 = vmatpush2.xpose.msra.mxu0 0.0
    %2397 = vmatprep.subr.mxu0 0.0
    %2398 = vmatpush2.xpose.msra.mxu0 0.0
    %2399 = vmatprep.subr.mxu0 0.0
    %2400 = vmatpush2.xpose.msra.mxu0 0.0
    %2401 = vmatprep.subr.mxu0 0.0
    %2402 = vmatpush2.xpose.msra.mxu0 0.0
    %2403 = vmatprep.subr.mxu0 0.0
    %2404 = vmatpush2.xpose.msra.mxu0 0.0
    %2405 = vmatprep.subr.mxu0 0.0
    %2406 = vmatpush2.xpose.msra.mxu0 0.0
    %2407 = vmatprep.subr.mxu0 0.0
    %2408 = vmatpush2.xpose.msra.mxu0 0.0
    %2409 = vmatprep.subr.mxu0 0.0
    %2410 = vmatpush2.xpose.msra.mxu0 0.0
    %2411 = vmatprep.subr.mxu0 0.0
    %2412 = vmatpush2.xpose.msra.mxu0 0.0
    %2413 = vmatprep.subr.mxu0 0.0
    %2414 = vmatpush2.xpose.msra.mxu0 0.0
    %2415 = vmatprep.subr.mxu0 0.0
    %2416 = vmatpush2.xpose.msra.mxu0 0.0
    %2417 = vmatprep.subr.mxu0 0.0
    %2418 = vmatpush2.xpose.msra.mxu0 0.0
    %2419 = vmatprep.subr.mxu0 0.0
    %2420 = vmatpush2.xpose.msra.mxu0 0.0
    %2421 = vmatprep.mubr.f32.mxu0 0.0
    %2422 = vmatmul.mubr.f32.gmra.mxu0 %v2353
    %v2423 = vpop.f32.mrf.mxu0
    %v2424 = vadd.f32 0.0, %v2423
    %v2425 = vpop.f32.mrf.mxu0
    %2426 = vdwg.mxu0
    %2427 = vrot.lane.b32.xlu0 %v2106, 96
    %v2428 = vpop.permute.xlu0 %2427
    %v2429 = vsel %vm265, %v2106, 0
    %v2431 = vsel %vm265, %v2428, 0
    %2433 = vmatprep.subr.mxu0 0.0
    %2434 = vmatpush1.xpose.msra.mxu0 0.0
    %2435 = vmatprep.subr.mxu0 0.0
    %2436 = vmatpush1.xpose.msra.mxu0 0.0
    %2437 = vmatprep.subr.mxu0 0.0
    %2438 = vmatpush1.xpose.msra.mxu0 0.0
    %2439 = vmatprep.subr.mxu0 0.0
    %2440 = vmatpush1.xpose.msra.mxu0 0.0
    %2441 = vmatprep.subr.mxu0 0.0
    %2442 = vmatpush1.xpose.msra.mxu0 0.0
    %2443 = vmatprep.subr.mxu0 0.0
    %2444 = vmatpush1.xpose.msra.mxu0 0.0
    %2445 = vmatprep.subr.mxu0 0.0
    %2446 = vmatpush1.xpose.msra.mxu0 0.0
    %2447 = vmatprep.subr.mxu0 0.0
    %2448 = vmatpush1.xpose.msra.mxu0 0.0
    %2449 = vmatprep.subr.mxu0 0.0
    %2450 = vmatpush1.xpose.msra.mxu0 0.0
    %2451 = vmatprep.subr.mxu0 0.0
    %2452 = vmatpush1.xpose.msra.mxu0 0.0
    %2453 = vmatprep.subr.mxu0 0.0
    %2454 = vmatpush1.xpose.msra.mxu0 0.0
    %2455 = vmatprep.subr.mxu0 0.0
    %2456 = vmatpush1.xpose.msra.mxu0 0.0
    %2457 = vmatprep.subr.mxu0 0.0
    %2458 = vmatpush1.xpose.msra.mxu0 0.0
    %2459 = vmatprep.subr.mxu0 0.0
    %2460 = vmatpush1.xpose.msra.mxu0 0.0
    %2461 = vmatprep.subr.mxu0 0.0
    %2462 = vmatpush1.xpose.msra.mxu0 0.0
    %2463 = vmatprep.subr.mxu0 0.0
    %2464 = vmatpush1.xpose.msra.mxu0 %v2431
    %2465 = vmatprep.subr.mxu0 0.0
    %2466 = vmatpush2.xpose.msra.mxu0 0.0
    %2467 = vmatprep.subr.mxu0 0.0
    %2468 = vmatpush2.xpose.msra.mxu0 0.0
    %2469 = vmatprep.subr.mxu0 0.0
    %2470 = vmatpush2.xpose.msra.mxu0 0.0
    %2471 = vmatprep.subr.mxu0 0.0
    %2472 = vmatpush2.xpose.msra.mxu0 0.0
    %2473 = vmatprep.subr.mxu0 0.0
    %2474 = vmatpush2.xpose.msra.mxu0 0.0
    %2475 = vmatprep.subr.mxu0 0.0
    %2476 = vmatpush2.xpose.msra.mxu0 0.0
    %2477 = vmatprep.subr.mxu0 0.0
    %2478 = vmatpush2.xpose.msra.mxu0 0.0
    %2479 = vmatprep.subr.mxu0 0.0
    %2480 = vmatpush2.xpose.msra.mxu0 0.0
    %2481 = vmatprep.subr.mxu0 0.0
    %2482 = vmatpush2.xpose.msra.mxu0 0.0
    %2483 = vmatprep.subr.mxu0 0.0
    %2484 = vmatpush2.xpose.msra.mxu0 0.0
    %2485 = vmatprep.subr.mxu0 0.0
    %2486 = vmatpush2.xpose.msra.mxu0 0.0
    %2487 = vmatprep.subr.mxu0 0.0
    %2488 = vmatpush2.xpose.msra.mxu0 0.0
    %2489 = vmatprep.subr.mxu0 0.0
    %2490 = vmatpush2.xpose.msra.mxu0 0.0
    %2491 = vmatprep.subr.mxu0 0.0
    %2492 = vmatpush2.xpose.msra.mxu0 0.0
    %2493 = vmatprep.subr.mxu0 0.0
    %2494 = vmatpush2.xpose.msra.mxu0 0.0
    %2495 = vmatprep.subr.mxu0 0.0
    %2496 = vmatpush2.xpose.msra.mxu0 0.0
    %2497 = vmatprep.mubr.f32.mxu0 0.0
    %2498 = vmatmul.mubr.f32.gmra.mxu0 %v2429
    %v2499 = vpop.f32.mrf.mxu0
    %v2500 = vadd.f32 0.0, %v2499
    %v2501 = vpop.f32.mrf.mxu0
    %2502 = vdwg.mxu0
    %2503 = vrot.lane.b32.xlu0 %v2118, 96
    %v2504 = vpop.permute.xlu0 %2503
    %v2505 = vsel %vm265, %v2118, 0
    %v2507 = vsel %vm265, %v2504, 0
    %2509 = vmatprep.subr.mxu0 0.0
    %2510 = vmatpush1.xpose.msra.mxu0 0.0
    %2511 = vmatprep.subr.mxu0 0.0
    %2512 = vmatpush1.xpose.msra.mxu0 0.0
    %2513 = vmatprep.subr.mxu0 0.0
    %2514 = vmatpush1.xpose.msra.mxu0 0.0
    %2515 = vmatprep.subr.mxu0 0.0
    %2516 = vmatpush1.xpose.msra.mxu0 0.0
    %2517 = vmatprep.subr.mxu0 0.0
    %2518 = vmatpush1.xpose.msra.mxu0 0.0
    %2519 = vmatprep.subr.mxu0 0.0
    %2520 = vmatpush1.xpose.msra.mxu0 0.0
    %2521 = vmatprep.subr.mxu0 0.0
    %2522 = vmatpush1.xpose.msra.mxu0 0.0
    %2523 = vmatprep.subr.mxu0 0.0
    %2524 = vmatpush1.xpose.msra.mxu0 0.0
    %2525 = vmatprep.subr.mxu0 0.0
    %2526 = vmatpush1.xpose.msra.mxu0 0.0
    %2527 = vmatprep.subr.mxu0 0.0
    %2528 = vmatpush1.xpose.msra.mxu0 0.0
    %2529 = vmatprep.subr.mxu0 0.0
    %2530 = vmatpush1.xpose.msra.mxu0 0.0
    %2531 = vmatprep.subr.mxu0 0.0
    %2532 = vmatpush1.xpose.msra.mxu0 0.0
    %2533 = vmatprep.subr.mxu0 0.0
    %2534 = vmatpush1.xpose.msra.mxu0 0.0
    %2535 = vmatprep.subr.mxu0 0.0
    %2536 = vmatpush1.xpose.msra.mxu0 0.0
    %2537 = vmatprep.subr.mxu0 0.0
    %2538 = vmatpush1.xpose.msra.mxu0 0.0
    %2539 = vmatprep.subr.mxu0 0.0
    %2540 = vmatpush1.xpose.msra.mxu0 %v2507
    %2541 = vmatprep.subr.mxu0 0.0
    %2542 = vmatpush2.xpose.msra.mxu0 0.0
    %2543 = vmatprep.subr.mxu0 0.0
    %2544 = vmatpush2.xpose.msra.mxu0 0.0
    %2545 = vmatprep.subr.mxu0 0.0
    %2546 = vmatpush2.xpose.msra.mxu0 0.0
    %2547 = vmatprep.subr.mxu0 0.0
    %2548 = vmatpush2.xpose.msra.mxu0 0.0
    %2549 = vmatprep.subr.mxu0 0.0
    %2550 = vmatpush2.xpose.msra.mxu0 0.0
    %2551 = vmatprep.subr.mxu0 0.0
    %2552 = vmatpush2.xpose.msra.mxu0 0.0
    %2553 = vmatprep.subr.mxu0 0.0
    %2554 = vmatpush2.xpose.msra.mxu0 0.0
    %2555 = vmatprep.subr.mxu0 0.0
    %2556 = vmatpush2.xpose.msra.mxu0 0.0
    %2557 = vmatprep.subr.mxu0 0.0
    %2558 = vmatpush2.xpose.msra.mxu0 0.0
    %2559 = vmatprep.subr.mxu0 0.0
    %2560 = vmatpush2.xpose.msra.mxu0 0.0
    %2561 = vmatprep.subr.mxu0 0.0
    %2562 = vmatpush2.xpose.msra.mxu0 0.0
    %2563 = vmatprep.subr.mxu0 0.0
    %2564 = vmatpush2.xpose.msra.mxu0 0.0
    %2565 = vmatprep.subr.mxu0 0.0
    %2566 = vmatpush2.xpose.msra.mxu0 0.0
    %2567 = vmatprep.subr.mxu0 0.0
    %2568 = vmatpush2.xpose.msra.mxu0 0.0
    %2569 = vmatprep.subr.mxu0 0.0
    %2570 = vmatpush2.xpose.msra.mxu0 0.0
    %2571 = vmatprep.subr.mxu0 0.0
    %2572 = vmatpush2.xpose.msra.mxu0 0.0
    %2573 = vmatprep.mubr.f32.mxu0 0.0
    %2574 = vmatmul.mubr.f32.gmra.mxu0 %v2505
    %v2575 = vpop.f32.mrf.mxu0
    %v2576 = vadd.f32 0.0, %v2575
    %v2577 = vpop.f32.mrf.mxu0
    %2578 = vdwg.mxu0
    %2579 = vrot.lane.b32.xlu0 %v2120, 96
    %v2580 = vpop.permute.xlu0 %2579
    %v2581 = vsel %vm265, %v2120, 0
    %v2583 = vsel %vm265, %v2580, 0
    %2585 = vmatprep.subr.mxu0 0.0
    %2586 = vmatpush1.xpose.msra.mxu0 0.0
    %2587 = vmatprep.subr.mxu0 0.0
    %2588 = vmatpush1.xpose.msra.mxu0 0.0
    %2589 = vmatprep.subr.mxu0 0.0
    %2590 = vmatpush1.xpose.msra.mxu0 0.0
    %2591 = vmatprep.subr.mxu0 0.0
    %2592 = vmatpush1.xpose.msra.mxu0 0.0
    %2593 = vmatprep.subr.mxu0 0.0
    %2594 = vmatpush1.xpose.msra.mxu0 0.0
    %2595 = vmatprep.subr.mxu0 0.0
    %2596 = vmatpush1.xpose.msra.mxu0 0.0
    %2597 = vmatprep.subr.mxu0 0.0
    %2598 = vmatpush1.xpose.msra.mxu0 0.0
    %2599 = vmatprep.subr.mxu0 0.0
    %2600 = vmatpush1.xpose.msra.mxu0 0.0
    %2601 = vmatprep.subr.mxu0 0.0
    %2602 = vmatpush1.xpose.msra.mxu0 0.0
    %2603 = vmatprep.subr.mxu0 0.0
    %2604 = vmatpush1.xpose.msra.mxu0 0.0
    %2605 = vmatprep.subr.mxu0 0.0
    %2606 = vmatpush1.xpose.msra.mxu0 0.0
    %2607 = vmatprep.subr.mxu0 0.0
    %2608 = vmatpush1.xpose.msra.mxu0 0.0
    %2609 = vmatprep.subr.mxu0 0.0
    %2610 = vmatpush1.xpose.msra.mxu0 0.0
    %2611 = vmatprep.subr.mxu0 0.0
    %2612 = vmatpush1.xpose.msra.mxu0 0.0
    %2613 = vmatprep.subr.mxu0 0.0
    %2614 = vmatpush1.xpose.msra.mxu0 0.0
    %2615 = vmatprep.subr.mxu0 0.0
    %2616 = vmatpush1.xpose.msra.mxu0 %v2583
    %2617 = vmatprep.subr.mxu0 0.0
    %2618 = vmatpush2.xpose.msra.mxu0 0.0
    %2619 = vmatprep.subr.mxu0 0.0
    %2620 = vmatpush2.xpose.msra.mxu0 0.0
    %2621 = vmatprep.subr.mxu0 0.0
    %2622 = vmatpush2.xpose.msra.mxu0 0.0
    %2623 = vmatprep.subr.mxu0 0.0
    %2624 = vmatpush2.xpose.msra.mxu0 0.0
    %2625 = vmatprep.subr.mxu0 0.0
    %2626 = vmatpush2.xpose.msra.mxu0 0.0
    %2627 = vmatprep.subr.mxu0 0.0
    %2628 = vmatpush2.xpose.msra.mxu0 0.0
    %2629 = vmatprep.subr.mxu0 0.0
    %2630 = vmatpush2.xpose.msra.mxu0 0.0
    %2631 = vmatprep.subr.mxu0 0.0
    %2632 = vmatpush2.xpose.msra.mxu0 0.0
    %2633 = vmatprep.subr.mxu0 0.0
    %2634 = vmatpush2.xpose.msra.mxu0 0.0
    %2635 = vmatprep.subr.mxu0 0.0
    %2636 = vmatpush2.xpose.msra.mxu0 0.0
    %2637 = vmatprep.subr.mxu0 0.0
    %2638 = vmatpush2.xpose.msra.mxu0 0.0
    %2639 = vmatprep.subr.mxu0 0.0
    %2640 = vmatpush2.xpose.msra.mxu0 0.0
    %2641 = vmatprep.subr.mxu0 0.0
    %2642 = vmatpush2.xpose.msra.mxu0 0.0
    %2643 = vmatprep.subr.mxu0 0.0
    %2644 = vmatpush2.xpose.msra.mxu0 0.0
    %2645 = vmatprep.subr.mxu0 0.0
    %2646 = vmatpush2.xpose.msra.mxu0 0.0
    %2647 = vmatprep.subr.mxu0 0.0
    %2648 = vmatpush2.xpose.msra.mxu0 0.0
    %2649 = vmatprep.mubr.f32.mxu0 0.0
    %2650 = vmatmul.mubr.f32.gmra.mxu0 %v2581
    %v2651 = vpop.f32.mrf.mxu0
    %v2652 = vadd.f32 0.0, %v2651
    %v2653 = vpop.f32.mrf.mxu0
    %2654 = vdwg.mxu0
    %2655 = vrot.lane.b32.xlu0 %v2122, 96
    %v2656 = vpop.permute.xlu0 %2655
    %v2657 = vsel %vm265, %v2122, 0
    %v2659 = vsel %vm265, %v2656, 0
    %2661 = vmatprep.subr.mxu0 0.0
    %2662 = vmatpush1.xpose.msra.mxu0 0.0
    %2663 = vmatprep.subr.mxu0 0.0
    %2664 = vmatpush1.xpose.msra.mxu0 0.0
    %2665 = vmatprep.subr.mxu0 0.0
    %2666 = vmatpush1.xpose.msra.mxu0 0.0
    %2667 = vmatprep.subr.mxu0 0.0
    %2668 = vmatpush1.xpose.msra.mxu0 0.0
    %2669 = vmatprep.subr.mxu0 0.0
    %2670 = vmatpush1.xpose.msra.mxu0 0.0
    %2671 = vmatprep.subr.mxu0 0.0
    %2672 = vmatpush1.xpose.msra.mxu0 0.0
    %2673 = vmatprep.subr.mxu0 0.0
    %2674 = vmatpush1.xpose.msra.mxu0 0.0
    %2675 = vmatprep.subr.mxu0 0.0
    %2676 = vmatpush1.xpose.msra.mxu0 0.0
    %2677 = vmatprep.subr.mxu0 0.0
    %2678 = vmatpush1.xpose.msra.mxu0 0.0
    %2679 = vmatprep.subr.mxu0 0.0
    %2680 = vmatpush1.xpose.msra.mxu0 0.0
    %2681 = vmatprep.subr.mxu0 0.0
    %2682 = vmatpush1.xpose.msra.mxu0 0.0
    %2683 = vmatprep.subr.mxu0 0.0
    %2684 = vmatpush1.xpose.msra.mxu0 0.0
    %2685 = vmatprep.subr.mxu0 0.0
    %2686 = vmatpush1.xpose.msra.mxu0 0.0
    %2687 = vmatprep.subr.mxu0 0.0
    %2688 = vmatpush1.xpose.msra.mxu0 0.0
    %2689 = vmatprep.subr.mxu0 0.0
    %2690 = vmatpush1.xpose.msra.mxu0 0.0
    %2691 = vmatprep.subr.mxu0 0.0
    %2692 = vmatpush1.xpose.msra.mxu0 %v2659
    %2693 = vmatprep.subr.mxu0 0.0
    %2694 = vmatpush2.xpose.msra.mxu0 0.0
    %2695 = vmatprep.subr.mxu0 0.0
    %2696 = vmatpush2.xpose.msra.mxu0 0.0
    %2697 = vmatprep.subr.mxu0 0.0
    %2698 = vmatpush2.xpose.msra.mxu0 0.0
    %2699 = vmatprep.subr.mxu0 0.0
    %2700 = vmatpush2.xpose.msra.mxu0 0.0
    %2701 = vmatprep.subr.mxu0 0.0
    %2702 = vmatpush2.xpose.msra.mxu0 0.0
    %2703 = vmatprep.subr.mxu0 0.0
    %2704 = vmatpush2.xpose.msra.mxu0 0.0
    %2705 = vmatprep.subr.mxu0 0.0
    %2706 = vmatpush2.xpose.msra.mxu0 0.0
    %2707 = vmatprep.subr.mxu0 0.0
    %2708 = vmatpush2.xpose.msra.mxu0 0.0
    %2709 = vmatprep.subr.mxu0 0.0
    %2710 = vmatpush2.xpose.msra.mxu0 0.0
    %2711 = vmatprep.subr.mxu0 0.0
    %2712 = vmatpush2.xpose.msra.mxu0 0.0
    %2713 = vmatprep.subr.mxu0 0.0
    %2714 = vmatpush2.xpose.msra.mxu0 0.0
    %2715 = vmatprep.subr.mxu0 0.0
    %2716 = vmatpush2.xpose.msra.mxu0 0.0
    %2717 = vmatprep.subr.mxu0 0.0
    %2718 = vmatpush2.xpose.msra.mxu0 0.0
    %2719 = vmatprep.subr.mxu0 0.0
    %2720 = vmatpush2.xpose.msra.mxu0 0.0
    %2721 = vmatprep.subr.mxu0 0.0
    %2722 = vmatpush2.xpose.msra.mxu0 0.0
    %2723 = vmatprep.subr.mxu0 0.0
    %2724 = vmatpush2.xpose.msra.mxu0 0.0
    %2725 = vmatprep.mubr.f32.mxu0 0.0
    %2726 = vmatmul.mubr.f32.gmra.mxu0 %v2657
    %v2727 = vpop.f32.mrf.mxu0
    %v2728 = vadd.f32 0.0, %v2727
    %v2729 = vpop.f32.mrf.mxu0
    %2730 = vdwg.mxu0
    %v2731 = vmul.f32 %v2196, 0.35355338
    %v2732 = vmul.f32 %v2272, 0.35355338
    %v2733 = vmul.f32 %v2348, 0.35355338
    %v2734 = vmul.f32 %v2424, 0.35355338
    %v2735 = vmul.f32 %v2500, 0.35355338
    %v2736 = vmul.f32 %v2576, 0.35355338
    %v2737 = vmul.f32 %v2652, 0.35355338
    %v2738 = vmul.f32 %v2728, 0.35355338
    %v2739 = vadd.f32 %v2731, %v883
    %v2740 = vadd.f32 %v2732, %v883
    %v2741 = vadd.f32 %v2733, %v883
    %v2742 = vadd.f32 %v2734, %v883
    %v2743 = vadd.f32 %v2735, %v887
    %v2744 = vadd.f32 %v2736, %v887
    %v2745 = vadd.f32 %v2737, %v887
    %v2746 = vadd.f32 %v2738, %v887
    %v2747 = vsel %vm265, %v2739, -inf
    %2748 = vmax.xlane.f32.xlu0 %v2747
    %v2749 = vpop.xlane.xlu0 %2748
    %v2750 = vsel %vm265, %v2740, -inf
    %2751 = vmax.xlane.f32.xlu0 %v2750
    %v2752 = vpop.xlane.xlu0 %2751
    %v2753 = vsel %vm265, %v2741, -inf
    %2754 = vmax.xlane.f32.xlu0 %v2753
    %v2755 = vpop.xlane.xlu0 %2754
    %v2756 = vsel %vm265, %v2742, -inf
    %2757 = vmax.xlane.f32.xlu0 %v2756
    %v2758 = vpop.xlane.xlu0 %2757
    %v2759 = vsel %vm265, %v2743, -inf
    %2760 = vmax.xlane.f32.xlu0 %v2759
    %v2761 = vpop.xlane.xlu0 %2760
    %v2762 = vsel %vm265, %v2744, -inf
    %2763 = vmax.xlane.f32.xlu0 %v2762
    %v2764 = vpop.xlane.xlu0 %2763
    %v2765 = vsel %vm265, %v2745, -inf
    %2766 = vmax.xlane.f32.xlu0 %v2765
    %v2767 = vpop.xlane.xlu0 %2766
    %v2768 = vsel %vm265, %v2746, -inf
    %2769 = vmax.xlane.f32.xlu0 %v2768
    %v2770 = vpop.xlane.xlu0 %2769
    %v2771 = vsub.f32 %v2739, %v2749
    %v2772 = vsub.f32 %v2740, %v2752
    %v2773 = vsub.f32 %v2741, %v2755
    %v2774 = vsub.f32 %v2742, %v2758
    %v2775 = vsub.f32 %v2743, %v2761
    %v2776 = vsub.f32 %v2744, %v2764
    %v2777 = vsub.f32 %v2745, %v2767
    %v2778 = vsub.f32 %v2746, %v2770
    %v2779 = vmul.f32 %v2771, 1.442695
    %v2780 = vpow.pop %v2779
    %v2781 = vmul.f32 %v2772, 1.442695
    %v2782 = vpow.pop %v2781
    %v2783 = vmul.f32 %v2773, 1.442695
    %v2784 = vpow.pop %v2783
    %v2785 = vmul.f32 %v2774, 1.442695
    %v2786 = vpow.pop %v2785
    %v2787 = vmul.f32 %v2775, 1.442695
    %v2788 = vpow.pop %v2787
    %v2789 = vmul.f32 %v2776, 1.442695
    %v2790 = vpow.pop %v2789
    %v2791 = vmul.f32 %v2777, 1.442695
    %v2792 = vpow.pop %v2791
    %v2793 = vmul.f32 %v2778, 1.442695
    %v2794 = vpow.pop %v2793
    %v2795 = vsel %vm265, %v2780, 0.0
    %2796 = vadd.xlane.f32.xlu0 %v2795
    %v2797 = vpop.xlane.xlu0 %2796
    %v2798 = vsel %vm265, %v2782, 0.0
    %2799 = vadd.xlane.f32.xlu0 %v2798
    %v2800 = vpop.xlane.xlu0 %2799
    %v2801 = vsel %vm265, %v2784, 0.0
    %2802 = vadd.xlane.f32.xlu0 %v2801
    %v2803 = vpop.xlane.xlu0 %2802
    %v2804 = vsel %vm265, %v2786, 0.0
    %2805 = vadd.xlane.f32.xlu0 %v2804
    %v2806 = vpop.xlane.xlu0 %2805
    %v2807 = vsel %vm265, %v2788, 0.0
    %2808 = vadd.xlane.f32.xlu0 %v2807
    %v2809 = vpop.xlane.xlu0 %2808
    %v2810 = vsel %vm265, %v2790, 0.0
    %2811 = vadd.xlane.f32.xlu0 %v2810
    %v2812 = vpop.xlane.xlu0 %2811
    %v2813 = vsel %vm265, %v2792, 0.0
    %2814 = vadd.xlane.f32.xlu0 %v2813
    %v2815 = vpop.xlane.xlu0 %2814
    %v2816 = vsel %vm265, %v2794, 0.0
    %2817 = vadd.xlane.f32.xlu0 %v2816
    %v2818 = vpop.xlane.xlu0 %2817
    %v2819 = vrcp.pop %v2797
    %v2820 = vrcp.pop %v2800
    %v2821 = vrcp.pop %v2803
    %v2822 = vrcp.pop %v2806
    %v2823 = vrcp.pop %v2809
    %v2824 = vrcp.pop %v2812
    %v2825 = vrcp.pop %v2815
    %v2826 = vrcp.pop %v2818
    %v2827 = vmul.f32 %v2780, %v2819
    %v2828 = vmul.f32 %v2782, %v2820
    %v2829 = vmul.f32 %v2784, %v2821
    %v2830 = vmul.f32 %v2786, %v2822
    %v2831 = vmul.f32 %v2788, %v2823
    %v2832 = vmul.f32 %v2790, %v2824
    %v2833 = vmul.f32 %v2792, %v2825
    %v2834 = vmul.f32 %v2794, %v2826
    %2835 = vrot.lane.b32.xlu0 %v2101, 64
    %v2836 = vpop.permute.xlu0 %2835
    %v2839 = vsel %vm265, %v2827, 0
    %2841 = vmatprep.subr.mxu0 0.0
    %2842 = vmatpush1.msra.mxu0 0.0
    %2843 = vmatprep.subr.mxu0 0.0
    %2844 = vmatpush1.msra.mxu0 0.0
    %2845 = vmatprep.subr.mxu0 0.0
    %2846 = vmatpush1.msra.mxu0 0.0
    %2847 = vmatprep.subr.mxu0 0.0
    %2848 = vmatpush1.msra.mxu0 0.0
    %2849 = vmatprep.subr.mxu0 0.0
    %2850 = vmatpush1.msra.mxu0 0.0
    %2851 = vmatprep.subr.mxu0 0.0
    %2852 = vmatpush1.msra.mxu0 0.0
    %2853 = vmatprep.subr.mxu0 0.0
    %2854 = vmatpush1.msra.mxu0 0.0
    %2855 = vmatprep.subr.mxu0 0.0
    %2856 = vmatpush1.msra.mxu0 0.0
    %2857 = vmatprep.subr.mxu0 0.0
    %2858 = vmatpush1.msra.mxu0 0.0
    %2859 = vmatprep.subr.mxu0 0.0
    %2860 = vmatpush1.msra.mxu0 0.0
    %2861 = vmatprep.subr.mxu0 0.0
    %2862 = vmatpush1.msra.mxu0 0.0
    %2863 = vmatprep.subr.mxu0 0.0
    %2864 = vmatpush1.msra.mxu0 0.0
    %2865 = vmatprep.subr.mxu0 0.0
    %2866 = vmatpush1.msra.mxu0 0.0
    %2867 = vmatprep.subr.mxu0 0.0
    %2868 = vmatpush1.msra.mxu0 0.0
    %2869 = vmatprep.subr.mxu0 0.0
    %2870 = vmatpush1.msra.mxu0 0.0
    %2871 = vmatprep.subr.mxu0 0.0
    %2872 = vmatpush1.msra.mxu0 %v2836
    %2873 = vmatprep.subr.mxu0 0.0
    %2874 = vmatpush2.msra.mxu0 0.0
    %2875 = vmatprep.subr.mxu0 0.0
    %2876 = vmatpush2.msra.mxu0 0.0
    %2877 = vmatprep.subr.mxu0 0.0
    %2878 = vmatpush2.msra.mxu0 0.0
    %2879 = vmatprep.subr.mxu0 0.0
    %2880 = vmatpush2.msra.mxu0 0.0
    %2881 = vmatprep.subr.mxu0 0.0
    %2882 = vmatpush2.msra.mxu0 0.0
    %2883 = vmatprep.subr.mxu0 0.0
    %2884 = vmatpush2.msra.mxu0 0.0
    %2885 = vmatprep.subr.mxu0 0.0
    %2886 = vmatpush2.msra.mxu0 0.0
    %2887 = vmatprep.subr.mxu0 0.0
    %2888 = vmatpush2.msra.mxu0 0.0
    %2889 = vmatprep.subr.mxu0 0.0
    %2890 = vmatpush2.msra.mxu0 0.0
    %2891 = vmatprep.subr.mxu0 0.0
    %2892 = vmatpush2.msra.mxu0 0.0
    %2893 = vmatprep.subr.mxu0 0.0
    %2894 = vmatpush2.msra.mxu0 0.0
    %2895 = vmatprep.subr.mxu0 0.0
    %2896 = vmatpush2.msra.mxu0 0.0
    %2897 = vmatprep.subr.mxu0 0.0
    %2898 = vmatpush2.msra.mxu0 0.0
    %2899 = vmatprep.subr.mxu0 0.0
    %2900 = vmatpush2.msra.mxu0 0.0
    %2901 = vmatprep.subr.mxu0 0.0
    %2902 = vmatpush2.msra.mxu0 0.0
    %2903 = vmatprep.subr.mxu0 0.0
    %2904 = vmatpush2.msra.mxu0 0.0
    %2905 = vmatprep.mubr.f32.mxu0 0.0
    %2906 = vmatmul.mubr.f32.gmra.mxu0 %v2839
    %v2907 = vpop.f32.mrf.mxu0
    %v2908 = vadd.f32 0.0, %v2907
    %v2909 = vpop.f32.mrf.mxu0
    %2910 = vdwg.mxu0
    %2911 = vrot.lane.b32.xlu0 %v2111, 64
    %v2912 = vpop.permute.xlu0 %2911
    %v2915 = vsel %vm265, %v2828, 0
    %2917 = vmatprep.subr.mxu0 0.0
    %2918 = vmatpush1.msra.mxu0 0.0
    %2919 = vmatprep.subr.mxu0 0.0
    %2920 = vmatpush1.msra.mxu0 0.0
    %2921 = vmatprep.subr.mxu0 0.0
    %2922 = vmatpush1.msra.mxu0 0.0
    %2923 = vmatprep.subr.mxu0 0.0
    %2924 = vmatpush1.msra.mxu0 0.0
    %2925 = vmatprep.subr.mxu0 0.0
    %2926 = vmatpush1.msra.mxu0 0.0
    %2927 = vmatprep.subr.mxu0 0.0
    %2928 = vmatpush1.msra.mxu0 0.0
    %2929 = vmatprep.subr.mxu0 0.0
    %2930 = vmatpush1.msra.mxu0 0.0
    %2931 = vmatprep.subr.mxu0 0.0
    %2932 = vmatpush1.msra.mxu0 0.0
    %2933 = vmatprep.subr.mxu0 0.0
    %2934 = vmatpush1.msra.mxu0 0.0
    %2935 = vmatprep.subr.mxu0 0.0
    %2936 = vmatpush1.msra.mxu0 0.0
    %2937 = vmatprep.subr.mxu0 0.0
    %2938 = vmatpush1.msra.mxu0 0.0
    %2939 = vmatprep.subr.mxu0 0.0
    %2940 = vmatpush1.msra.mxu0 0.0
    %2941 = vmatprep.subr.mxu0 0.0
    %2942 = vmatpush1.msra.mxu0 0.0
    %2943 = vmatprep.subr.mxu0 0.0
    %2944 = vmatpush1.msra.mxu0 0.0
    %2945 = vmatprep.subr.mxu0 0.0
    %2946 = vmatpush1.msra.mxu0 0.0
    %2947 = vmatprep.subr.mxu0 0.0
    %2948 = vmatpush1.msra.mxu0 %v2912
    %2949 = vmatprep.subr.mxu0 0.0
    %2950 = vmatpush2.msra.mxu0 0.0
    %2951 = vmatprep.subr.mxu0 0.0
    %2952 = vmatpush2.msra.mxu0 0.0
    %2953 = vmatprep.subr.mxu0 0.0
    %2954 = vmatpush2.msra.mxu0 0.0
    %2955 = vmatprep.subr.mxu0 0.0
    %2956 = vmatpush2.msra.mxu0 0.0
    %2957 = vmatprep.subr.mxu0 0.0
    %2958 = vmatpush2.msra.mxu0 0.0
    %2959 = vmatprep.subr.mxu0 0.0
    %2960 = vmatpush2.msra.mxu0 0.0
    %2961 = vmatprep.subr.mxu0 0.0
    %2962 = vmatpush2.msra.mxu0 0.0
    %2963 = vmatprep.subr.mxu0 0.0
    %2964 = vmatpush2.msra.mxu0 0.0
    %2965 = vmatprep.subr.mxu0 0.0
    %2966 = vmatpush2.msra.mxu0 0.0
    %2967 = vmatprep.subr.mxu0 0.0
    %2968 = vmatpush2.msra.mxu0 0.0
    %2969 = vmatprep.subr.mxu0 0.0
    %2970 = vmatpush2.msra.mxu0 0.0
    %2971 = vmatprep.subr.mxu0 0.0
    %2972 = vmatpush2.msra.mxu0 0.0
    %2973 = vmatprep.subr.mxu0 0.0
    %2974 = vmatpush2.msra.mxu0 0.0
    %2975 = vmatprep.subr.mxu0 0.0
    %2976 = vmatpush2.msra.mxu0 0.0
    %2977 = vmatprep.subr.mxu0 0.0
    %2978 = vmatpush2.msra.mxu0 0.0
    %2979 = vmatprep.subr.mxu0 0.0
    %2980 = vmatpush2.msra.mxu0 0.0
    %2981 = vmatprep.mubr.f32.mxu0 0.0
    %2982 = vmatmul.mubr.f32.gmra.mxu0 %v2915
    %v2983 = vpop.f32.mrf.mxu0
    %v2984 = vadd.f32 0.0, %v2983
    %v2985 = vpop.f32.mrf.mxu0
    %2986 = vdwg.mxu0
    %2987 = vrot.lane.b32.xlu0 %v2113, 64
    %v2988 = vpop.permute.xlu0 %2987
    %v2991 = vsel %vm265, %v2829, 0
    %2993 = vmatprep.subr.mxu0 0.0
    %2994 = vmatpush1.msra.mxu0 0.0
    %2995 = vmatprep.subr.mxu0 0.0
    %2996 = vmatpush1.msra.mxu0 0.0
    %2997 = vmatprep.subr.mxu0 0.0
    %2998 = vmatpush1.msra.mxu0 0.0
    %2999 = vmatprep.subr.mxu0 0.0
    %3000 = vmatpush1.msra.mxu0 0.0
    %3001 = vmatprep.subr.mxu0 0.0
    %3002 = vmatpush1.msra.mxu0 0.0
    %3003 = vmatprep.subr.mxu0 0.0
    %3004 = vmatpush1.msra.mxu0 0.0
    %3005 = vmatprep.subr.mxu0 0.0
    %3006 = vmatpush1.msra.mxu0 0.0
    %3007 = vmatprep.subr.mxu0 0.0
    %3008 = vmatpush1.msra.mxu0 0.0
    %3009 = vmatprep.subr.mxu0 0.0
    %3010 = vmatpush1.msra.mxu0 0.0
    %3011 = vmatprep.subr.mxu0 0.0
    %3012 = vmatpush1.msra.mxu0 0.0
    %3013 = vmatprep.subr.mxu0 0.0
    %3014 = vmatpush1.msra.mxu0 0.0
    %3015 = vmatprep.subr.mxu0 0.0
    %3016 = vmatpush1.msra.mxu0 0.0
    %3017 = vmatprep.subr.mxu0 0.0
    %3018 = vmatpush1.msra.mxu0 0.0
    %3019 = vmatprep.subr.mxu0 0.0
    %3020 = vmatpush1.msra.mxu0 0.0
    %3021 = vmatprep.subr.mxu0 0.0
    %3022 = vmatpush1.msra.mxu0 0.0
    %3023 = vmatprep.subr.mxu0 0.0
    %3024 = vmatpush1.msra.mxu0 %v2988
    %3025 = vmatprep.subr.mxu0 0.0
    %3026 = vmatpush2.msra.mxu0 0.0
    %3027 = vmatprep.subr.mxu0 0.0
    %3028 = vmatpush2.msra.mxu0 0.0
    %3029 = vmatprep.subr.mxu0 0.0
    %3030 = vmatpush2.msra.mxu0 0.0
    %3031 = vmatprep.subr.mxu0 0.0
    %3032 = vmatpush2.msra.mxu0 0.0
    %3033 = vmatprep.subr.mxu0 0.0
    %3034 = vmatpush2.msra.mxu0 0.0
    %3035 = vmatprep.subr.mxu0 0.0
    %3036 = vmatpush2.msra.mxu0 0.0
    %3037 = vmatprep.subr.mxu0 0.0
    %3038 = vmatpush2.msra.mxu0 0.0
    %3039 = vmatprep.subr.mxu0 0.0
    %3040 = vmatpush2.msra.mxu0 0.0
    %3041 = vmatprep.subr.mxu0 0.0
    %3042 = vmatpush2.msra.mxu0 0.0
    %3043 = vmatprep.subr.mxu0 0.0
    %3044 = vmatpush2.msra.mxu0 0.0
    %3045 = vmatprep.subr.mxu0 0.0
    %3046 = vmatpush2.msra.mxu0 0.0
    %3047 = vmatprep.subr.mxu0 0.0
    %3048 = vmatpush2.msra.mxu0 0.0
    %3049 = vmatprep.subr.mxu0 0.0
    %3050 = vmatpush2.msra.mxu0 0.0
    %3051 = vmatprep.subr.mxu0 0.0
    %3052 = vmatpush2.msra.mxu0 0.0
    %3053 = vmatprep.subr.mxu0 0.0
    %3054 = vmatpush2.msra.mxu0 0.0
    %3055 = vmatprep.subr.mxu0 0.0
    %3056 = vmatpush2.msra.mxu0 0.0
    %3057 = vmatprep.mubr.f32.mxu0 0.0
    %3058 = vmatmul.mubr.f32.gmra.mxu0 %v2991
    %v3059 = vpop.f32.mrf.mxu0
    %v3060 = vadd.f32 0.0, %v3059
    %v3061 = vpop.f32.mrf.mxu0
    %3062 = vdwg.mxu0
    %3063 = vrot.lane.b32.xlu0 %v2115, 64
    %v3064 = vpop.permute.xlu0 %3063
    %v3067 = vsel %vm265, %v2830, 0
    %3069 = vmatprep.subr.mxu0 0.0
    %3070 = vmatpush1.msra.mxu0 0.0
    %3071 = vmatprep.subr.mxu0 0.0
    %3072 = vmatpush1.msra.mxu0 0.0
    %3073 = vmatprep.subr.mxu0 0.0
    %3074 = vmatpush1.msra.mxu0 0.0
    %3075 = vmatprep.subr.mxu0 0.0
    %3076 = vmatpush1.msra.mxu0 0.0
    %3077 = vmatprep.subr.mxu0 0.0
    %3078 = vmatpush1.msra.mxu0 0.0
    %3079 = vmatprep.subr.mxu0 0.0
    %3080 = vmatpush1.msra.mxu0 0.0
    %3081 = vmatprep.subr.mxu0 0.0
    %3082 = vmatpush1.msra.mxu0 0.0
    %3083 = vmatprep.subr.mxu0 0.0
    %3084 = vmatpush1.msra.mxu0 0.0
    %3085 = vmatprep.subr.mxu0 0.0
    %3086 = vmatpush1.msra.mxu0 0.0
    %3087 = vmatprep.subr.mxu0 0.0
    %3088 = vmatpush1.msra.mxu0 0.0
    %3089 = vmatprep.subr.mxu0 0.0
    %3090 = vmatpush1.msra.mxu0 0.0
    %3091 = vmatprep.subr.mxu0 0.0
    %3092 = vmatpush1.msra.mxu0 0.0
    %3093 = vmatprep.subr.mxu0 0.0
    %3094 = vmatpush1.msra.mxu0 0.0
    %3095 = vmatprep.subr.mxu0 0.0
    %3096 = vmatpush1.msra.mxu0 0.0
    %3097 = vmatprep.subr.mxu0 0.0
    %3098 = vmatpush1.msra.mxu0 0.0
    %3099 = vmatprep.subr.mxu0 0.0
    %3100 = vmatpush1.msra.mxu0 %v3064
    %3101 = vmatprep.subr.mxu0 0.0
    %3102 = vmatpush2.msra.mxu0 0.0
    %3103 = vmatprep.subr.mxu0 0.0
    %3104 = vmatpush2.msra.mxu0 0.0
    %3105 = vmatprep.subr.mxu0 0.0
    %3106 = vmatpush2.msra.mxu0 0.0
    %3107 = vmatprep.subr.mxu0 0.0
    %3108 = vmatpush2.msra.mxu0 0.0
    %3109 = vmatprep.subr.mxu0 0.0
    %3110 = vmatpush2.msra.mxu0 0.0
    %3111 = vmatprep.subr.mxu0 0.0
    %3112 = vmatpush2.msra.mxu0 0.0
    %3113 = vmatprep.subr.mxu0 0.0
    %3114 = vmatpush2.msra.mxu0 0.0
    %3115 = vmatprep.subr.mxu0 0.0
    %3116 = vmatpush2.msra.mxu0 0.0
    %3117 = vmatprep.subr.mxu0 0.0
    %3118 = vmatpush2.msra.mxu0 0.0
    %3119 = vmatprep.subr.mxu0 0.0
    %3120 = vmatpush2.msra.mxu0 0.0
    %3121 = vmatprep.subr.mxu0 0.0
    %3122 = vmatpush2.msra.mxu0 0.0
    %3123 = vmatprep.subr.mxu0 0.0
    %3124 = vmatpush2.msra.mxu0 0.0
    %3125 = vmatprep.subr.mxu0 0.0
    %3126 = vmatpush2.msra.mxu0 0.0
    %3127 = vmatprep.subr.mxu0 0.0
    %3128 = vmatpush2.msra.mxu0 0.0
    %3129 = vmatprep.subr.mxu0 0.0
    %3130 = vmatpush2.msra.mxu0 0.0
    %3131 = vmatprep.subr.mxu0 0.0
    %3132 = vmatpush2.msra.mxu0 0.0
    %3133 = vmatprep.mubr.f32.mxu0 0.0
    %3134 = vmatmul.mubr.f32.gmra.mxu0 %v3067
    %v3135 = vpop.f32.mrf.mxu0
    %v3136 = vadd.f32 0.0, %v3135
    %v3137 = vpop.f32.mrf.mxu0
    %3138 = vdwg.mxu0
    %3139 = vrot.lane.b32.xlu0 %v2106, 64
    %v3140 = vpop.permute.xlu0 %3139
    %v3143 = vsel %vm265, %v2831, 0
    %3145 = vmatprep.subr.mxu0 0.0
    %3146 = vmatpush1.msra.mxu0 0.0
    %3147 = vmatprep.subr.mxu0 0.0
    %3148 = vmatpush1.msra.mxu0 0.0
    %3149 = vmatprep.subr.mxu0 0.0
    %3150 = vmatpush1.msra.mxu0 0.0
    %3151 = vmatprep.subr.mxu0 0.0
    %3152 = vmatpush1.msra.mxu0 0.0
    %3153 = vmatprep.subr.mxu0 0.0
    %3154 = vmatpush1.msra.mxu0 0.0
    %3155 = vmatprep.subr.mxu0 0.0
    %3156 = vmatpush1.msra.mxu0 0.0
    %3157 = vmatprep.subr.mxu0 0.0
    %3158 = vmatpush1.msra.mxu0 0.0
    %3159 = vmatprep.subr.mxu0 0.0
    %3160 = vmatpush1.msra.mxu0 0.0
    %3161 = vmatprep.subr.mxu0 0.0
    %3162 = vmatpush1.msra.mxu0 0.0
    %3163 = vmatprep.subr.mxu0 0.0
    %3164 = vmatpush1.msra.mxu0 0.0
    %3165 = vmatprep.subr.mxu0 0.0
    %3166 = vmatpush1.msra.mxu0 0.0
    %3167 = vmatprep.subr.mxu0 0.0
    %3168 = vmatpush1.msra.mxu0 0.0
    %3169 = vmatprep.subr.mxu0 0.0
    %3170 = vmatpush1.msra.mxu0 0.0
    %3171 = vmatprep.subr.mxu0 0.0
    %3172 = vmatpush1.msra.mxu0 0.0
    %3173 = vmatprep.subr.mxu0 0.0
    %3174 = vmatpush1.msra.mxu0 0.0
    %3175 = vmatprep.subr.mxu0 0.0
    %3176 = vmatpush1.msra.mxu0 %v3140
    %3177 = vmatprep.subr.mxu0 0.0
    %3178 = vmatpush2.msra.mxu0 0.0
    %3179 = vmatprep.subr.mxu0 0.0
    %3180 = vmatpush2.msra.mxu0 0.0
    %3181 = vmatprep.subr.mxu0 0.0
    %3182 = vmatpush2.msra.mxu0 0.0
    %3183 = vmatprep.subr.mxu0 0.0
    %3184 = vmatpush2.msra.mxu0 0.0
    %3185 = vmatprep.subr.mxu0 0.0
    %3186 = vmatpush2.msra.mxu0 0.0
    %3187 = vmatprep.subr.mxu0 0.0
    %3188 = vmatpush2.msra.mxu0 0.0
    %3189 = vmatprep.subr.mxu0 0.0
    %3190 = vmatpush2.msra.mxu0 0.0
    %3191 = vmatprep.subr.mxu0 0.0
    %3192 = vmatpush2.msra.mxu0 0.0
    %3193 = vmatprep.subr.mxu0 0.0
    %3194 = vmatpush2.msra.mxu0 0.0
    %3195 = vmatprep.subr.mxu0 0.0
    %3196 = vmatpush2.msra.mxu0 0.0
    %3197 = vmatprep.subr.mxu0 0.0
    %3198 = vmatpush2.msra.mxu0 0.0
    %3199 = vmatprep.subr.mxu0 0.0
    %3200 = vmatpush2.msra.mxu0 0.0
    %3201 = vmatprep.subr.mxu0 0.0
    %3202 = vmatpush2.msra.mxu0 0.0
    %3203 = vmatprep.subr.mxu0 0.0
    %3204 = vmatpush2.msra.mxu0 0.0
    %3205 = vmatprep.subr.mxu0 0.0
    %3206 = vmatpush2.msra.mxu0 0.0
    %3207 = vmatprep.subr.mxu0 0.0
    %3208 = vmatpush2.msra.mxu0 0.0
    %3209 = vmatprep.mubr.f32.mxu0 0.0
    %3210 = vmatmul.mubr.f32.gmra.mxu0 %v3143
    %v3211 = vpop.f32.mrf.mxu0
    %v3212 = vadd.f32 0.0, %v3211
    %v3213 = vpop.f32.mrf.mxu0
    %3214 = vdwg.mxu0
    %3215 = vrot.lane.b32.xlu0 %v2118, 64
    %v3216 = vpop.permute.xlu0 %3215
    %v3219 = vsel %vm265, %v2832, 0
    %3221 = vmatprep.subr.mxu0 0.0
    %3222 = vmatpush1.msra.mxu0 0.0
    %3223 = vmatprep.subr.mxu0 0.0
    %3224 = vmatpush1.msra.mxu0 0.0
    %3225 = vmatprep.subr.mxu0 0.0
    %3226 = vmatpush1.msra.mxu0 0.0
    %3227 = vmatprep.subr.mxu0 0.0
    %3228 = vmatpush1.msra.mxu0 0.0
    %3229 = vmatprep.subr.mxu0 0.0
    %3230 = vmatpush1.msra.mxu0 0.0
    %3231 = vmatprep.subr.mxu0 0.0
    %3232 = vmatpush1.msra.mxu0 0.0
    %3233 = vmatprep.subr.mxu0 0.0
    %3234 = vmatpush1.msra.mxu0 0.0
    %3235 = vmatprep.subr.mxu0 0.0
    %3236 = vmatpush1.msra.mxu0 0.0
    %3237 = vmatprep.subr.mxu0 0.0
    %3238 = vmatpush1.msra.mxu0 0.0
    %3239 = vmatprep.subr.mxu0 0.0
    %3240 = vmatpush1.msra.mxu0 0.0
    %3241 = vmatprep.subr.mxu0 0.0
    %3242 = vmatpush1.msra.mxu0 0.0
    %3243 = vmatprep.subr.mxu0 0.0
    %3244 = vmatpush1.msra.mxu0 0.0
    %3245 = vmatprep.subr.mxu0 0.0
    %3246 = vmatpush1.msra.mxu0 0.0
    %3247 = vmatprep.subr.mxu0 0.0
    %3248 = vmatpush1.msra.mxu0 0.0
    %3249 = vmatprep.subr.mxu0 0.0
    %3250 = vmatpush1.msra.mxu0 0.0
    %3251 = vmatprep.subr.mxu0 0.0
    %3252 = vmatpush1.msra.mxu0 %v3216
    %3253 = vmatprep.subr.mxu0 0.0
    %3254 = vmatpush2.msra.mxu0 0.0
    %3255 = vmatprep.subr.mxu0 0.0
    %3256 = vmatpush2.msra.mxu0 0.0
    %3257 = vmatprep.subr.mxu0 0.0
    %3258 = vmatpush2.msra.mxu0 0.0
    %3259 = vmatprep.subr.mxu0 0.0
    %3260 = vmatpush2.msra.mxu0 0.0
    %3261 = vmatprep.subr.mxu0 0.0
    %3262 = vmatpush2.msra.mxu0 0.0
    %3263 = vmatprep.subr.mxu0 0.0
    %3264 = vmatpush2.msra.mxu0 0.0
    %3265 = vmatprep.subr.mxu0 0.0
    %3266 = vmatpush2.msra.mxu0 0.0
    %3267 = vmatprep.subr.mxu0 0.0
    %3268 = vmatpush2.msra.mxu0 0.0
    %3269 = vmatprep.subr.mxu0 0.0
    %3270 = vmatpush2.msra.mxu0 0.0
    %3271 = vmatprep.subr.mxu0 0.0
    %3272 = vmatpush2.msra.mxu0 0.0
    %3273 = vmatprep.subr.mxu0 0.0
    %3274 = vmatpush2.msra.mxu0 0.0
    %3275 = vmatprep.subr.mxu0 0.0
    %3276 = vmatpush2.msra.mxu0 0.0
    %3277 = vmatprep.subr.mxu0 0.0
    %3278 = vmatpush2.msra.mxu0 0.0
    %3279 = vmatprep.subr.mxu0 0.0
    %3280 = vmatpush2.msra.mxu0 0.0
    %3281 = vmatprep.subr.mxu0 0.0
    %3282 = vmatpush2.msra.mxu0 0.0
    %3283 = vmatprep.subr.mxu0 0.0
    %3284 = vmatpush2.msra.mxu0 0.0
    %3285 = vmatprep.mubr.f32.mxu0 0.0
    %3286 = vmatmul.mubr.f32.gmra.mxu0 %v3219
    %v3287 = vpop.f32.mrf.mxu0
    %v3288 = vadd.f32 0.0, %v3287
    %v3289 = vpop.f32.mrf.mxu0
    %3290 = vdwg.mxu0
    %3291 = vrot.lane.b32.xlu0 %v2120, 64
    %v3292 = vpop.permute.xlu0 %3291
    %v3295 = vsel %vm265, %v2833, 0
    %3297 = vmatprep.subr.mxu0 0.0
    %3298 = vmatpush1.msra.mxu0 0.0
    %3299 = vmatprep.subr.mxu0 0.0
    %3300 = vmatpush1.msra.mxu0 0.0
    %3301 = vmatprep.subr.mxu0 0.0
    %3302 = vmatpush1.msra.mxu0 0.0
    %3303 = vmatprep.subr.mxu0 0.0
    %3304 = vmatpush1.msra.mxu0 0.0
    %3305 = vmatprep.subr.mxu0 0.0
    %3306 = vmatpush1.msra.mxu0 0.0
    %3307 = vmatprep.subr.mxu0 0.0
    %3308 = vmatpush1.msra.mxu0 0.0
    %3309 = vmatprep.subr.mxu0 0.0
    %3310 = vmatpush1.msra.mxu0 0.0
    %3311 = vmatprep.subr.mxu0 0.0
    %3312 = vmatpush1.msra.mxu0 0.0
    %3313 = vmatprep.subr.mxu0 0.0
    %3314 = vmatpush1.msra.mxu0 0.0
    %3315 = vmatprep.subr.mxu0 0.0
    %3316 = vmatpush1.msra.mxu0 0.0
    %3317 = vmatprep.subr.mxu0 0.0
    %3318 = vmatpush1.msra.mxu0 0.0
    %3319 = vmatprep.subr.mxu0 0.0
    %3320 = vmatpush1.msra.mxu0 0.0
    %3321 = vmatprep.subr.mxu0 0.0
    %3322 = vmatpush1.msra.mxu0 0.0
    %3323 = vmatprep.subr.mxu0 0.0
    %3324 = vmatpush1.msra.mxu0 0.0
    %3325 = vmatprep.subr.mxu0 0.0
    %3326 = vmatpush1.msra.mxu0 0.0
    %3327 = vmatprep.subr.mxu0 0.0
    %3328 = vmatpush1.msra.mxu0 %v3292
    %3329 = vmatprep.subr.mxu0 0.0
    %3330 = vmatpush2.msra.mxu0 0.0
    %3331 = vmatprep.subr.mxu0 0.0
    %3332 = vmatpush2.msra.mxu0 0.0
    %3333 = vmatprep.subr.mxu0 0.0
    %3334 = vmatpush2.msra.mxu0 0.0
    %3335 = vmatprep.subr.mxu0 0.0
    %3336 = vmatpush2.msra.mxu0 0.0
    %3337 = vmatprep.subr.mxu0 0.0
    %3338 = vmatpush2.msra.mxu0 0.0
    %3339 = vmatprep.subr.mxu0 0.0
    %3340 = vmatpush2.msra.mxu0 0.0
    %3341 = vmatprep.subr.mxu0 0.0
    %3342 = vmatpush2.msra.mxu0 0.0
    %3343 = vmatprep.subr.mxu0 0.0
    %3344 = vmatpush2.msra.mxu0 0.0
    %3345 = vmatprep.subr.mxu0 0.0
    %3346 = vmatpush2.msra.mxu0 0.0
    %3347 = vmatprep.subr.mxu0 0.0
    %3348 = vmatpush2.msra.mxu0 0.0
    %3349 = vmatprep.subr.mxu0 0.0
    %3350 = vmatpush2.msra.mxu0 0.0
    %3351 = vmatprep.subr.mxu0 0.0
    %3352 = vmatpush2.msra.mxu0 0.0
    %3353 = vmatprep.subr.mxu0 0.0
    %3354 = vmatpush2.msra.mxu0 0.0
    %3355 = vmatprep.subr.mxu0 0.0
    %3356 = vmatpush2.msra.mxu0 0.0
    %3357 = vmatprep.subr.mxu0 0.0
    %3358 = vmatpush2.msra.mxu0 0.0
    %3359 = vmatprep.subr.mxu0 0.0
    %3360 = vmatpush2.msra.mxu0 0.0
    %3361 = vmatprep.mubr.f32.mxu0 0.0
    %3362 = vmatmul.mubr.f32.gmra.mxu0 %v3295
    %v3363 = vpop.f32.mrf.mxu0
    %v3364 = vadd.f32 0.0, %v3363
    %v3365 = vpop.f32.mrf.mxu0
    %3366 = vdwg.mxu0
    %3367 = vrot.lane.b32.xlu0 %v2122, 64
    %v3368 = vpop.permute.xlu0 %3367
    %v3371 = vsel %vm265, %v2834, 0
    %3373 = vmatprep.subr.mxu0 0.0
    %3374 = vmatpush1.msra.mxu0 0.0
    %3375 = vmatprep.subr.mxu0 0.0
    %3376 = vmatpush1.msra.mxu0 0.0
    %3377 = vmatprep.subr.mxu0 0.0
    %3378 = vmatpush1.msra.mxu0 0.0
    %3379 = vmatprep.subr.mxu0 0.0
    %3380 = vmatpush1.msra.mxu0 0.0
    %3381 = vmatprep.subr.mxu0 0.0
    %3382 = vmatpush1.msra.mxu0 0.0
    %3383 = vmatprep.subr.mxu0 0.0
    %3384 = vmatpush1.msra.mxu0 0.0
    %3385 = vmatprep.subr.mxu0 0.0
    %3386 = vmatpush1.msra.mxu0 0.0
    %3387 = vmatprep.subr.mxu0 0.0
    %3388 = vmatpush1.msra.mxu0 0.0
    %3389 = vmatprep.subr.mxu0 0.0
    %3390 = vmatpush1.msra.mxu0 0.0
    %3391 = vmatprep.subr.mxu0 0.0
    %3392 = vmatpush1.msra.mxu0 0.0
    %3393 = vmatprep.subr.mxu0 0.0
    %3394 = vmatpush1.msra.mxu0 0.0
    %3395 = vmatprep.subr.mxu0 0.0
    %3396 = vmatpush1.msra.mxu0 0.0
    %3397 = vmatprep.subr.mxu0 0.0
    %3398 = vmatpush1.msra.mxu0 0.0
    %3399 = vmatprep.subr.mxu0 0.0
    %3400 = vmatpush1.msra.mxu0 0.0
    %3401 = vmatprep.subr.mxu0 0.0
    %3402 = vmatpush1.msra.mxu0 0.0
    %3403 = vmatprep.subr.mxu0 0.0
    %3404 = vmatpush1.msra.mxu0 %v3368
    %3405 = vmatprep.subr.mxu0 0.0
    %3406 = vmatpush2.msra.mxu0 0.0
    %3407 = vmatprep.subr.mxu0 0.0
    %3408 = vmatpush2.msra.mxu0 0.0
    %3409 = vmatprep.subr.mxu0 0.0
    %3410 = vmatpush2.msra.mxu0 0.0
    %3411 = vmatprep.subr.mxu0 0.0
    %3412 = vmatpush2.msra.mxu0 0.0
    %3413 = vmatprep.subr.mxu0 0.0
    %3414 = vmatpush2.msra.mxu0 0.0
    %3415 = vmatprep.subr.mxu0 0.0
    %3416 = vmatpush2.msra.mxu0 0.0
    %3417 = vmatprep.subr.mxu0 0.0
    %3418 = vmatpush2.msra.mxu0 0.0
    %3419 = vmatprep.subr.mxu0 0.0
    %3420 = vmatpush2.msra.mxu0 0.0
    %3421 = vmatprep.subr.mxu0 0.0
    %3422 = vmatpush2.msra.mxu0 0.0
    %3423 = vmatprep.subr.mxu0 0.0
    %3424 = vmatpush2.msra.mxu0 0.0
    %3425 = vmatprep.subr.mxu0 0.0
    %3426 = vmatpush2.msra.mxu0 0.0
    %3427 = vmatprep.subr.mxu0 0.0
    %3428 = vmatpush2.msra.mxu0 0.0
    %3429 = vmatprep.subr.mxu0 0.0
    %3430 = vmatpush2.msra.mxu0 0.0
    %3431 = vmatprep.subr.mxu0 0.0
    %3432 = vmatpush2.msra.mxu0 0.0
    %3433 = vmatprep.subr.mxu0 0.0
    %3434 = vmatpush2.msra.mxu0 0.0
    %3435 = vmatprep.subr.mxu0 0.0
    %3436 = vmatpush2.msra.mxu0 0.0
    %3437 = vmatprep.mubr.f32.mxu0 0.0
    %3438 = vmatmul.mubr.f32.gmra.mxu0 %v3371
    %v3439 = vpop.f32.mrf.mxu0
    %v3440 = vadd.f32 0.0, %v3439
    %v3441 = vpop.f32.mrf.mxu0
    %3442 = vdwg.mxu0
    %3444 = vrot.lane.b32.xlu0 %v2984, 8
    %v3445 = vpop.permute.xlu0 %3444
    %3448 = vrot.lane.b32.xlu0 %v3060, 16
    %v3449 = vpop.permute.xlu0 %3448
    %3452 = vrot.lane.b32.xlu0 %v3136, 24
    %v3453 = vpop.permute.xlu0 %3452
    %v3455 = vsel %vm265, %v2908, %v3445
    %v3456 = vsel %vm1605, %v3455, %v3449
    %v3457 = vsel %vm1607, %v3456, %v3453
    %3459 = vrot.lane.b32.xlu0 %v3288, 8
    %v3460 = vpop.permute.xlu0 %3459
    %3463 = vrot.lane.b32.xlu0 %v3364, 16
    %v3464 = vpop.permute.xlu0 %3463
    %3467 = vrot.lane.b32.xlu0 %v3440, 24
    %v3468 = vpop.permute.xlu0 %3467
    %v3470 = vsel %vm265, %v3212, %v3460
    %v3471 = vsel %vm1605, %v3470, %v3464
    %v3472 = vsel %vm1607, %v3471, %v3468
    %s3473 = scalar_lea.vmem %s6, 32
    %v3474 = vld [vmem:[%s3473] sm:$0xff]
    %v3475 = vld [vmem:[%s3473 + $0x8] sm:$0xff]
    %v3476 = vld [vmem:[%s3473 + $0x10] sm:$0xff]
    %v3477 = vld [vmem:[%s3473 + $0x18] sm:$0xff]
    %s3478 = scalar_lea.vmem %s7, 1
    %v3479 = vld [vmem:[%s3478] sm:$0x1]
    %v3481 = vlaneseq
    %v3482 = vshrl.u32 %v3481, 7
    %v3483 = vsub.s32 0, %v3482
    %v3484 = vrot.slane %v3479, %v3483
    %v3487 = vsel %vm107, %v3457, 0
    %v3490 = vsel %vm107, %v3472, 0
    %3492 = vmatprep.subr.mxu0 0.0
    %3493 = vmatpush1.msra.mxu0 0.0
    %3494 = vmatprep.subr.mxu0 0.0
    %3495 = vmatpush1.msra.mxu0 0.0
    %3496 = vmatprep.subr.mxu0 0.0
    %3497 = vmatpush1.msra.mxu0 0.0
    %3498 = vmatprep.subr.mxu0 0.0
    %3499 = vmatpush1.msra.mxu0 0.0
    %3500 = vmatprep.subr.mxu0 0.0
    %3501 = vmatpush1.msra.mxu0 0.0
    %3502 = vmatprep.subr.mxu0 0.0
    %3503 = vmatpush1.msra.mxu0 0.0
    %3504 = vmatprep.subr.mxu0 0.0
    %3505 = vmatpush1.msra.mxu0 0.0
    %3506 = vmatprep.subr.mxu0 0.0
    %3507 = vmatpush1.msra.mxu0 0.0
    %3508 = vmatprep.subr.mxu0 0.0
    %3509 = vmatpush1.msra.mxu0 0.0
    %3510 = vmatprep.subr.mxu0 0.0
    %3511 = vmatpush1.msra.mxu0 0.0
    %3512 = vmatprep.subr.mxu0 0.0
    %3513 = vmatpush1.msra.mxu0 0.0
    %3514 = vmatprep.subr.mxu0 0.0
    %3515 = vmatpush1.msra.mxu0 0.0
    %3516 = vmatprep.subr.mxu0 0.0
    %3517 = vmatpush1.msra.mxu0 %v3477
    %3518 = vmatprep.subr.mxu0 0.0
    %3519 = vmatpush1.msra.mxu0 %v3476
    %3520 = vmatprep.subr.mxu0 0.0
    %3521 = vmatpush1.msra.mxu0 %v3475
    %3522 = vmatprep.subr.mxu0 0.0
    %3523 = vmatpush1.msra.mxu0 %v3474
    %3524 = vmatprep.subr.mxu0 0.0
    %3525 = vmatpush2.msra.mxu0 0.0
    %3526 = vmatprep.subr.mxu0 0.0
    %3527 = vmatpush2.msra.mxu0 0.0
    %3528 = vmatprep.subr.mxu0 0.0
    %3529 = vmatpush2.msra.mxu0 0.0
    %3530 = vmatprep.subr.mxu0 0.0
    %3531 = vmatpush2.msra.mxu0 0.0
    %3532 = vmatprep.subr.mxu0 0.0
    %3533 = vmatpush2.msra.mxu0 0.0
    %3534 = vmatprep.subr.mxu0 0.0
    %3535 = vmatpush2.msra.mxu0 0.0
    %3536 = vmatprep.subr.mxu0 0.0
    %3537 = vmatpush2.msra.mxu0 0.0
    %3538 = vmatprep.subr.mxu0 0.0
    %3539 = vmatpush2.msra.mxu0 0.0
    %3540 = vmatprep.subr.mxu0 0.0
    %3541 = vmatpush2.msra.mxu0 0.0
    %3542 = vmatprep.subr.mxu0 0.0
    %3543 = vmatpush2.msra.mxu0 0.0
    %3544 = vmatprep.subr.mxu0 0.0
    %3545 = vmatpush2.msra.mxu0 0.0
    %3546 = vmatprep.subr.mxu0 0.0
    %3547 = vmatpush2.msra.mxu0 0.0
    %3548 = vmatprep.subr.mxu0 0.0
    %3549 = vmatpush2.msra.mxu0 0.0
    %3550 = vmatprep.subr.mxu0 0.0
    %3551 = vmatpush2.msra.mxu0 0.0
    %3552 = vmatprep.subr.mxu0 0.0
    %3553 = vmatpush2.msra.mxu0 0.0
    %3554 = vmatprep.subr.mxu0 0.0
    %3555 = vmatpush2.msra.mxu0 0.0
    %3556 = vmatprep.mubr.f32.mxu0 0.0
    %3557 = vmatmul.mubr.f32.gmra.mxu0 %v3487
    %v3558 = vpop.f32.mrf.mxu0
    %v3559 = vadd.f32 %v3484, %v3558
    %v3560 = vpop.f32.mrf.mxu0
    %3561 = vmatprep.mubr.f32.mxu0 0.0
    %3562 = vmatmul.mubr.f32.gmra.mxu0 %v3490
    %v3563 = vpop.f32.mrf.mxu0
    %v3564 = vadd.f32 %v3484, %v3563
    %v3565 = vpop.f32.mrf.mxu0
    %3566 = vdwg.mxu0
    %v3567 = vadd.f32 %v3559, %v2013
    %v3568 = vadd.f32 %v3564, %v2014
    %s3569 = scalar_lea.vmem %s8, 1
    %v3570 = vld [vmem:[%s3569] sm:$0x1]
    %s3571 = scalar_lea.vmem %s9, 1
    %v3572 = vld [vmem:[%s3571] sm:$0x1]
    %v3573 = vsel %vm107, %v3567, 0.0
    %3574 = vadd.xlane.f32.xlu0 %v3573
    %v3575 = vpop.xlane.xlu0 %3574
    %v3576 = vsel %vm107, %v3568, 0.0
    %3577 = vadd.xlane.f32.xlu0 %v3576
    %v3578 = vpop.xlane.xlu0 %3577
    %v3579 = vmul.f32 %v3575, %v114
    %v3580 = vmul.f32 %v3578, %v114
    %v3581 = vsub.f32 %v3567, %v3579
    %v3582 = vsub.f32 %v3568, %v3580
    %v3583 = vmul.f32 %v3581, %v3581
    %v3584 = vmul.f32 %v3582, %v3582
    %v3585 = vsel %vm107, %v3583, 0.0
    %3586 = vadd.xlane.f32.xlu0 %v3585
    %v3587 = vpop.xlane.xlu0 %3586
    %v3588 = vsel %vm107, %v3584, 0.0
    %3589 = vadd.xlane.f32.xlu0 %v3588
    %v3590 = vpop.xlane.xlu0 %3589
    %v3591 = vmul.f32 %v3587, %v114
    %v3592 = vmul.f32 %v3590, %v114
    %v3593 = vadd.f32 %v3591, 1e-12
    %v3594 = vadd.f32 %v3592, 1e-12
    %v3595 = vrsqrt.pop %v3593
    %v3596 = vrsqrt.pop %v3594
    %v3597 = vmul.f32 %v3581, %v3595
    %v3598 = vmul.f32 %v3582, %v3596
    %v3600 = vlaneseq
    %v3601 = vshrl.u32 %v3600, 7
    %v3602 = vsub.s32 0, %v3601
    %v3603 = vrot.slane %v3570, %v3602
    %v3605 = vmul.f32 %v3597, %v3603
    %v3606 = vmul.f32 %v3598, %v3603
    %v3608 = vlaneseq
    %v3609 = vshrl.u32 %v3608, 7
    %v3610 = vsub.s32 0, %v3609
    %v3611 = vrot.slane %v3572, %v3610
    %v3613 = vadd.f32 %v3605, %v3611
    %v3614 = vadd.f32 %v3606, %v3611
    %s3615 = scalar_lea.vmem %s10, 32
    %v3616 = vld [vmem:[%s3615] sm:$0xff]
    %v3617 = vld [vmem:[%s3615 + $0x8] sm:$0xff]
    %v3618 = vld [vmem:[%s3615 + $0x10] sm:$0xff]
    %v3619 = vld [vmem:[%s3615 + $0x18] sm:$0xff]
    %s3620 = scalar_lea.vmem %s11, 1
    %v3621 = vld [vmem:[%s3620] sm:$0x1]
    %v3623 = vlaneseq
    %v3624 = vshrl.u32 %v3623, 7
    %v3625 = vsub.s32 0, %v3624
    %v3626 = vrot.slane %v3621, %v3625
    %v3629 = vsel %vm107, %v3613, 0
    %v3632 = vsel %vm107, %v3614, 0
    %3634 = vmatprep.subr.mxu0 0.0
    %3635 = vmatpush1.msra.mxu0 0.0
    %3636 = vmatprep.subr.mxu0 0.0
    %3637 = vmatpush1.msra.mxu0 0.0
    %3638 = vmatprep.subr.mxu0 0.0
    %3639 = vmatpush1.msra.mxu0 0.0
    %3640 = vmatprep.subr.mxu0 0.0
    %3641 = vmatpush1.msra.mxu0 0.0
    %3642 = vmatprep.subr.mxu0 0.0
    %3643 = vmatpush1.msra.mxu0 0.0
    %3644 = vmatprep.subr.mxu0 0.0
    %3645 = vmatpush1.msra.mxu0 0.0
    %3646 = vmatprep.subr.mxu0 0.0
    %3647 = vmatpush1.msra.mxu0 0.0
    %3648 = vmatprep.subr.mxu0 0.0
    %3649 = vmatpush1.msra.mxu0 0.0
    %3650 = vmatprep.subr.mxu0 0.0
    %3651 = vmatpush1.msra.mxu0 0.0
    %3652 = vmatprep.subr.mxu0 0.0
    %3653 = vmatpush1.msra.mxu0 0.0
    %3654 = vmatprep.subr.mxu0 0.0
    %3655 = vmatpush1.msra.mxu0 0.0
    %3656 = vmatprep.subr.mxu0 0.0
    %3657 = vmatpush1.msra.mxu0 0.0
    %3658 = vmatprep.subr.mxu0 0.0
    %3659 = vmatpush1.msra.mxu0 %v3619
    %3660 = vmatprep.subr.mxu0 0.0
    %3661 = vmatpush1.msra.mxu0 %v3618
    %3662 = vmatprep.subr.mxu0 0.0
    %3663 = vmatpush1.msra.mxu0 %v3617
    %3664 = vmatprep.subr.mxu0 0.0
    %3665 = vmatpush1.msra.mxu0 %v3616
    %3666 = vmatprep.subr.mxu0 0.0
    %3667 = vmatpush2.msra.mxu0 0.0
    %3668 = vmatprep.subr.mxu0 0.0
    %3669 = vmatpush2.msra.mxu0 0.0
    %3670 = vmatprep.subr.mxu0 0.0
    %3671 = vmatpush2.msra.mxu0 0.0
    %3672 = vmatprep.subr.mxu0 0.0
    %3673 = vmatpush2.msra.mxu0 0.0
    %3674 = vmatprep.subr.mxu0 0.0
    %3675 = vmatpush2.msra.mxu0 0.0
    %3676 = vmatprep.subr.mxu0 0.0
    %3677 = vmatpush2.msra.mxu0 0.0
    %3678 = vmatprep.subr.mxu0 0.0
    %3679 = vmatpush2.msra.mxu0 0.0
    %3680 = vmatprep.subr.mxu0 0.0
    %3681 = vmatpush2.msra.mxu0 0.0
    %3682 = vmatprep.subr.mxu0 0.0
    %3683 = vmatpush2.msra.mxu0 0.0
    %3684 = vmatprep.subr.mxu0 0.0
    %3685 = vmatpush2.msra.mxu0 0.0
    %3686 = vmatprep.subr.mxu0 0.0
    %3687 = vmatpush2.msra.mxu0 0.0
    %3688 = vmatprep.subr.mxu0 0.0
    %3689 = vmatpush2.msra.mxu0 0.0
    %3690 = vmatprep.subr.mxu0 0.0
    %3691 = vmatpush2.msra.mxu0 0.0
    %3692 = vmatprep.subr.mxu0 0.0
    %3693 = vmatpush2.msra.mxu0 0.0
    %3694 = vmatprep.subr.mxu0 0.0
    %3695 = vmatpush2.msra.mxu0 0.0
    %3696 = vmatprep.subr.mxu0 0.0
    %3697 = vmatpush2.msra.mxu0 0.0
    %3698 = vmatprep.mubr.f32.mxu0 0.0
    %3699 = vmatmul.mubr.f32.gmra.mxu0 %v3629
    %v3700 = vpop.f32.mrf.mxu0
    %v3701 = vadd.f32 %v3626, %v3700
    %v3702 = vpop.f32.mrf.mxu0
    %3703 = vmatprep.mubr.f32.mxu0 0.0
    %3704 = vmatmul.mubr.f32.gmra.mxu0 %v3632
    %v3705 = vpop.f32.mrf.mxu0
    %v3706 = vadd.f32 %v3626, %v3705
    %v3707 = vpop.f32.mrf.mxu0
    %3708 = vdwg.mxu0
    %v3709 = vmul.f32 %v3701, %v3701
    %v3710 = vmul.f32 %v3706, %v3706
    %v3711 = vmul.f32 %v3701, %v3709
    %v3712 = vmul.f32 %v3706, %v3710
    %v3713 = vmul.f32 %v3711, 0.044715
    %v3714 = vmul.f32 %v3712, 0.044715
    %v3715 = vadd.f32 %v3701, %v3713
    %v3716 = vadd.f32 %v3706, %v3714
    %v3717 = vmul.f32 %v3715, 0.7978846
    %v3718 = vmul.f32 %v3716, 0.7978846
    %v3719 = vtanh.pop %v3717
    %v3720 = vtanh.pop %v3718
    %v3721 = vadd.f32 %v3719, 1.0
    %v3722 = vadd.f32 %v3720, 1.0
    %v3723 = vmul.f32 %v3721, 0.5
    %v3724 = vmul.f32 %v3722, 0.5
    %v3725 = vmul.f32 %v3701, %v3723
    %v3726 = vmul.f32 %v3706, %v3724
    %s3727 = scalar_lea.vmem %s12, 64
    %v3728 = vld [vmem:[%s3727] sm:$0xff]
    %v3729 = vld [vmem:[%s3727 + $0x8] sm:$0xff]
    %v3730 = vld [vmem:[%s3727 + $0x10] sm:$0xff]
    %v3731 = vld [vmem:[%s3727 + $0x18] sm:$0xff]
    %v3732 = vld [vmem:[%s3727 + $0x20] sm:$0xff]
    %v3733 = vld [vmem:[%s3727 + $0x28] sm:$0xff]
    %v3734 = vld [vmem:[%s3727 + $0x30] sm:$0xff]
    %v3735 = vld [vmem:[%s3727 + $0x38] sm:$0xff]
    %s3736 = scalar_lea.vmem %s13, 1
    %v3737 = vld [vmem:[%s3736] sm:$0x1]
    %v3739 = vlaneseq
    %v3740 = vshrl.u32 %v3739, 7
    %v3741 = vsub.s32 0, %v3740
    %v3742 = vrot.slane %v3737, %v3741
    %v3745 = vsel %vm1887, %v3725, 0
    %v3748 = vsel %vm1887, %v3726, 0
    %3750 = vmatprep.subr.mxu0 0.0
    %3751 = vmatpush1.msra.mxu0 0.0
    %3752 = vmatprep.subr.mxu0 0.0
    %3753 = vmatpush1.msra.mxu0 0.0
    %3754 = vmatprep.subr.mxu0 0.0
    %3755 = vmatpush1.msra.mxu0 0.0
    %3756 = vmatprep.subr.mxu0 0.0
    %3757 = vmatpush1.msra.mxu0 0.0
    %3758 = vmatprep.subr.mxu0 0.0
    %3759 = vmatpush1.msra.mxu0 0.0
    %3760 = vmatprep.subr.mxu0 0.0
    %3761 = vmatpush1.msra.mxu0 0.0
    %3762 = vmatprep.subr.mxu0 0.0
    %3763 = vmatpush1.msra.mxu0 0.0
    %3764 = vmatprep.subr.mxu0 0.0
    %3765 = vmatpush1.msra.mxu0 0.0
    %3766 = vmatprep.subr.mxu0 0.0
    %3767 = vmatpush1.msra.mxu0 %v3735
    %3768 = vmatprep.subr.mxu0 0.0
    %3769 = vmatpush1.msra.mxu0 %v3734
    %3770 = vmatprep.subr.mxu0 0.0
    %3771 = vmatpush1.msra.mxu0 %v3733
    %3772 = vmatprep.subr.mxu0 0.0
    %3773 = vmatpush1.msra.mxu0 %v3732
    %3774 = vmatprep.subr.mxu0 0.0
    %3775 = vmatpush1.msra.mxu0 %v3731
    %3776 = vmatprep.subr.mxu0 0.0
    %3777 = vmatpush1.msra.mxu0 %v3730
    %3778 = vmatprep.subr.mxu0 0.0
    %3779 = vmatpush1.msra.mxu0 %v3729
    %3780 = vmatprep.subr.mxu0 0.0
    %3781 = vmatpush1.msra.mxu0 %v3728
    %3782 = vmatprep.subr.mxu0 0.0
    %3783 = vmatpush2.msra.mxu0 0.0
    %3784 = vmatprep.subr.mxu0 0.0
    %3785 = vmatpush2.msra.mxu0 0.0
    %3786 = vmatprep.subr.mxu0 0.0
    %3787 = vmatpush2.msra.mxu0 0.0
    %3788 = vmatprep.subr.mxu0 0.0
    %3789 = vmatpush2.msra.mxu0 0.0
    %3790 = vmatprep.subr.mxu0 0.0
    %3791 = vmatpush2.msra.mxu0 0.0
    %3792 = vmatprep.subr.mxu0 0.0
    %3793 = vmatpush2.msra.mxu0 0.0
    %3794 = vmatprep.subr.mxu0 0.0
    %3795 = vmatpush2.msra.mxu0 0.0
    %3796 = vmatprep.subr.mxu0 0.0
    %3797 = vmatpush2.msra.mxu0 0.0
    %3798 = vmatprep.subr.mxu0 0.0
    %3799 = vmatpush2.msra.mxu0 0.0
    %3800 = vmatprep.subr.mxu0 0.0
    %3801 = vmatpush2.msra.mxu0 0.0
    %3802 = vmatprep.subr.mxu0 0.0
    %3803 = vmatpush2.msra.mxu0 0.0
    %3804 = vmatprep.subr.mxu0 0.0
    %3805 = vmatpush2.msra.mxu0 0.0
    %3806 = vmatprep.subr.mxu0 0.0
    %3807 = vmatpush2.msra.mxu0 0.0
    %3808 = vmatprep.subr.mxu0 0.0
    %3809 = vmatpush2.msra.mxu0 0.0
    %3810 = vmatprep.subr.mxu0 0.0
    %3811 = vmatpush2.msra.mxu0 0.0
    %3812 = vmatprep.subr.mxu0 0.0
    %3813 = vmatpush2.msra.mxu0 0.0
    %3814 = vmatprep.mubr.f32.mxu0 0.0
    %3815 = vmatmul.mubr.f32.gmra.mxu0 %v3745
    %v3816 = vpop.f32.mrf.mxu0
    %v3817 = vadd.f32 %v3742, %v3816
    %v3818 = vpop.f32.mrf.mxu0
    %3819 = vmatprep.mubr.f32.mxu0 0.0
    %3820 = vmatmul.mubr.f32.gmra.mxu0 %v3748
    %v3821 = vpop.f32.mrf.mxu0
    %v3822 = vadd.f32 %v3742, %v3821
    %v3823 = vpop.f32.mrf.mxu0
    %3824 = vdwg.mxu0
    %v3825 = vadd.f32 %v3817, %v3613
    %v3826 = vadd.f32 %v3822, %v3614
    %s3827 = scalar_lea.vmem %s14, 1
    %v3828 = vld [vmem:[%s3827] sm:$0x1]
    %s3829 = scalar_lea.vmem %s15, 1
    %v3830 = vld [vmem:[%s3829] sm:$0x1]
    %v3831 = vsel %vm107, %v3825, 0.0
    %3832 = vadd.xlane.f32.xlu0 %v3831
    %v3833 = vpop.xlane.xlu0 %3832
    %v3834 = vsel %vm107, %v3826, 0.0
    %3835 = vadd.xlane.f32.xlu0 %v3834
    %v3836 = vpop.xlane.xlu0 %3835
    %v3837 = vmul.f32 %v3833, %v114
    %v3838 = vmul.f32 %v3836, %v114
    %v3839 = vsub.f32 %v3825, %v3837
    %v3840 = vsub.f32 %v3826, %v3838
    %v3841 = vmul.f32 %v3839, %v3839
    %v3842 = vmul.f32 %v3840, %v3840
    %v3843 = vsel %vm107, %v3841, 0.0
    %3844 = vadd.xlane.f32.xlu0 %v3843
    %v3845 = vpop.xlane.xlu0 %3844
    %v3846 = vsel %vm107, %v3842, 0.0
    %3847 = vadd.xlane.f32.xlu0 %v3846
    %v3848 = vpop.xlane.xlu0 %3847
    %v3849 = vmul.f32 %v3845, %v114
    %v3850 = vmul.f32 %v3848, %v114
    %v3851 = vadd.f32 %v3849, 1e-12
    %v3852 = vadd.f32 %v3850, 1e-12
    %v3853 = vrsqrt.pop %v3851
    %v3854 = vrsqrt.pop %v3852
    %v3855 = vmul.f32 %v3839, %v3853
    %v3856 = vmul.f32 %v3840, %v3854
    %v3858 = vlaneseq
    %v3859 = vshrl.u32 %v3858, 7
    %v3860 = vsub.s32 0, %v3859
    %v3861 = vrot.slane %v3828, %v3860
    %v3863 = vmul.f32 %v3855, %v3861
    %v3864 = vmul.f32 %v3856, %v3861
    %v3866 = vlaneseq
    %v3867 = vshrl.u32 %v3866, 7
    %v3868 = vsub.s32 0, %v3867
    %v3869 = vrot.slane %v3830, %v3868
    %v3871 = vadd.f32 %v3863, %v3869
    %v3872 = vadd.f32 %v3864, %v3869
    %3873 = vst.msk [vmem:[#allocation10] sm:$0xff] %vm107, %v3871
    %3874 = vst.msk [vmem:[#allocation10 + $0x8] sm:$0xff] %vm107, %v3872
    // Predicated region
    $region82: #{tpu_custom_call.1} parent=1 // pred_check
      _
    $region83: #{tpu_custom_call.1} parent=1 // pred_check_branch
      %3876 = sbr.rel (0) target = $region85
    $region84: #{tpu_custom_call.1} parent=1 // pred_region
      %s3878 = ssub.s32 256, 256
      %3879 = vsyncadd [#allocation4], %s3878
      %s3880 = sshll.u32 [#allocation10], 4
      %s3881 = int_to_ptr.vmem [resolvable:$true] %s3880
      %3886 = dma.vmem_to_hbm [thread:$0]  %s3881, 256, %s16, [#allocation4], 128, 128, 8
    $region85: #{tpu_custom_call.1} parent=1 // pred_fallthru
      _
    // Predicated region
    $region86: #{tpu_custom_call.1} parent=1 // pred_check
      _
    $region87: #{tpu_custom_call.1} parent=1 // pred_check_branch
      %3888 = sbr.rel (0) target = $region89
    $region88: #{tpu_custom_call.1} parent=1 // pred_region
      %3889 = dma.done [#allocation4], 256
    $region89: #{tpu_custom_call.1} parent=1 // pred_fallthru
      _
    %3890 = vsyncpa [#allocation3], 1
    %3891 = vsyncpa [#allocation6], 1
    %3892 = vsyncpa [#allocation9], 1
    %3893 = vsyncpa [#allocation4], 1

</llo_original>
